<compile_context>
chip_gen: v7x
topology: tpu7x:2x2x1
jax: 0.10.0
libtpu: 0.0.40
codegen_flags: <defaults>
</compile_context>

<pallas_src>
import functools

import numpy as np
import jax
import jax.numpy as jnp
from jax.experimental import pallas as pl
from jax.experimental.pallas import tpu as pltpu


# ----------------------------- shared helpers --------------------------------
def _gelu_tanh(x):
    # TODO(synk): PyTorch nn.GELU default is the exact erf GELU; we use the tanh
    # approximation (max abs deviation ~1e-3) because erf lowering in Mosaic is
    # not guaranteed.  The in-script reference uses the same approximation.
    c = jnp.float32(0.7978845608028654)  # sqrt(2/pi)
    return 0.5 * x * (1.0 + jnp.tanh(c * (x + 0.044715 * x * x * x)))


def _layernorm(v, g, b, eps=1e-5):
    mu = jnp.mean(v, axis=-1, keepdims=True)
    var = jnp.mean(jnp.square(v - mu), axis=-1, keepdims=True)
    return (v - mu) * jax.lax.rsqrt(var + eps) * g + b


def _make_pool_matrix(H, W, sr):
    """(Np, N) matrix so that P @ tokens == avg_pool2d(kernel=stride=sr)."""
    Hs, Ws = H // sr, W // sr
    P = np.zeros((Hs * Ws, H * W), np.float32)
    inv = 1.0 / (sr * sr)
    for i in range(Hs):
        for j in range(Ws):
            for di in range(sr):
                for dj in range(sr):
                    P[i * Ws + j, (i * sr + di) * W + (j * sr + dj)] = inv
    return jnp.asarray(P)


# ---------------------- fused PVTBlock kernel (one batch) --------------------
def _pvt_block_kernel(x_ref, pool_ref,
                      g1_ref, b1_ref,                 # norm1
                      wq_ref, bq_ref,                 # attn.q
                      wsr_ref, bsrc_ref,              # attn.sr (1x1 conv)
                      gsr_ref, bsrn_ref,              # attn.norm
                      wkv_ref, bkv_ref,               # attn.kv
                      wpr_ref, bpr_ref,               # attn.proj
                      g2_ref, b2_ref,                 # norm2
                      w1_ref, bb1_ref,                # mlp.fc1
                      w2_ref, bb2_ref,                # mlp.fc2
                      o_ref,
                      *, num_heads, scale):
    x = x_ref[0].astype(jnp.float32)                                  # (N, C)
    C = x.shape[-1]
    hd = C // num_heads

    # ---------------- norm1 ----------------
    xn1 = _layernorm(x, g1_ref[...], b1_ref[...])

    # ---------------- Attention ----------------
    q = jnp.dot(xn1, wq_ref[...], preferred_element_type=jnp.float32) + bq_ref[...]

    # spatial reduction: avg-pool as a matmul, then 1x1 conv + LayerNorm + kv
    xp = jnp.dot(pool_ref[...], xn1, preferred_element_type=jnp.float32)   # (Np, C)
    xs = jnp.dot(xp, wsr_ref[...], preferred_element_type=jnp.float32) + bsrc_ref[...]
    xs = _layernorm(xs, gsr_ref[...], bsrn_ref[...])
    kv = jnp.dot(xs, wkv_ref[...], preferred_element_type=jnp.float32) + bkv_ref[...]  # (Np, 2C)

    # per-head attention; heads are static lane slices of the (., C) slabs and
    # the result is concatenated back lane-dense before the proj matmul.
    outs = []
    for h in range(num_heads):
        lo = h * hd
        qh = q[:, lo:lo + hd]                                         # (N,  hd)
        kh = kv[:, lo:lo + hd]                                        # (Np, hd)
        vh = kv[:, C + lo:C + lo + hd]                                # (Np, hd)
        s = jax.lax.dot_general(qh, kh, (((1,), (1,)), ((), ())),
                                preferred_element_type=jnp.float32) * scale  # (N, Np)
        m = jnp.max(s, axis=-1, keepdims=True)
        p = jnp.exp(s - m)
        l = jnp.sum(p, axis=-1, keepdims=True)
        oh = jnp.dot(p, vh, preferred_element_type=jnp.float32)       # (N, hd)
        outs.append(oh * pl.reciprocal(l, approx=True))               # EUP recip
    o_attn = jnp.concatenate(outs, axis=-1)                           # (N, C)

    attn_out = jnp.dot(o_attn, wpr_ref[...],
                       preferred_element_type=jnp.float32) + bpr_ref[...]
    x1 = x + attn_out                                                 # residual 1

    # ---------------- MLP ----------------
    xn2 = _layernorm(x1, g2_ref[...], b2_ref[...])
    hid = jnp.dot(xn2, w1_ref[...], preferred_element_type=jnp.float32) + bb1_ref[...]
    hid = _gelu_tanh(hid)
    mlp_out = jnp.dot(hid, w2_ref[...], preferred_element_type=jnp.float32) + bb2_ref[...]

    o_ref[0] = (x1 + mlp_out).astype(o_ref.dtype)                     # residual 2


# ------------------------------- module forward -------------------------------
def pvt_block_forward(x, H, W, p, *, num_heads, sr_ratio):
    B, N, C = x.shape
    hd = C // num_heads
    scale = hd ** -0.5

    pool = _make_pool_matrix(H, W, sr_ratio)                          # (Np, N)
    row = lambda v: v.reshape(1, -1)

    weights = [
        pool,
        row(p["g1"]), row(p["b1"]),
        p["wq"], row(p["bq"]),
        p["wsr"], row(p["bsr"]),
        row(p["g_sr"]), row(p["b_sr"]),
        p["wkv"], row(p["bkv"]),
        p["wproj"], row(p["bproj"]),
        row(p["g2"]), row(p["b2"]),
        p["wfc1"], row(p["bfc1"]),
        p["wfc2"], row(p["bfc2"]),
    ]
    # every weight: full block, constant index_map -> resident in VMEM across grid
    w_specs = [pl.BlockSpec(w.shape, lambda b: (0, 0)) for w in weights]

    kernel = functools.partial(_pvt_block_kernel, num_heads=num_heads, scale=scale)
    return pl.pallas_call(
        kernel,
        out_shape=jax.ShapeDtypeStruct((B, N, C), x.dtype),
        grid_spec=pltpu.PrefetchScalarGridSpec(
            num_scalar_prefetch=0,
            grid=(B,),
            in_specs=[pl.BlockSpec((1, N, C), lambda b: (b, 0, 0))] + w_specs,
            out_specs=pl.BlockSpec((1, N, C), lambda b: (b, 0, 0)),
        ),
        compiler_params=pltpu.CompilerParams(
            dimension_semantics=("parallel",),
        ),
    )(x, *weights)


# ------------------------------ pure-JAX reference ----------------------------
def pvt_block_reference(x, H, W, p, *, num_heads, sr_ratio):
    B, N, C = x.shape
    hd = C // num_heads
    scale = hd ** -0.5

    def ln(v, g, b):
        mu = v.mean(-1, keepdims=True)
        var = ((v - mu) ** 2).mean(-1, keepdims=True)
        return (v - mu) / jnp.sqrt(var + 1e-5) * g + b

    # --- attention branch on norm1(x) ---
    xn1 = ln(x, p["g1"], p["b1"])
    q = (xn1 @ p["wq"] + p["bq"]).reshape(B, N, num_heads, hd).transpose(0, 2, 1, 3)
    Hs, Ws = H // sr_ratio, W // sr_ratio
    xs = xn1.reshape(B, H, W, C)[:, :Hs * sr_ratio, :Ws * sr_ratio, :]
    xs = xs.reshape(B, Hs, sr_ratio, Ws, sr_ratio, C).mean(axis=(2, 4))
    xs = xs.reshape(B, Hs * Ws, C) @ p["wsr"] + p["bsr"]
    xs = ln(xs, p["g_sr"], p["b_sr"])
    kv = (xs @ p["wkv"] + p["bkv"]).reshape(B, Hs * Ws, 2, num_heads, hd)
    kv = kv.transpose(2, 0, 3, 1, 4)
    k, v = kv[0], kv[1]
    attn = jnp.einsum("bhnd,bhmd->bhnm", q, k) * scale
    attn = jax.nn.softmax(attn, axis=-1)
    o = jnp.einsum("bhnm,bhmd->bhnd", attn, v).transpose(0, 2, 1, 3).reshape(B, N, C)
    x1 = x + (o @ p["wproj"] + p["bproj"])

    # --- MLP branch on norm2(x1) ---
    xn2 = ln(x1, p["g2"], p["b2"])
    hid = _gelu_tanh(xn2 @ p["wfc1"] + p["bfc1"])
    return x1 + (hid @ p["wfc2"] + p["bfc2"])


if __name__ == "__main__":
    B, C, num_heads, H, W, sr_ratio = 2, 32, 4, 8, 8, 2
    N = H * W
    Ch = 4 * C  # mlp_ratio = 4.0

    key = jax.random.PRNGKey(0)
    ks = jax.random.split(key, 19)
    p = {
        "g1": 1.0 + 0.1 * jax.random.normal(ks[0], (C,), jnp.float32),
        "b1": 0.1 * jax.random.normal(ks[1], (C,), jnp.float32),
        "wq": 0.1 * jax.random.normal(ks[2], (C, C), jnp.float32),
        "bq": 0.1 * jax.random.normal(ks[3], (C,), jnp.float32),      # qkv_bias=True
        "wsr": 0.1 * jax.random.normal(ks[4], (C, C), jnp.float32),   # 1x1 conv
        "bsr": 0.1 * jax.random.normal(ks[5], (C,), jnp.float32),
        "g_sr": 1.0 + 0.1 * jax.random.normal(ks[6], (C,), jnp.float32),
        "b_sr": 0.1 * jax.random.normal(ks[7], (C,), jnp.float32),
        "wkv": 0.1 * jax.random.normal(ks[8], (C, 2 * C), jnp.float32),
        "bkv": 0.1 * jax.random.normal(ks[9], (2 * C,), jnp.float32), # qkv_bias=True
        "wproj": 0.1 * jax.random.normal(ks[10], (C, C), jnp.float32),
        "bproj": 0.1 * jax.random.normal(ks[11], (C,), jnp.float32),
        "g2": 1.0 + 0.1 * jax.random.normal(ks[12], (C,), jnp.float32),
        "b2": 0.1 * jax.random.normal(ks[13], (C,), jnp.float32),
        "wfc1": 0.1 * jax.random.normal(ks[14], (C, Ch), jnp.float32),
        "bfc1": 0.1 * jax.random.normal(ks[15], (Ch,), jnp.float32),
        "wfc2": 0.1 * jax.random.normal(ks[16], (Ch, C), jnp.float32),
        "bfc2": 0.1 * jax.random.normal(ks[17], (C,), jnp.float32),
    }
    x = jax.random.normal(ks[18], (B, N, C), jnp.float32)

    out = pvt_block_forward(x, H, W, p, num_heads=num_heads, sr_ratio=sr_ratio)
    out = jax.block_until_ready(out)

    ref = pvt_block_reference(x, H, W, p, num_heads=num_heads, sr_ratio=sr_ratio)
    assert out.shape == (B, N, C)
    err = float(jnp.max(jnp.abs(out - ref)))
    assert jnp.allclose(out, ref, atol=2e-3, rtol=2e-3), f"mismatch vs reference: {err}"

    print("KERNEL_OK")
</pallas_src>

<mosaic_0001>
module attributes {stable_mosaic.version = 11 : i64} {
  func.func @_pvt_block_kernel(%arg0: i32, %arg1: memref<1x64x32xf32, #tpu.memory_space<vmem>>, %arg2: memref<16x64xf32, #tpu.memory_space<vmem>>, %arg3: memref<1x32xf32, #tpu.memory_space<vmem>>, %arg4: memref<1x32xf32, #tpu.memory_space<vmem>>, %arg5: memref<32x32xf32, #tpu.memory_space<vmem>>, %arg6: memref<1x32xf32, #tpu.memory_space<vmem>>, %arg7: memref<32x32xf32, #tpu.memory_space<vmem>>, %arg8: memref<1x32xf32, #tpu.memory_space<vmem>>, %arg9: memref<1x32xf32, #tpu.memory_space<vmem>>, %arg10: memref<1x32xf32, #tpu.memory_space<vmem>>, %arg11: memref<32x64xf32, #tpu.memory_space<vmem>>, %arg12: memref<1x64xf32, #tpu.memory_space<vmem>>, %arg13: memref<32x32xf32, #tpu.memory_space<vmem>>, %arg14: memref<1x32xf32, #tpu.memory_space<vmem>>, %arg15: memref<1x32xf32, #tpu.memory_space<vmem>>, %arg16: memref<1x32xf32, #tpu.memory_space<vmem>>, %arg17: memref<32x128xf32, #tpu.memory_space<vmem>>, %arg18: memref<1x128xf32, #tpu.memory_space<vmem>>, %arg19: memref<128x32xf32, #tpu.memory_space<vmem>>, %arg20: memref<1x32xf32, #tpu.memory_space<vmem>>, %arg21: memref<1x64x32xf32, #tpu.memory_space<vmem>>) attributes {dimension_semantics = [#tpu.dimension_semantics<parallel>], iteration_bounds = array<i64: 2>, scalar_prefetch = 0 : i64, scratch_operands = 0 : i64, tpu.core_type = #tpu.core_type<tc>, window_params = [{transform_indices = @transform_0, window_bounds = array<i64: 1, 64, 32>}, {pipeline_mode = #tpu.pipeline_mode<synchronous>, transform_indices = @transform_1, window_bounds = array<i64: 16, 64>}, {pipeline_mode = #tpu.pipeline_mode<synchronous>, transform_indices = @transform_2, window_bounds = array<i64: 1, 32>}, {pipeline_mode = #tpu.pipeline_mode<synchronous>, transform_indices = @transform_3, window_bounds = array<i64: 1, 32>}, {pipeline_mode = #tpu.pipeline_mode<synchronous>, transform_indices = @transform_4, window_bounds = array<i64: 32, 32>}, {pipeline_mode = #tpu.pipeline_mode<synchronous>, transform_indices = @transform_5, window_bounds = array<i64: 1, 32>}, {pipeline_mode = #tpu.pipeline_mode<synchronous>, transform_indices = @transform_6, window_bounds = array<i64: 32, 32>}, {pipeline_mode = #tpu.pipeline_mode<synchronous>, transform_indices = @transform_7, window_bounds = array<i64: 1, 32>}, {pipeline_mode = #tpu.pipeline_mode<synchronous>, transform_indices = @transform_8, window_bounds = array<i64: 1, 32>}, {pipeline_mode = #tpu.pipeline_mode<synchronous>, transform_indices = @transform_9, window_bounds = array<i64: 1, 32>}, {pipeline_mode = #tpu.pipeline_mode<synchronous>, transform_indices = @transform_10, window_bounds = array<i64: 32, 64>}, {pipeline_mode = #tpu.pipeline_mode<synchronous>, transform_indices = @transform_11, window_bounds = array<i64: 1, 64>}, {pipeline_mode = #tpu.pipeline_mode<synchronous>, transform_indices = @transform_12, window_bounds = array<i64: 32, 32>}, {pipeline_mode = #tpu.pipeline_mode<synchronous>, transform_indices = @transform_13, window_bounds = array<i64: 1, 32>}, {pipeline_mode = #tpu.pipeline_mode<synchronous>, transform_indices = @transform_14, window_bounds = array<i64: 1, 32>}, {pipeline_mode = #tpu.pipeline_mode<synchronous>, transform_indices = @transform_15, window_bounds = array<i64: 1, 32>}, {pipeline_mode = #tpu.pipeline_mode<synchronous>, transform_indices = @transform_16, window_bounds = array<i64: 32, 128>}, {pipeline_mode = #tpu.pipeline_mode<synchronous>, transform_indices = @transform_17, window_bounds = array<i64: 1, 128>}, {pipeline_mode = #tpu.pipeline_mode<synchronous>, transform_indices = @transform_18, window_bounds = array<i64: 128, 32>}, {pipeline_mode = #tpu.pipeline_mode<synchronous>, transform_indices = @transform_19, window_bounds = array<i64: 1, 32>}, {transform_indices = @transform_20, window_bounds = array<i64: 1, 64, 32>}]} {
    %c0 = arith.constant 0 : index
    %c0_0 = arith.constant 0 : index
    %c0_1 = arith.constant 0 : index
    %0 = vector.load %arg1[%c0, %c0_0, %c0_1] : memref<1x64x32xf32, #tpu.memory_space<vmem>>, vector<1x64x32xf32>
    %1 = vector.shape_cast %0 : vector<1x64x32xf32> to vector<64x32xf32>
    %c0_2 = arith.constant 0 : index
    %c0_3 = arith.constant 0 : index
    %2 = vector.load %arg3[%c0_2, %c0_3] : memref<1x32xf32, #tpu.memory_space<vmem>>, vector<1x32xf32>
    %c0_4 = arith.constant 0 : index
    %c0_5 = arith.constant 0 : index
    %3 = vector.load %arg4[%c0_4, %c0_5] : memref<1x32xf32, #tpu.memory_space<vmem>>, vector<1x32xf32>
    %cst = arith.constant dense<0.000000e+00> : vector<64xf32>
    %4 = vector.multi_reduction <add>, %1, %cst [1] : vector<64x32xf32> to vector<64xf32>
    %5 = vector.shape_cast %4 : vector<64xf32> to vector<64x1xf32>
    %cst_6 = arith.constant 3.200000e+01 : f32
    %6 = vector.broadcast %cst_6 : f32 to vector<64x1xf32>
    %7 = arith.divf %5, %6 : vector<64x1xf32>
    %8 = vector.broadcast %7 : vector<64x1xf32> to vector<64x32xf32>
    %9 = arith.subf %1, %8 : vector<64x32xf32>
    %10 = arith.mulf %9, %9 : vector<64x32xf32>
    %cst_7 = arith.constant dense<0.000000e+00> : vector<64xf32>
    %11 = vector.multi_reduction <add>, %10, %cst_7 [1] : vector<64x32xf32> to vector<64xf32>
    %12 = vector.shape_cast %11 : vector<64xf32> to vector<64x1xf32>
    %cst_8 = arith.constant 3.200000e+01 : f32
    %13 = vector.broadcast %cst_8 : f32 to vector<64x1xf32>
    %14 = arith.divf %12, %13 : vector<64x1xf32>
    %15 = vector.broadcast %7 : vector<64x1xf32> to vector<64x32xf32>
    %16 = arith.subf %1, %15 : vector<64x32xf32>
    %cst_9 = arith.constant 9.99999974E-6 : f32
    %17 = vector.broadcast %cst_9 : f32 to vector<64x1xf32>
    %18 = arith.addf %14, %17 : vector<64x1xf32>
    %19 = math.rsqrt %18 : vector<64x1xf32>
    %20 = vector.broadcast %19 : vector<64x1xf32> to vector<64x32xf32>
    %21 = arith.mulf %16, %20 : vector<64x32xf32>
    %22 = vector.broadcast %2 : vector<1x32xf32> to vector<64x32xf32>
    %23 = arith.mulf %21, %22 : vector<64x32xf32>
    %24 = vector.broadcast %3 : vector<1x32xf32> to vector<64x32xf32>
    %25 = arith.addf %23, %24 : vector<64x32xf32>
    %c0_10 = arith.constant 0 : index
    %c0_11 = arith.constant 0 : index
    %26 = vector.load %arg5[%c0_10, %c0_11] : memref<32x32xf32, #tpu.memory_space<vmem>>, vector<32x32xf32>
    %cst_12 = arith.constant dense<0.000000e+00> : vector<64x32xf32>
    %27 = tpu.matmul %25, %26, %cst_12 {dimension_numbers = #tpu.dot_dimension_numbers<[1], [0], [0], [1], [0, 0, 1, 1], [], []>} : vector<64x32xf32>, vector<32x32xf32>, vector<64x32xf32> -> vector<64x32xf32>
    %c0_13 = arith.constant 0 : index
    %c0_14 = arith.constant 0 : index
    %28 = vector.load %arg6[%c0_13, %c0_14] : memref<1x32xf32, #tpu.memory_space<vmem>>, vector<1x32xf32>
    %29 = vector.broadcast %28 : vector<1x32xf32> to vector<64x32xf32>
    %30 = arith.addf %27, %29 : vector<64x32xf32>
    %c0_15 = arith.constant 0 : index
    %c0_16 = arith.constant 0 : index
    %31 = vector.load %arg2[%c0_15, %c0_16] : memref<16x64xf32, #tpu.memory_space<vmem>>, vector<16x64xf32>
    %cst_17 = arith.constant dense<0.000000e+00> : vector<16x32xf32>
    %32 = tpu.matmul %31, %25, %cst_17 {dimension_numbers = #tpu.dot_dimension_numbers<[1], [0], [0], [1], [0, 0, 1, 1], [], []>} : vector<16x64xf32>, vector<64x32xf32>, vector<16x32xf32> -> vector<16x32xf32>
    %c0_18 = arith.constant 0 : index
    %c0_19 = arith.constant 0 : index
    %33 = vector.load %arg7[%c0_18, %c0_19] : memref<32x32xf32, #tpu.memory_space<vmem>>, vector<32x32xf32>
    %cst_20 = arith.constant dense<0.000000e+00> : vector<16x32xf32>
    %34 = tpu.matmul %32, %33, %cst_20 {dimension_numbers = #tpu.dot_dimension_numbers<[1], [0], [0], [1], [0, 0, 1, 1], [], []>} : vector<16x32xf32>, vector<32x32xf32>, vector<16x32xf32> -> vector<16x32xf32>
    %c0_21 = arith.constant 0 : index
    %c0_22 = arith.constant 0 : index
    %35 = vector.load %arg8[%c0_21, %c0_22] : memref<1x32xf32, #tpu.memory_space<vmem>>, vector<1x32xf32>
    %36 = vector.broadcast %35 : vector<1x32xf32> to vector<16x32xf32>
    %37 = arith.addf %34, %36 : vector<16x32xf32>
    %c0_23 = arith.constant 0 : index
    %c0_24 = arith.constant 0 : index
    %38 = vector.load %arg9[%c0_23, %c0_24] : memref<1x32xf32, #tpu.memory_space<vmem>>, vector<1x32xf32>
    %c0_25 = arith.constant 0 : index
    %c0_26 = arith.constant 0 : index
    %39 = vector.load %arg10[%c0_25, %c0_26] : memref<1x32xf32, #tpu.memory_space<vmem>>, vector<1x32xf32>
    %cst_27 = arith.constant dense<0.000000e+00> : vector<16xf32>
    %40 = vector.multi_reduction <add>, %37, %cst_27 [1] : vector<16x32xf32> to vector<16xf32>
    %41 = vector.shape_cast %40 : vector<16xf32> to vector<16x1xf32>
    %cst_28 = arith.constant 3.200000e+01 : f32
    %42 = vector.broadcast %cst_28 : f32 to vector<16x1xf32>
    %43 = arith.divf %41, %42 : vector<16x1xf32>
    %44 = vector.broadcast %43 : vector<16x1xf32> to vector<16x32xf32>
    %45 = arith.subf %37, %44 : vector<16x32xf32>
    %46 = arith.mulf %45, %45 : vector<16x32xf32>
    %cst_29 = arith.constant dense<0.000000e+00> : vector<16xf32>
    %47 = vector.multi_reduction <add>, %46, %cst_29 [1] : vector<16x32xf32> to vector<16xf32>
    %48 = vector.shape_cast %47 : vector<16xf32> to vector<16x1xf32>
    %cst_30 = arith.constant 3.200000e+01 : f32
    %49 = vector.broadcast %cst_30 : f32 to vector<16x1xf32>
    %50 = arith.divf %48, %49 : vector<16x1xf32>
    %51 = vector.broadcast %43 : vector<16x1xf32> to vector<16x32xf32>
    %52 = arith.subf %37, %51 : vector<16x32xf32>
    %cst_31 = arith.constant 9.99999974E-6 : f32
    %53 = vector.broadcast %cst_31 : f32 to vector<16x1xf32>
    %54 = arith.addf %50, %53 : vector<16x1xf32>
    %55 = math.rsqrt %54 : vector<16x1xf32>
    %56 = vector.broadcast %55 : vector<16x1xf32> to vector<16x32xf32>
    %57 = arith.mulf %52, %56 : vector<16x32xf32>
    %58 = vector.broadcast %38 : vector<1x32xf32> to vector<16x32xf32>
    %59 = arith.mulf %57, %58 : vector<16x32xf32>
    %60 = vector.broadcast %39 : vector<1x32xf32> to vector<16x32xf32>
    %61 = arith.addf %59, %60 : vector<16x32xf32>
    %c0_32 = arith.constant 0 : index
    %c0_33 = arith.constant 0 : index
    %62 = vector.load %arg11[%c0_32, %c0_33] : memref<32x64xf32, #tpu.memory_space<vmem>>, vector<32x64xf32>
    %cst_34 = arith.constant dense<0.000000e+00> : vector<16x64xf32>
    %63 = tpu.matmul %61, %62, %cst_34 {dimension_numbers = #tpu.dot_dimension_numbers<[1], [0], [0], [1], [0, 0, 1, 1], [], []>} : vector<16x32xf32>, vector<32x64xf32>, vector<16x64xf32> -> vector<16x64xf32>
    %c0_35 = arith.constant 0 : index
    %c0_36 = arith.constant 0 : index
    %64 = vector.load %arg12[%c0_35, %c0_36] : memref<1x64xf32, #tpu.memory_space<vmem>>, vector<1x64xf32>
    %65 = vector.broadcast %64 : vector<1x64xf32> to vector<16x64xf32>
    %66 = arith.addf %63, %65 : vector<16x64xf32>
    %67 = vector.extract_strided_slice %30 {offsets = [0, 0], sizes = [64, 8], strides = [1, 1]} : vector<64x32xf32> to vector<64x8xf32>
    %68 = vector.extract_strided_slice %66 {offsets = [0, 0], sizes = [16, 8], strides = [1, 1]} : vector<16x64xf32> to vector<16x8xf32>
    %69 = vector.extract_strided_slice %66 {offsets = [0, 32], sizes = [16, 8], strides = [1, 1]} : vector<16x64xf32> to vector<16x8xf32>
    %cst_37 = arith.constant dense<0.000000e+00> : vector<64x16xf32>
    %70 = tpu.matmul %67, %68, %cst_37 {dimension_numbers = #tpu.dot_dimension_numbers<[1], [1], [0], [0], [0, 0, 1, 0], [], []>} : vector<64x8xf32>, vector<16x8xf32>, vector<64x16xf32> -> vector<64x16xf32>
    %cst_38 = arith.constant 0.353553385 : f32
    %71 = vector.broadcast %cst_38 : f32 to vector<64x16xf32>
    %72 = arith.mulf %70, %71 : vector<64x16xf32>
    %cst_39 = arith.constant dense<0xFF800000> : vector<64xf32>
    %73 = vector.multi_reduction <maximumf>, %72, %cst_39 [1] : vector<64x16xf32> to vector<64xf32>
    %74 = vector.shape_cast %73 : vector<64xf32> to vector<64x1xf32>
    %75 = vector.broadcast %74 : vector<64x1xf32> to vector<64x16xf32>
    %76 = arith.subf %72, %75 : vector<64x16xf32>
    %77 = math.exp %76 : vector<64x16xf32>
    %cst_40 = arith.constant dense<0.000000e+00> : vector<64xf32>
    %78 = vector.multi_reduction <add>, %77, %cst_40 [1] : vector<64x16xf32> to vector<64xf32>
    %79 = vector.shape_cast %78 : vector<64xf32> to vector<64x1xf32>
    %cst_41 = arith.constant dense<0.000000e+00> : vector<64x8xf32>
    %80 = tpu.matmul %77, %69, %cst_41 {dimension_numbers = #tpu.dot_dimension_numbers<[1], [0], [0], [1], [0, 0, 1, 1], [], []>} : vector<64x16xf32>, vector<16x8xf32>, vector<64x8xf32> -> vector<64x8xf32>
    %81 = tpu.reciprocal %79 {approx = true} : vector<64x1xf32> -> vector<64x1xf32>
    %82 = vector.broadcast %81 : vector<64x1xf32> to vector<64x8xf32>
    %83 = arith.mulf %80, %82 : vector<64x8xf32>
    %84 = vector.extract_strided_slice %30 {offsets = [0, 8], sizes = [64, 8], strides = [1, 1]} : vector<64x32xf32> to vector<64x8xf32>
    %85 = vector.extract_strided_slice %66 {offsets = [0, 8], sizes = [16, 8], strides = [1, 1]} : vector<16x64xf32> to vector<16x8xf32>
    %86 = vector.extract_strided_slice %66 {offsets = [0, 40], sizes = [16, 8], strides = [1, 1]} : vector<16x64xf32> to vector<16x8xf32>
    %cst_42 = arith.constant dense<0.000000e+00> : vector<64x16xf32>
    %87 = tpu.matmul %84, %85, %cst_42 {dimension_numbers = #tpu.dot_dimension_numbers<[1], [1], [0], [0], [0, 0, 1, 0], [], []>} : vector<64x8xf32>, vector<16x8xf32>, vector<64x16xf32> -> vector<64x16xf32>
    %cst_43 = arith.constant 0.353553385 : f32
    %88 = vector.broadcast %cst_43 : f32 to vector<64x16xf32>
    %89 = arith.mulf %87, %88 : vector<64x16xf32>
    %cst_44 = arith.constant dense<0xFF800000> : vector<64xf32>
    %90 = vector.multi_reduction <maximumf>, %89, %cst_44 [1] : vector<64x16xf32> to vector<64xf32>
    %91 = vector.shape_cast %90 : vector<64xf32> to vector<64x1xf32>
    %92 = vector.broadcast %91 : vector<64x1xf32> to vector<64x16xf32>
    %93 = arith.subf %89, %92 : vector<64x16xf32>
    %94 = math.exp %93 : vector<64x16xf32>
    %cst_45 = arith.constant dense<0.000000e+00> : vector<64xf32>
    %95 = vector.multi_reduction <add>, %94, %cst_45 [1] : vector<64x16xf32> to vector<64xf32>
    %96 = vector.shape_cast %95 : vector<64xf32> to vector<64x1xf32>
    %cst_46 = arith.constant dense<0.000000e+00> : vector<64x8xf32>
    %97 = tpu.matmul %94, %86, %cst_46 {dimension_numbers = #tpu.dot_dimension_numbers<[1], [0], [0], [1], [0, 0, 1, 1], [], []>} : vector<64x16xf32>, vector<16x8xf32>, vector<64x8xf32> -> vector<64x8xf32>
    %98 = tpu.reciprocal %96 {approx = true} : vector<64x1xf32> -> vector<64x1xf32>
    %99 = vector.broadcast %98 : vector<64x1xf32> to vector<64x8xf32>
    %100 = arith.mulf %97, %99 : vector<64x8xf32>
    %101 = vector.extract_strided_slice %30 {offsets = [0, 16], sizes = [64, 8], strides = [1, 1]} : vector<64x32xf32> to vector<64x8xf32>
    %102 = vector.extract_strided_slice %66 {offsets = [0, 16], sizes = [16, 8], strides = [1, 1]} : vector<16x64xf32> to vector<16x8xf32>
    %103 = vector.extract_strided_slice %66 {offsets = [0, 48], sizes = [16, 8], strides = [1, 1]} : vector<16x64xf32> to vector<16x8xf32>
    %cst_47 = arith.constant dense<0.000000e+00> : vector<64x16xf32>
    %104 = tpu.matmul %101, %102, %cst_47 {dimension_numbers = #tpu.dot_dimension_numbers<[1], [1], [0], [0], [0, 0, 1, 0], [], []>} : vector<64x8xf32>, vector<16x8xf32>, vector<64x16xf32> -> vector<64x16xf32>
    %cst_48 = arith.constant 0.353553385 : f32
    %105 = vector.broadcast %cst_48 : f32 to vector<64x16xf32>
    %106 = arith.mulf %104, %105 : vector<64x16xf32>
    %cst_49 = arith.constant dense<0xFF800000> : vector<64xf32>
    %107 = vector.multi_reduction <maximumf>, %106, %cst_49 [1] : vector<64x16xf32> to vector<64xf32>
    %108 = vector.shape_cast %107 : vector<64xf32> to vector<64x1xf32>
    %109 = vector.broadcast %108 : vector<64x1xf32> to vector<64x16xf32>
    %110 = arith.subf %106, %109 : vector<64x16xf32>
    %111 = math.exp %110 : vector<64x16xf32>
    %cst_50 = arith.constant dense<0.000000e+00> : vector<64xf32>
    %112 = vector.multi_reduction <add>, %111, %cst_50 [1] : vector<64x16xf32> to vector<64xf32>
    %113 = vector.shape_cast %112 : vector<64xf32> to vector<64x1xf32>
    %cst_51 = arith.constant dense<0.000000e+00> : vector<64x8xf32>
    %114 = tpu.matmul %111, %103, %cst_51 {dimension_numbers = #tpu.dot_dimension_numbers<[1], [0], [0], [1], [0, 0, 1, 1], [], []>} : vector<64x16xf32>, vector<16x8xf32>, vector<64x8xf32> -> vector<64x8xf32>
    %115 = tpu.reciprocal %113 {approx = true} : vector<64x1xf32> -> vector<64x1xf32>
    %116 = vector.broadcast %115 : vector<64x1xf32> to vector<64x8xf32>
    %117 = arith.mulf %114, %116 : vector<64x8xf32>
    %118 = vector.extract_strided_slice %30 {offsets = [0, 24], sizes = [64, 8], strides = [1, 1]} : vector<64x32xf32> to vector<64x8xf32>
    %119 = vector.extract_strided_slice %66 {offsets = [0, 24], sizes = [16, 8], strides = [1, 1]} : vector<16x64xf32> to vector<16x8xf32>
    %120 = vector.extract_strided_slice %66 {offsets = [0, 56], sizes = [16, 8], strides = [1, 1]} : vector<16x64xf32> to vector<16x8xf32>
    %cst_52 = arith.constant dense<0.000000e+00> : vector<64x16xf32>
    %121 = tpu.matmul %118, %119, %cst_52 {dimension_numbers = #tpu.dot_dimension_numbers<[1], [1], [0], [0], [0, 0, 1, 0], [], []>} : vector<64x8xf32>, vector<16x8xf32>, vector<64x16xf32> -> vector<64x16xf32>
    %cst_53 = arith.constant 0.353553385 : f32
    %122 = vector.broadcast %cst_53 : f32 to vector<64x16xf32>
    %123 = arith.mulf %121, %122 : vector<64x16xf32>
    %cst_54 = arith.constant dense<0xFF800000> : vector<64xf32>
    %124 = vector.multi_reduction <maximumf>, %123, %cst_54 [1] : vector<64x16xf32> to vector<64xf32>
    %125 = vector.shape_cast %124 : vector<64xf32> to vector<64x1xf32>
    %126 = vector.broadcast %125 : vector<64x1xf32> to vector<64x16xf32>
    %127 = arith.subf %123, %126 : vector<64x16xf32>
    %128 = math.exp %127 : vector<64x16xf32>
    %cst_55 = arith.constant dense<0.000000e+00> : vector<64xf32>
    %129 = vector.multi_reduction <add>, %128, %cst_55 [1] : vector<64x16xf32> to vector<64xf32>
    %130 = vector.shape_cast %129 : vector<64xf32> to vector<64x1xf32>
    %cst_56 = arith.constant dense<0.000000e+00> : vector<64x8xf32>
    %131 = tpu.matmul %128, %120, %cst_56 {dimension_numbers = #tpu.dot_dimension_numbers<[1], [0], [0], [1], [0, 0, 1, 1], [], []>} : vector<64x16xf32>, vector<16x8xf32>, vector<64x8xf32> -> vector<64x8xf32>
    %132 = tpu.reciprocal %130 {approx = true} : vector<64x1xf32> -> vector<64x1xf32>
    %133 = vector.broadcast %132 : vector<64x1xf32> to vector<64x8xf32>
    %134 = arith.mulf %131, %133 : vector<64x8xf32>
    %135 = tpu.concatenate %83, %100, %117, %134 in 1 : vector<64x8xf32>, vector<64x8xf32>, vector<64x8xf32>, vector<64x8xf32> -> vector<64x32xf32>
    %c0_57 = arith.constant 0 : index
    %c0_58 = arith.constant 0 : index
    %136 = vector.load %arg13[%c0_57, %c0_58] : memref<32x32xf32, #tpu.memory_space<vmem>>, vector<32x32xf32>
    %cst_59 = arith.constant dense<0.000000e+00> : vector<64x32xf32>
    %137 = tpu.matmul %135, %136, %cst_59 {dimension_numbers = #tpu.dot_dimension_numbers<[1], [0], [0], [1], [0, 0, 1, 1], [], []>} : vector<64x32xf32>, vector<32x32xf32>, vector<64x32xf32> -> vector<64x32xf32>
    %c0_60 = arith.constant 0 : index
    %c0_61 = arith.constant 0 : index
    %138 = vector.load %arg14[%c0_60, %c0_61] : memref<1x32xf32, #tpu.memory_space<vmem>>, vector<1x32xf32>
    %139 = vector.broadcast %138 : vector<1x32xf32> to vector<64x32xf32>
    %140 = arith.addf %137, %139 : vector<64x32xf32>
    %141 = arith.addf %1, %140 : vector<64x32xf32>
    %c0_62 = arith.constant 0 : index
    %c0_63 = arith.constant 0 : index
    %142 = vector.load %arg15[%c0_62, %c0_63] : memref<1x32xf32, #tpu.memory_space<vmem>>, vector<1x32xf32>
    %c0_64 = arith.constant 0 : index
    %c0_65 = arith.constant 0 : index
    %143 = vector.load %arg16[%c0_64, %c0_65] : memref<1x32xf32, #tpu.memory_space<vmem>>, vector<1x32xf32>
    %cst_66 = arith.constant dense<0.000000e+00> : vector<64xf32>
    %144 = vector.multi_reduction <add>, %141, %cst_66 [1] : vector<64x32xf32> to vector<64xf32>
    %145 = vector.shape_cast %144 : vector<64xf32> to vector<64x1xf32>
    %cst_67 = arith.constant 3.200000e+01 : f32
    %146 = vector.broadcast %cst_67 : f32 to vector<64x1xf32>
    %147 = arith.divf %145, %146 : vector<64x1xf32>
    %148 = vector.broadcast %147 : vector<64x1xf32> to vector<64x32xf32>
    %149 = arith.subf %141, %148 : vector<64x32xf32>
    %150 = arith.mulf %149, %149 : vector<64x32xf32>
    %cst_68 = arith.constant dense<0.000000e+00> : vector<64xf32>
    %151 = vector.multi_reduction <add>, %150, %cst_68 [1] : vector<64x32xf32> to vector<64xf32>
    %152 = vector.shape_cast %151 : vector<64xf32> to vector<64x1xf32>
    %cst_69 = arith.constant 3.200000e+01 : f32
    %153 = vector.broadcast %cst_69 : f32 to vector<64x1xf32>
    %154 = arith.divf %152, %153 : vector<64x1xf32>
    %155 = vector.broadcast %147 : vector<64x1xf32> to vector<64x32xf32>
    %156 = arith.subf %141, %155 : vector<64x32xf32>
    %cst_70 = arith.constant 9.99999974E-6 : f32
    %157 = vector.broadcast %cst_70 : f32 to vector<64x1xf32>
    %158 = arith.addf %154, %157 : vector<64x1xf32>
    %159 = math.rsqrt %158 : vector<64x1xf32>
    %160 = vector.broadcast %159 : vector<64x1xf32> to vector<64x32xf32>
    %161 = arith.mulf %156, %160 : vector<64x32xf32>
    %162 = vector.broadcast %142 : vector<1x32xf32> to vector<64x32xf32>
    %163 = arith.mulf %161, %162 : vector<64x32xf32>
    %164 = vector.broadcast %143 : vector<1x32xf32> to vector<64x32xf32>
    %165 = arith.addf %163, %164 : vector<64x32xf32>
    %c0_71 = arith.constant 0 : index
    %c0_72 = arith.constant 0 : index
    %166 = vector.load %arg17[%c0_71, %c0_72] : memref<32x128xf32, #tpu.memory_space<vmem>>, vector<32x128xf32>
    %cst_73 = arith.constant dense<0.000000e+00> : vector<64x128xf32>
    %167 = tpu.matmul %165, %166, %cst_73 {dimension_numbers = #tpu.dot_dimension_numbers<[1], [0], [0], [1], [0, 0, 1, 1], [], []>} : vector<64x32xf32>, vector<32x128xf32>, vector<64x128xf32> -> vector<64x128xf32>
    %c0_74 = arith.constant 0 : index
    %c0_75 = arith.constant 0 : index
    %168 = vector.load %arg18[%c0_74, %c0_75] : memref<1x128xf32, #tpu.memory_space<vmem>>, vector<1x128xf32>
    %169 = vector.broadcast %168 : vector<1x128xf32> to vector<64x128xf32>
    %170 = arith.addf %167, %169 : vector<64x128xf32>
    %cst_76 = arith.constant 5.000000e-01 : f32
    %171 = vector.broadcast %cst_76 : f32 to vector<64x128xf32>
    %172 = arith.mulf %171, %170 : vector<64x128xf32>
    %cst_77 = arith.constant 4.471500e-02 : f32
    %173 = vector.broadcast %cst_77 : f32 to vector<64x128xf32>
    %174 = arith.mulf %173, %170 : vector<64x128xf32>
    %175 = arith.mulf %174, %170 : vector<64x128xf32>
    %176 = arith.mulf %175, %170 : vector<64x128xf32>
    %177 = arith.addf %170, %176 : vector<64x128xf32>
    %cst_78 = arith.constant 0.797884583 : f32
    %178 = vector.broadcast %cst_78 : f32 to vector<64x128xf32>
    %179 = arith.mulf %178, %177 : vector<64x128xf32>
    %180 = math.tanh %179 : vector<64x128xf32>
    %cst_79 = arith.constant 1.000000e+00 : f32
    %181 = vector.broadcast %cst_79 : f32 to vector<64x128xf32>
    %182 = arith.addf %181, %180 : vector<64x128xf32>
    %183 = arith.mulf %172, %182 : vector<64x128xf32>
    %c0_80 = arith.constant 0 : index
    %c0_81 = arith.constant 0 : index
    %184 = vector.load %arg19[%c0_80, %c0_81] : memref<128x32xf32, #tpu.memory_space<vmem>>, vector<128x32xf32>
    %cst_82 = arith.constant dense<0.000000e+00> : vector<64x32xf32>
    %185 = tpu.matmul %183, %184, %cst_82 {dimension_numbers = #tpu.dot_dimension_numbers<[1], [0], [0], [1], [0, 0, 1, 1], [], []>} : vector<64x128xf32>, vector<128x32xf32>, vector<64x32xf32> -> vector<64x32xf32>
    %c0_83 = arith.constant 0 : index
    %c0_84 = arith.constant 0 : index
    %186 = vector.load %arg20[%c0_83, %c0_84] : memref<1x32xf32, #tpu.memory_space<vmem>>, vector<1x32xf32>
    %187 = vector.broadcast %186 : vector<1x32xf32> to vector<64x32xf32>
    %188 = arith.addf %185, %187 : vector<64x32xf32>
    %189 = arith.addf %141, %188 : vector<64x32xf32>
    %c0_85 = arith.constant 0 : index
    %c0_86 = arith.constant 0 : index
    %c0_87 = arith.constant 0 : index
    %190 = vector.load %arg21[%c0_85, %c0_86, %c0_87] : memref<1x64x32xf32, #tpu.memory_space<vmem>>, vector<1x64x32xf32>
    %191 = vector.shape_cast %190 : vector<1x64x32xf32> to vector<64x32xf32>
    %192 = vector.shape_cast %189 : vector<64x32xf32> to vector<1x64x32xf32>
    tpu.vector_store %arg21[%c0_85, %c0_86, %c0_87], %192 {strides = array<i32>} : memref<1x64x32xf32, #tpu.memory_space<vmem>>, vector<1x64x32xf32>,
    return
  }
  func.func @transform_0(%arg0: i32) -> (i32, i32, i32) {
    %c0_i32 = arith.constant 0 : i32
    %c0_i32_0 = arith.constant 0 : i32
    %c0_i32_1 = arith.constant 0 : i32
    return %arg0, %c0_i32, %c0_i32_0 : i32, i32, i32
  }
  func.func @transform_1(%arg0: i32) -> (i32, i32) {
    %c0_i32 = arith.constant 0 : i32
    %c0_i32_0 = arith.constant 0 : i32
    %c0_i32_1 = arith.constant 0 : i32
    return %c0_i32, %c0_i32_0 : i32, i32
  }
  func.func @transform_2(%arg0: i32) -> (i32, i32) {
    %c0_i32 = arith.constant 0 : i32
    %c0_i32_0 = arith.constant 0 : i32
    %c0_i32_1 = arith.constant 0 : i32
    return %c0_i32, %c0_i32_0 : i32, i32
  }
  func.func @transform_3(%arg0: i32) -> (i32, i32) {
    %c0_i32 = arith.constant 0 : i32
    %c0_i32_0 = arith.constant 0 : i32
    %c0_i32_1 = arith.constant 0 : i32
    return %c0_i32, %c0_i32_0 : i32, i32
  }
  func.func @transform_4(%arg0: i32) -> (i32, i32) {
    %c0_i32 = arith.constant 0 : i32
    %c0_i32_0 = arith.constant 0 : i32
    %c0_i32_1 = arith.constant 0 : i32
    return %c0_i32, %c0_i32_0 : i32, i32
  }
  func.func @transform_5(%arg0: i32) -> (i32, i32) {
    %c0_i32 = arith.constant 0 : i32
    %c0_i32_0 = arith.constant 0 : i32
    %c0_i32_1 = arith.constant 0 : i32
    return %c0_i32, %c0_i32_0 : i32, i32
  }
  func.func @transform_6(%arg0: i32) -> (i32, i32) {
    %c0_i32 = arith.constant 0 : i32
    %c0_i32_0 = arith.constant 0 : i32
    %c0_i32_1 = arith.constant 0 : i32
    return %c0_i32, %c0_i32_0 : i32, i32
  }
  func.func @transform_7(%arg0: i32) -> (i32, i32) {
    %c0_i32 = arith.constant 0 : i32
    %c0_i32_0 = arith.constant 0 : i32
    %c0_i32_1 = arith.constant 0 : i32
    return %c0_i32, %c0_i32_0 : i32, i32
  }
  func.func @transform_8(%arg0: i32) -> (i32, i32) {
    %c0_i32 = arith.constant 0 : i32
    %c0_i32_0 = arith.constant 0 : i32
    %c0_i32_1 = arith.constant 0 : i32
    return %c0_i32, %c0_i32_0 : i32, i32
  }
  func.func @transform_9(%arg0: i32) -> (i32, i32) {
    %c0_i32 = arith.constant 0 : i32
    %c0_i32_0 = arith.constant 0 : i32
    %c0_i32_1 = arith.constant 0 : i32
    return %c0_i32, %c0_i32_0 : i32, i32
  }
  func.func @transform_10(%arg0: i32) -> (i32, i32) {
    %c0_i32 = arith.constant 0 : i32
    %c0_i32_0 = arith.constant 0 : i32
    %c0_i32_1 = arith.constant 0 : i32
    return %c0_i32, %c0_i32_0 : i32, i32
  }
  func.func @transform_11(%arg0: i32) -> (i32, i32) {
    %c0_i32 = arith.constant 0 : i32
    %c0_i32_0 = arith.constant 0 : i32
    %c0_i32_1 = arith.constant 0 : i32
    return %c0_i32, %c0_i32_0 : i32, i32
  }
  func.func @transform_12(%arg0: i32) -> (i32, i32) {
    %c0_i32 = arith.constant 0 : i32
    %c0_i32_0 = arith.constant 0 : i32
    %c0_i32_1 = arith.constant 0 : i32
    return %c0_i32, %c0_i32_0 : i32, i32
  }
  func.func @transform_13(%arg0: i32) -> (i32, i32) {
    %c0_i32 = arith.constant 0 : i32
    %c0_i32_0 = arith.constant 0 : i32
    %c0_i32_1 = arith.constant 0 : i32
    return %c0_i32, %c0_i32_0 : i32, i32
  }
  func.func @transform_14(%arg0: i32) -> (i32, i32) {
    %c0_i32 = arith.constant 0 : i32
    %c0_i32_0 = arith.constant 0 : i32
    %c0_i32_1 = arith.constant 0 : i32
    return %c0_i32, %c0_i32_0 : i32, i32
  }
  func.func @transform_15(%arg0: i32) -> (i32, i32) {
    %c0_i32 = arith.constant 0 : i32
    %c0_i32_0 = arith.constant 0 : i32
    %c0_i32_1 = arith.constant 0 : i32
    return %c0_i32, %c0_i32_0 : i32, i32
  }
  func.func @transform_16(%arg0: i32) -> (i32, i32) {
    %c0_i32 = arith.constant 0 : i32
    %c0_i32_0 = arith.constant 0 : i32
    %c0_i32_1 = arith.constant 0 : i32
    return %c0_i32, %c0_i32_0 : i32, i32
  }
  func.func @transform_17(%arg0: i32) -> (i32, i32) {
    %c0_i32 = arith.constant 0 : i32
    %c0_i32_0 = arith.constant 0 : i32
    %c0_i32_1 = arith.constant 0 : i32
    return %c0_i32, %c0_i32_0 : i32, i32
  }
  func.func @transform_18(%arg0: i32) -> (i32, i32) {
    %c0_i32 = arith.constant 0 : i32
    %c0_i32_0 = arith.constant 0 : i32
    %c0_i32_1 = arith.constant 0 : i32
    return %c0_i32, %c0_i32_0 : i32, i32
  }
  func.func @transform_19(%arg0: i32) -> (i32, i32) {
    %c0_i32 = arith.constant 0 : i32
    %c0_i32_0 = arith.constant 0 : i32
    %c0_i32_1 = arith.constant 0 : i32
    return %c0_i32, %c0_i32_0 : i32, i32
  }
  func.func @transform_20(%arg0: i32) -> (i32, i32, i32) {
    %c0_i32 = arith.constant 0 : i32
    %c0_i32_0 = arith.constant 0 : i32
    %c0_i32_1 = arith.constant 0 : i32
    return %arg0, %c0_i32, %c0_i32_0 : i32, i32, i32
  }
}

</mosaic_0001>

<llo_original>
// kernel: tpu_custom_call.1
$region0: #{tpu_custom_call.1}
  #allocation0 [shape = 'u32[]', space=smem, size = 0x4, offset = 0x4, fixed_abs, tag = 'smem constant byte address 0x4 - core index']
  #allocation1 [shape = 'u32[144,128]{1,0:T(1,128)}', space=vmem, size = 0x12000, scoped, tag = 'internal scratch']
  %s0 = inlined_call_operand.vmem [shape: f32[2,64,32], index: 0, kind: input, shape index: {}]
  %s1 = inlined_call_operand.vmem [shape: f32[16,64], index: 1, kind: input, shape index: {}]
  %s2 = inlined_call_operand.vmem [shape: f32[1,32], index: 2, kind: input, shape index: {}]
  %s3 = inlined_call_operand.vmem [shape: f32[1,32], index: 3, kind: input, shape index: {}]
  %s4 = inlined_call_operand.vmem [shape: f32[32,32], index: 4, kind: input, shape index: {}]
  %s5 = inlined_call_operand.vmem [shape: f32[1,32], index: 5, kind: input, shape index: {}]
  %s6 = inlined_call_operand.vmem [shape: f32[32,32], index: 6, kind: input, shape index: {}]
  %s7 = inlined_call_operand.vmem [shape: f32[1,32], index: 7, kind: input, shape index: {}]
  %s8 = inlined_call_operand.vmem [shape: f32[1,32], index: 8, kind: input, shape index: {}]
  %s9 = inlined_call_operand.vmem [shape: f32[1,32], index: 9, kind: input, shape index: {}]
  %s10 = inlined_call_operand.vmem [shape: f32[32,64], index: 10, kind: input, shape index: {}]
  %s11 = inlined_call_operand.vmem [shape: f32[1,64], index: 11, kind: input, shape index: {}]
  %s12 = inlined_call_operand.vmem [shape: f32[32,32], index: 12, kind: input, shape index: {}]
  %s13 = inlined_call_operand.vmem [shape: f32[1,32], index: 13, kind: input, shape index: {}]
  %s14 = inlined_call_operand.vmem [shape: f32[1,32], index: 14, kind: input, shape index: {}]
  %s15 = inlined_call_operand.vmem [shape: f32[1,32], index: 15, kind: input, shape index: {}]
  %s16 = inlined_call_operand.vmem [shape: f32[32,128], index: 16, kind: input, shape index: {}]
  %s17 = inlined_call_operand.vmem [shape: f32[1,128], index: 17, kind: input, shape index: {}]
  %s18 = inlined_call_operand.vmem [shape: f32[128,32], index: 18, kind: input, shape index: {}]
  %s19 = inlined_call_operand.vmem [shape: f32[1,32], index: 19, kind: input, shape index: {}]
  %s20 = inlined_call_operand.vmem [shape: f32[2,64,32], index: 20, kind: output, shape index: {}]
  %s21 = sld [smem:[#allocation0]]
  $region113: #{tpu_custom_call.1} parent=0
    _
  %s23 = ssub.s32 1, %s21
  %s24 = scalar_select 0, %s23, %s21
  loop: start=0, step=1, limit=4
  $region2: #{tpu_custom_call.1} parent=0 // loop_pre_header
    _
  $region3: #{tpu_custom_call.1} parent=0 // loop_header
    %s26 = sphi 0, %s30
    %p27 = scmp.ge.s32.totalorder %s26, 4
    %s36 = sphi 0, %s38
    %s39 = sphi 0, %s36
    %s40 = sphi 0, %s39
    %s56 = sphi 0, %s40
    %s60 = sphi 0, %s60
    %s62 = sphi 0, %s60
    %s63 = sphi 0, %s62
    %s77 = sphi 0, %s63
    %s81 = sphi 0, %s81
    %s83 = sphi 0, %s81
    %s84 = sphi 0, %s83
    %s98 = sphi 0, %s84
    %s102 = sphi 0, %s102
    %s104 = sphi 0, %s102
    %s105 = sphi 0, %s104
    %s119 = sphi 0, %s105
    %s123 = sphi 0, %s123
    %s125 = sphi 0, %s123
    %s126 = sphi 0, %s125
    %s140 = sphi 0, %s126
    %s144 = sphi 0, %s144
    %s146 = sphi 0, %s144
    %s147 = sphi 0, %s146
    %s161 = sphi 0, %s147
    %s165 = sphi 0, %s165
    %s167 = sphi 0, %s165
    %s168 = sphi 0, %s167
    %s182 = sphi 0, %s168
    %s186 = sphi 0, %s186
    %s188 = sphi 0, %s186
    %s189 = sphi 0, %s188
    %s203 = sphi 0, %s189
    %s207 = sphi 0, %s207
    %s209 = sphi 0, %s207
    %s210 = sphi 0, %s209
    %s224 = sphi 0, %s210
    %s228 = sphi 0, %s228
    %s230 = sphi 0, %s228
    %s231 = sphi 0, %s230
    %s245 = sphi 0, %s231
    %s249 = sphi 0, %s249
    %s251 = sphi 0, %s249
    %s252 = sphi 0, %s251
    %s266 = sphi 0, %s252
    %s270 = sphi 0, %s270
    %s272 = sphi 0, %s270
    %s273 = sphi 0, %s272
    %s287 = sphi 0, %s273
    %s291 = sphi 0, %s291
    %s293 = sphi 0, %s291
    %s294 = sphi 0, %s293
    %s308 = sphi 0, %s294
    %s312 = sphi 0, %s312
    %s314 = sphi 0, %s312
    %s315 = sphi 0, %s314
    %s329 = sphi 0, %s315
    %s333 = sphi 0, %s333
    %s335 = sphi 0, %s333
    %s336 = sphi 0, %s335
    %s350 = sphi 0, %s336
    %s354 = sphi 0, %s354
    %s356 = sphi 0, %s354
    %s357 = sphi 0, %s356
    %s371 = sphi 0, %s357
    %s375 = sphi 0, %s375
    %s377 = sphi 0, %s375
    %s378 = sphi 0, %s377
    %s392 = sphi 0, %s378
    %s396 = sphi 0, %s396
    %s398 = sphi 0, %s396
    %s399 = sphi 0, %s398
    %s413 = sphi 0, %s399
    %s417 = sphi 0, %s417
    %s419 = sphi 0, %s417
    %s420 = sphi 0, %s419
    %s434 = sphi 0, %s420
    %s438 = sphi 0, %s438
    %s440 = sphi 0, %s438
    %s441 = sphi 0, %s440
    %s455 = sphi 0, %s441
    %s461 = sphi 0, %s463
    %s464 = sphi 0, %s461
    %s465 = sphi 0, %s464
    %s481 = sphi 0, %s465
  $region4: #{tpu_custom_call.1} parent=0 // loop_header_branch
    %29 = sbr.rel (%p27) target = $region8
  $region5: #{tpu_custom_call.1} parent=0 // loop_body
    %s31 = ssub.s32 %s26, 1
    %s32 = ssub.s32 %s26, 2
    %s33 = sadd.s32 %s26, 1
    %s34 = ssub.s32 %s26, %s33
    %p35 = scmp.eq.s32.totalorder %s34, 0
    %s37 = sadd.s32 %s36, 1
    %s38 = scalar_select %p35, %s36, %s37
    %p41 = pneg %p35
    %p42 = scmp.eq.s32.totalorder %s26, 1
    %p43 = por %p41, %p42
    %p44 = scmp.ne.s32.totalorder %s36, %s39
    %p45 = scmp.eq.s32.totalorder %s26, 0
    %p46 = por %p44, %p45
    %p47 = scmp.ne.s32.totalorder %s36, %s39
    %p48 = scmp.eq.s32.totalorder %s31, 1
    %p49 = por %p47, %p48
    %p50 = scmp.ne.s32.totalorder %s39, %s40
    %p51 = scmp.eq.s32.totalorder %s31, 0
    %p52 = por %p50, %p51
    %p53 = scmp.ne.s32.totalorder %s39, %s40
    %p54 = scmp.eq.s32.totalorder %s32, 1
    %p55 = por %p53, %p54
    %p57 = scmp.ne.s32.totalorder %s40, %s56
    %p58 = scmp.eq.s32.totalorder %s32, 0
    %p59 = por %p57, %p58
    %s61 = sadd.s32 %s60, 1
    %p64 = scmp.eq.s32.totalorder %s26, 1
    %p65 = scmp.ne.s32.totalorder %s60, %s62
    %p66 = scmp.eq.s32.totalorder %s26, 0
    %p67 = por %p65, %p66
    %p68 = scmp.ne.s32.totalorder %s60, %s62
    %p69 = scmp.eq.s32.totalorder %s31, 1
    %p70 = por %p68, %p69
    %p71 = scmp.ne.s32.totalorder %s62, %s63
    %p72 = scmp.eq.s32.totalorder %s31, 0
    %p73 = por %p71, %p72
    %p74 = scmp.ne.s32.totalorder %s62, %s63
    %p75 = scmp.eq.s32.totalorder %s32, 1
    %p76 = por %p74, %p75
    %p78 = scmp.ne.s32.totalorder %s63, %s77
    %p79 = scmp.eq.s32.totalorder %s32, 0
    %p80 = por %p78, %p79
    %s82 = sadd.s32 %s81, 1
    %p85 = scmp.eq.s32.totalorder %s26, 1
    %p86 = scmp.ne.s32.totalorder %s81, %s83
    %p87 = scmp.eq.s32.totalorder %s26, 0
    %p88 = por %p86, %p87
    %p89 = scmp.ne.s32.totalorder %s81, %s83
    %p90 = scmp.eq.s32.totalorder %s31, 1
    %p91 = por %p89, %p90
    %p92 = scmp.ne.s32.totalorder %s83, %s84
    %p93 = scmp.eq.s32.totalorder %s31, 0
    %p94 = por %p92, %p93
    %p95 = scmp.ne.s32.totalorder %s83, %s84
    %p96 = scmp.eq.s32.totalorder %s32, 1
    %p97 = por %p95, %p96
    %p99 = scmp.ne.s32.totalorder %s84, %s98
    %p100 = scmp.eq.s32.totalorder %s32, 0
    %p101 = por %p99, %p100
    %s103 = sadd.s32 %s102, 1
    %p106 = scmp.eq.s32.totalorder %s26, 1
    %p107 = scmp.ne.s32.totalorder %s102, %s104
    %p108 = scmp.eq.s32.totalorder %s26, 0
    %p109 = por %p107, %p108
    %p110 = scmp.ne.s32.totalorder %s102, %s104
    %p111 = scmp.eq.s32.totalorder %s31, 1
    %p112 = por %p110, %p111
    %p113 = scmp.ne.s32.totalorder %s104, %s105
    %p114 = scmp.eq.s32.totalorder %s31, 0
    %p115 = por %p113, %p114
    %p116 = scmp.ne.s32.totalorder %s104, %s105
    %p117 = scmp.eq.s32.totalorder %s32, 1
    %p118 = por %p116, %p117
    %p120 = scmp.ne.s32.totalorder %s105, %s119
    %p121 = scmp.eq.s32.totalorder %s32, 0
    %p122 = por %p120, %p121
    %s124 = sadd.s32 %s123, 1
    %p127 = scmp.eq.s32.totalorder %s26, 1
    %p128 = scmp.ne.s32.totalorder %s123, %s125
    %p129 = scmp.eq.s32.totalorder %s26, 0
    %p130 = por %p128, %p129
    %p131 = scmp.ne.s32.totalorder %s123, %s125
    %p132 = scmp.eq.s32.totalorder %s31, 1
    %p133 = por %p131, %p132
    %p134 = scmp.ne.s32.totalorder %s125, %s126
    %p135 = scmp.eq.s32.totalorder %s31, 0
    %p136 = por %p134, %p135
    %p137 = scmp.ne.s32.totalorder %s125, %s126
    %p138 = scmp.eq.s32.totalorder %s32, 1
    %p139 = por %p137, %p138
    %p141 = scmp.ne.s32.totalorder %s126, %s140
    %p142 = scmp.eq.s32.totalorder %s32, 0
    %p143 = por %p141, %p142
    %s145 = sadd.s32 %s144, 1
    %p148 = scmp.eq.s32.totalorder %s26, 1
    %p149 = scmp.ne.s32.totalorder %s144, %s146
    %p150 = scmp.eq.s32.totalorder %s26, 0
    %p151 = por %p149, %p150
    %p152 = scmp.ne.s32.totalorder %s144, %s146
    %p153 = scmp.eq.s32.totalorder %s31, 1
    %p154 = por %p152, %p153
    %p155 = scmp.ne.s32.totalorder %s146, %s147
    %p156 = scmp.eq.s32.totalorder %s31, 0
    %p157 = por %p155, %p156
    %p158 = scmp.ne.s32.totalorder %s146, %s147
    %p159 = scmp.eq.s32.totalorder %s32, 1
    %p160 = por %p158, %p159
    %p162 = scmp.ne.s32.totalorder %s147, %s161
    %p163 = scmp.eq.s32.totalorder %s32, 0
    %p164 = por %p162, %p163
    %s166 = sadd.s32 %s165, 1
    %p169 = scmp.eq.s32.totalorder %s26, 1
    %p170 = scmp.ne.s32.totalorder %s165, %s167
    %p171 = scmp.eq.s32.totalorder %s26, 0
    %p172 = por %p170, %p171
    %p173 = scmp.ne.s32.totalorder %s165, %s167
    %p174 = scmp.eq.s32.totalorder %s31, 1
    %p175 = por %p173, %p174
    %p176 = scmp.ne.s32.totalorder %s167, %s168
    %p177 = scmp.eq.s32.totalorder %s31, 0
    %p178 = por %p176, %p177
    %p179 = scmp.ne.s32.totalorder %s167, %s168
    %p180 = scmp.eq.s32.totalorder %s32, 1
    %p181 = por %p179, %p180
    %p183 = scmp.ne.s32.totalorder %s168, %s182
    %p184 = scmp.eq.s32.totalorder %s32, 0
    %p185 = por %p183, %p184
    %s187 = sadd.s32 %s186, 1
    %p190 = scmp.eq.s32.totalorder %s26, 1
    %p191 = scmp.ne.s32.totalorder %s186, %s188
    %p192 = scmp.eq.s32.totalorder %s26, 0
    %p193 = por %p191, %p192
    %p194 = scmp.ne.s32.totalorder %s186, %s188
    %p195 = scmp.eq.s32.totalorder %s31, 1
    %p196 = por %p194, %p195
    %p197 = scmp.ne.s32.totalorder %s188, %s189
    %p198 = scmp.eq.s32.totalorder %s31, 0
    %p199 = por %p197, %p198
    %p200 = scmp.ne.s32.totalorder %s188, %s189
    %p201 = scmp.eq.s32.totalorder %s32, 1
    %p202 = por %p200, %p201
    %p204 = scmp.ne.s32.totalorder %s189, %s203
    %p205 = scmp.eq.s32.totalorder %s32, 0
    %p206 = por %p204, %p205
    %s208 = sadd.s32 %s207, 1
    %p211 = scmp.eq.s32.totalorder %s26, 1
    %p212 = scmp.ne.s32.totalorder %s207, %s209
    %p213 = scmp.eq.s32.totalorder %s26, 0
    %p214 = por %p212, %p213
    %p215 = scmp.ne.s32.totalorder %s207, %s209
    %p216 = scmp.eq.s32.totalorder %s31, 1
    %p217 = por %p215, %p216
    %p218 = scmp.ne.s32.totalorder %s209, %s210
    %p219 = scmp.eq.s32.totalorder %s31, 0
    %p220 = por %p218, %p219
    %p221 = scmp.ne.s32.totalorder %s209, %s210
    %p222 = scmp.eq.s32.totalorder %s32, 1
    %p223 = por %p221, %p222
    %p225 = scmp.ne.s32.totalorder %s210, %s224
    %p226 = scmp.eq.s32.totalorder %s32, 0
    %p227 = por %p225, %p226
    %s229 = sadd.s32 %s228, 1
    %p232 = scmp.eq.s32.totalorder %s26, 1
    %p233 = scmp.ne.s32.totalorder %s228, %s230
    %p234 = scmp.eq.s32.totalorder %s26, 0
    %p235 = por %p233, %p234
    %p236 = scmp.ne.s32.totalorder %s228, %s230
    %p237 = scmp.eq.s32.totalorder %s31, 1
    %p238 = por %p236, %p237
    %p239 = scmp.ne.s32.totalorder %s230, %s231
    %p240 = scmp.eq.s32.totalorder %s31, 0
    %p241 = por %p239, %p240
    %p242 = scmp.ne.s32.totalorder %s230, %s231
    %p243 = scmp.eq.s32.totalorder %s32, 1
    %p244 = por %p242, %p243
    %p246 = scmp.ne.s32.totalorder %s231, %s245
    %p247 = scmp.eq.s32.totalorder %s32, 0
    %p248 = por %p246, %p247
    %s250 = sadd.s32 %s249, 1
    %p253 = scmp.eq.s32.totalorder %s26, 1
    %p254 = scmp.ne.s32.totalorder %s249, %s251
    %p255 = scmp.eq.s32.totalorder %s26, 0
    %p256 = por %p254, %p255
    %p257 = scmp.ne.s32.totalorder %s249, %s251
    %p258 = scmp.eq.s32.totalorder %s31, 1
    %p259 = por %p257, %p258
    %p260 = scmp.ne.s32.totalorder %s251, %s252
    %p261 = scmp.eq.s32.totalorder %s31, 0
    %p262 = por %p260, %p261
    %p263 = scmp.ne.s32.totalorder %s251, %s252
    %p264 = scmp.eq.s32.totalorder %s32, 1
    %p265 = por %p263, %p264
    %p267 = scmp.ne.s32.totalorder %s252, %s266
    %p268 = scmp.eq.s32.totalorder %s32, 0
    %p269 = por %p267, %p268
    %s271 = sadd.s32 %s270, 1
    %p274 = scmp.eq.s32.totalorder %s26, 1
    %p275 = scmp.ne.s32.totalorder %s270, %s272
    %p276 = scmp.eq.s32.totalorder %s26, 0
    %p277 = por %p275, %p276
    %p278 = scmp.ne.s32.totalorder %s270, %s272
    %p279 = scmp.eq.s32.totalorder %s31, 1
    %p280 = por %p278, %p279
    %p281 = scmp.ne.s32.totalorder %s272, %s273
    %p282 = scmp.eq.s32.totalorder %s31, 0
    %p283 = por %p281, %p282
    %p284 = scmp.ne.s32.totalorder %s272, %s273
    %p285 = scmp.eq.s32.totalorder %s32, 1
    %p286 = por %p284, %p285
    %p288 = scmp.ne.s32.totalorder %s273, %s287
    %p289 = scmp.eq.s32.totalorder %s32, 0
    %p290 = por %p288, %p289
    %s292 = sadd.s32 %s291, 1
    %p295 = scmp.eq.s32.totalorder %s26, 1
    %p296 = scmp.ne.s32.totalorder %s291, %s293
    %p297 = scmp.eq.s32.totalorder %s26, 0
    %p298 = por %p296, %p297
    %p299 = scmp.ne.s32.totalorder %s291, %s293
    %p300 = scmp.eq.s32.totalorder %s31, 1
    %p301 = por %p299, %p300
    %p302 = scmp.ne.s32.totalorder %s293, %s294
    %p303 = scmp.eq.s32.totalorder %s31, 0
    %p304 = por %p302, %p303
    %p305 = scmp.ne.s32.totalorder %s293, %s294
    %p306 = scmp.eq.s32.totalorder %s32, 1
    %p307 = por %p305, %p306
    %p309 = scmp.ne.s32.totalorder %s294, %s308
    %p310 = scmp.eq.s32.totalorder %s32, 0
    %p311 = por %p309, %p310
    %s313 = sadd.s32 %s312, 1
    %p316 = scmp.eq.s32.totalorder %s26, 1
    %p317 = scmp.ne.s32.totalorder %s312, %s314
    %p318 = scmp.eq.s32.totalorder %s26, 0
    %p319 = por %p317, %p318
    %p320 = scmp.ne.s32.totalorder %s312, %s314
    %p321 = scmp.eq.s32.totalorder %s31, 1
    %p322 = por %p320, %p321
    %p323 = scmp.ne.s32.totalorder %s314, %s315
    %p324 = scmp.eq.s32.totalorder %s31, 0
    %p325 = por %p323, %p324
    %p326 = scmp.ne.s32.totalorder %s314, %s315
    %p327 = scmp.eq.s32.totalorder %s32, 1
    %p328 = por %p326, %p327
    %p330 = scmp.ne.s32.totalorder %s315, %s329
    %p331 = scmp.eq.s32.totalorder %s32, 0
    %p332 = por %p330, %p331
    %s334 = sadd.s32 %s333, 1
    %p337 = scmp.eq.s32.totalorder %s26, 1
    %p338 = scmp.ne.s32.totalorder %s333, %s335
    %p339 = scmp.eq.s32.totalorder %s26, 0
    %p340 = por %p338, %p339
    %p341 = scmp.ne.s32.totalorder %s333, %s335
    %p342 = scmp.eq.s32.totalorder %s31, 1
    %p343 = por %p341, %p342
    %p344 = scmp.ne.s32.totalorder %s335, %s336
    %p345 = scmp.eq.s32.totalorder %s31, 0
    %p346 = por %p344, %p345
    %p347 = scmp.ne.s32.totalorder %s335, %s336
    %p348 = scmp.eq.s32.totalorder %s32, 1
    %p349 = por %p347, %p348
    %p351 = scmp.ne.s32.totalorder %s336, %s350
    %p352 = scmp.eq.s32.totalorder %s32, 0
    %p353 = por %p351, %p352
    %s355 = sadd.s32 %s354, 1
    %p358 = scmp.eq.s32.totalorder %s26, 1
    %p359 = scmp.ne.s32.totalorder %s354, %s356
    %p360 = scmp.eq.s32.totalorder %s26, 0
    %p361 = por %p359, %p360
    %p362 = scmp.ne.s32.totalorder %s354, %s356
    %p363 = scmp.eq.s32.totalorder %s31, 1
    %p364 = por %p362, %p363
    %p365 = scmp.ne.s32.totalorder %s356, %s357
    %p366 = scmp.eq.s32.totalorder %s31, 0
    %p367 = por %p365, %p366
    %p368 = scmp.ne.s32.totalorder %s356, %s357
    %p369 = scmp.eq.s32.totalorder %s32, 1
    %p370 = por %p368, %p369
    %p372 = scmp.ne.s32.totalorder %s357, %s371
    %p373 = scmp.eq.s32.totalorder %s32, 0
    %p374 = por %p372, %p373
    %s376 = sadd.s32 %s375, 1
    %p379 = scmp.eq.s32.totalorder %s26, 1
    %p380 = scmp.ne.s32.totalorder %s375, %s377
    %p381 = scmp.eq.s32.totalorder %s26, 0
    %p382 = por %p380, %p381
    %p383 = scmp.ne.s32.totalorder %s375, %s377
    %p384 = scmp.eq.s32.totalorder %s31, 1
    %p385 = por %p383, %p384
    %p386 = scmp.ne.s32.totalorder %s377, %s378
    %p387 = scmp.eq.s32.totalorder %s31, 0
    %p388 = por %p386, %p387
    %p389 = scmp.ne.s32.totalorder %s377, %s378
    %p390 = scmp.eq.s32.totalorder %s32, 1
    %p391 = por %p389, %p390
    %p393 = scmp.ne.s32.totalorder %s378, %s392
    %p394 = scmp.eq.s32.totalorder %s32, 0
    %p395 = por %p393, %p394
    %s397 = sadd.s32 %s396, 1
    %p400 = scmp.eq.s32.totalorder %s26, 1
    %p401 = scmp.ne.s32.totalorder %s396, %s398
    %p402 = scmp.eq.s32.totalorder %s26, 0
    %p403 = por %p401, %p402
    %p404 = scmp.ne.s32.totalorder %s396, %s398
    %p405 = scmp.eq.s32.totalorder %s31, 1
    %p406 = por %p404, %p405
    %p407 = scmp.ne.s32.totalorder %s398, %s399
    %p408 = scmp.eq.s32.totalorder %s31, 0
    %p409 = por %p407, %p408
    %p410 = scmp.ne.s32.totalorder %s398, %s399
    %p411 = scmp.eq.s32.totalorder %s32, 1
    %p412 = por %p410, %p411
    %p414 = scmp.ne.s32.totalorder %s399, %s413
    %p415 = scmp.eq.s32.totalorder %s32, 0
    %p416 = por %p414, %p415
    %s418 = sadd.s32 %s417, 1
    %p421 = scmp.eq.s32.totalorder %s26, 1
    %p422 = scmp.ne.s32.totalorder %s417, %s419
    %p423 = scmp.eq.s32.totalorder %s26, 0
    %p424 = por %p422, %p423
    %p425 = scmp.ne.s32.totalorder %s417, %s419
    %p426 = scmp.eq.s32.totalorder %s31, 1
    %p427 = por %p425, %p426
    %p428 = scmp.ne.s32.totalorder %s419, %s420
    %p429 = scmp.eq.s32.totalorder %s31, 0
    %p430 = por %p428, %p429
    %p431 = scmp.ne.s32.totalorder %s419, %s420
    %p432 = scmp.eq.s32.totalorder %s32, 1
    %p433 = por %p431, %p432
    %p435 = scmp.ne.s32.totalorder %s420, %s434
    %p436 = scmp.eq.s32.totalorder %s32, 0
    %p437 = por %p435, %p436
    %s439 = sadd.s32 %s438, 1
    %p442 = scmp.eq.s32.totalorder %s26, 1
    %p443 = scmp.ne.s32.totalorder %s438, %s440
    %p444 = scmp.eq.s32.totalorder %s26, 0
    %p445 = por %p443, %p444
    %p446 = scmp.ne.s32.totalorder %s438, %s440
    %p447 = scmp.eq.s32.totalorder %s31, 1
    %p448 = por %p446, %p447
    %p449 = scmp.ne.s32.totalorder %s440, %s441
    %p450 = scmp.eq.s32.totalorder %s31, 0
    %p451 = por %p449, %p450
    %p452 = scmp.ne.s32.totalorder %s440, %s441
    %p453 = scmp.eq.s32.totalorder %s32, 1
    %p454 = por %p452, %p453
    %p456 = scmp.ne.s32.totalorder %s441, %s455
    %p457 = scmp.eq.s32.totalorder %s32, 0
    %p458 = por %p456, %p457
    %s459 = ssub.s32 %s26, %s33
    %p460 = scmp.eq.s32.totalorder %s459, 0
    %s462 = sadd.s32 %s461, 1
    %s463 = scalar_select %p460, %s461, %s462
    %p466 = pneg %p460
    %p467 = scmp.eq.s32.totalorder %s26, 1
    %p468 = por %p466, %p467
    %p469 = scmp.ne.s32.totalorder %s461, %s464
    %p470 = scmp.eq.s32.totalorder %s26, 0
    %p471 = por %p469, %p470
    %p472 = scmp.ne.s32.totalorder %s461, %s464
    %p473 = scmp.eq.s32.totalorder %s31, 1
    %p474 = por %p472, %p473
    %p475 = scmp.ne.s32.totalorder %s464, %s465
    %p476 = scmp.eq.s32.totalorder %s31, 0
    %p477 = por %p475, %p476
    %p478 = scmp.ne.s32.totalorder %s464, %s465
    %p479 = scmp.eq.s32.totalorder %s32, 1
    %p480 = por %p478, %p479
    %p482 = scmp.ne.s32.totalorder %s465, %s481
    %p483 = scmp.eq.s32.totalorder %s32, 0
    %p484 = por %p482, %p483
    %p485 = scmp.le.s32.totalorder 1, %s26
    %p486 = scmp.lt.s32.totalorder %s26, 3
    %p487 = pnand %p485, %p486
    %p488 = pneg %p487
    // Predicated region
    $region9: #{tpu_custom_call.1} parent=5 // pred_check
      _
    $region10: #{tpu_custom_call.1} parent=5 // pred_check_branch
      %490 = sbr.rel (%p487) target = $region12
    $region11: #{tpu_custom_call.1} parent=5 // pred_region
      %s491 = ssub.s32 %s26, 1
      // Predicated region
      $region13: #{tpu_custom_call.1} parent=11 // pred_check
        %p492 = pneg %p73
      $region14: #{tpu_custom_call.1} parent=11 // pred_check_branch
        %494 = sbr.rel (%p492) target = $region16
      $region15: #{tpu_custom_call.1} parent=11 // pred_region
        _
      $region16: #{tpu_custom_call.1} parent=11 // pred_fallthru
        _
      // Predicated region
      $region17: #{tpu_custom_call.1} parent=11 // pred_check
        %p495 = pneg %p94
      $region18: #{tpu_custom_call.1} parent=11 // pred_check_branch
        %497 = sbr.rel (%p495) target = $region20
      $region19: #{tpu_custom_call.1} parent=11 // pred_region
        _
      $region20: #{tpu_custom_call.1} parent=11 // pred_fallthru
        _
      // Predicated region
      $region21: #{tpu_custom_call.1} parent=11 // pred_check
        %p498 = pneg %p115
      $region22: #{tpu_custom_call.1} parent=11 // pred_check_branch
        %500 = sbr.rel (%p498) target = $region24
      $region23: #{tpu_custom_call.1} parent=11 // pred_region
        _
      $region24: #{tpu_custom_call.1} parent=11 // pred_fallthru
        _
      // Predicated region
      $region25: #{tpu_custom_call.1} parent=11 // pred_check
        %p501 = pneg %p136
      $region26: #{tpu_custom_call.1} parent=11 // pred_check_branch
        %503 = sbr.rel (%p501) target = $region28
      $region27: #{tpu_custom_call.1} parent=11 // pred_region
        _
      $region28: #{tpu_custom_call.1} parent=11 // pred_fallthru
        _
      // Predicated region
      $region29: #{tpu_custom_call.1} parent=11 // pred_check
        %p504 = pneg %p157
      $region30: #{tpu_custom_call.1} parent=11 // pred_check_branch
        %506 = sbr.rel (%p504) target = $region32
      $region31: #{tpu_custom_call.1} parent=11 // pred_region
        _
      $region32: #{tpu_custom_call.1} parent=11 // pred_fallthru
        _
      // Predicated region
      $region33: #{tpu_custom_call.1} parent=11 // pred_check
        %p507 = pneg %p178
      $region34: #{tpu_custom_call.1} parent=11 // pred_check_branch
        %509 = sbr.rel (%p507) target = $region36
      $region35: #{tpu_custom_call.1} parent=11 // pred_region
        _
      $region36: #{tpu_custom_call.1} parent=11 // pred_fallthru
        _
      // Predicated region
      $region37: #{tpu_custom_call.1} parent=11 // pred_check
        %p510 = pneg %p199
      $region38: #{tpu_custom_call.1} parent=11 // pred_check_branch
        %512 = sbr.rel (%p510) target = $region40
      $region39: #{tpu_custom_call.1} parent=11 // pred_region
        _
      $region40: #{tpu_custom_call.1} parent=11 // pred_fallthru
        _
      // Predicated region
      $region41: #{tpu_custom_call.1} parent=11 // pred_check
        %p513 = pneg %p220
      $region42: #{tpu_custom_call.1} parent=11 // pred_check_branch
        %515 = sbr.rel (%p513) target = $region44
      $region43: #{tpu_custom_call.1} parent=11 // pred_region
        _
      $region44: #{tpu_custom_call.1} parent=11 // pred_fallthru
        _
      // Predicated region
      $region45: #{tpu_custom_call.1} parent=11 // pred_check
        %p516 = pneg %p241
      $region46: #{tpu_custom_call.1} parent=11 // pred_check_branch
        %518 = sbr.rel (%p516) target = $region48
      $region47: #{tpu_custom_call.1} parent=11 // pred_region
        _
      $region48: #{tpu_custom_call.1} parent=11 // pred_fallthru
        _
      // Predicated region
      $region49: #{tpu_custom_call.1} parent=11 // pred_check
        %p519 = pneg %p262
      $region50: #{tpu_custom_call.1} parent=11 // pred_check_branch
        %521 = sbr.rel (%p519) target = $region52
      $region51: #{tpu_custom_call.1} parent=11 // pred_region
        _
      $region52: #{tpu_custom_call.1} parent=11 // pred_fallthru
        _
      // Predicated region
      $region53: #{tpu_custom_call.1} parent=11 // pred_check
        %p522 = pneg %p283
      $region54: #{tpu_custom_call.1} parent=11 // pred_check_branch
        %524 = sbr.rel (%p522) target = $region56
      $region55: #{tpu_custom_call.1} parent=11 // pred_region
        _
      $region56: #{tpu_custom_call.1} parent=11 // pred_fallthru
        _
      // Predicated region
      $region57: #{tpu_custom_call.1} parent=11 // pred_check
        %p525 = pneg %p304
      $region58: #{tpu_custom_call.1} parent=11 // pred_check_branch
        %527 = sbr.rel (%p525) target = $region60
      $region59: #{tpu_custom_call.1} parent=11 // pred_region
        _
      $region60: #{tpu_custom_call.1} parent=11 // pred_fallthru
        _
      // Predicated region
      $region61: #{tpu_custom_call.1} parent=11 // pred_check
        %p528 = pneg %p325
      $region62: #{tpu_custom_call.1} parent=11 // pred_check_branch
        %530 = sbr.rel (%p528) target = $region64
      $region63: #{tpu_custom_call.1} parent=11 // pred_region
        _
      $region64: #{tpu_custom_call.1} parent=11 // pred_fallthru
        _
      // Predicated region
      $region65: #{tpu_custom_call.1} parent=11 // pred_check
        %p531 = pneg %p346
      $region66: #{tpu_custom_call.1} parent=11 // pred_check_branch
        %533 = sbr.rel (%p531) target = $region68
      $region67: #{tpu_custom_call.1} parent=11 // pred_region
        _
      $region68: #{tpu_custom_call.1} parent=11 // pred_fallthru
        _
      // Predicated region
      $region69: #{tpu_custom_call.1} parent=11 // pred_check
        %p534 = pneg %p367
      $region70: #{tpu_custom_call.1} parent=11 // pred_check_branch
        %536 = sbr.rel (%p534) target = $region72
      $region71: #{tpu_custom_call.1} parent=11 // pred_region
        _
      $region72: #{tpu_custom_call.1} parent=11 // pred_fallthru
        _
      // Predicated region
      $region73: #{tpu_custom_call.1} parent=11 // pred_check
        %p537 = pneg %p388
      $region74: #{tpu_custom_call.1} parent=11 // pred_check_branch
        %539 = sbr.rel (%p537) target = $region76
      $region75: #{tpu_custom_call.1} parent=11 // pred_region
        _
      $region76: #{tpu_custom_call.1} parent=11 // pred_fallthru
        _
      // Predicated region
      $region77: #{tpu_custom_call.1} parent=11 // pred_check
        %p540 = pneg %p409
      $region78: #{tpu_custom_call.1} parent=11 // pred_check_branch
        %542 = sbr.rel (%p540) target = $region80
      $region79: #{tpu_custom_call.1} parent=11 // pred_region
        _
      $region80: #{tpu_custom_call.1} parent=11 // pred_fallthru
        _
      // Predicated region
      $region81: #{tpu_custom_call.1} parent=11 // pred_check
        %p543 = pneg %p430
      $region82: #{tpu_custom_call.1} parent=11 // pred_check_branch
        %545 = sbr.rel (%p543) target = $region84
      $region83: #{tpu_custom_call.1} parent=11 // pred_region
        _
      $region84: #{tpu_custom_call.1} parent=11 // pred_fallthru
        _
      // Predicated region
      $region85: #{tpu_custom_call.1} parent=11 // pred_check
        %p546 = pneg %p451
      $region86: #{tpu_custom_call.1} parent=11 // pred_check_branch
        %548 = sbr.rel (%p546) target = $region88
      $region87: #{tpu_custom_call.1} parent=11 // pred_region
        _
      $region88: #{tpu_custom_call.1} parent=11 // pred_fallthru
        _
    $region12: #{tpu_custom_call.1} parent=5 // pred_fallthru
      _
    %p549 = scmp.lt.s32.totalorder %s26, 2
    // Predicated region
    $region89: #{tpu_custom_call.1} parent=5 // pred_check
      %p550 = pneg %p549
    $region90: #{tpu_custom_call.1} parent=5 // pred_check_branch
      %552 = sbr.rel (%p550) target = $region92
    $region91: #{tpu_custom_call.1} parent=5 // pred_region
      // Predicated region
      $region93: #{tpu_custom_call.1} parent=91 // pred_check
        %p553 = pneg %p46
      $region94: #{tpu_custom_call.1} parent=91 // pred_check_branch
        %555 = sbr.rel (%p553) target = $region96
      $region95: #{tpu_custom_call.1} parent=91 // pred_region
        %p556 = scmp.lt.s32.totalorder %s26, 1
        %s557 = scalar_select %p556, %s26, 1
        %s558 = smul.addr %s557, 8
        %s559 = smul.addr %s558, 8
        %s560 = scalar_lea.vmem %s0, %s559
      $region96: #{tpu_custom_call.1} parent=91 // pred_fallthru
        _
    $region92: #{tpu_custom_call.1} parent=5 // pred_fallthru
      _
    %p561 = scmp.le.s32.totalorder 1, %s26
    %p562 = scmp.lt.s32.totalorder %s26, 3
    %p563 = pnand %p561, %p562
    %p564 = pneg %p563
    // Predicated region
    $region97: #{tpu_custom_call.1} parent=5 // pred_check
      _
    $region98: #{tpu_custom_call.1} parent=5 // pred_check_branch
      %566 = sbr.rel (%p563) target = $region100
    $region99: #{tpu_custom_call.1} parent=5 // pred_region
      %s567 = ssub.s32 %s26, 1
      %p568 = scmp.lt.s32.totalorder %s31, 1
      %s569 = scalar_select %p568, %s31, 1
      %s570 = smul.addr %s569, 8
      %s571 = smul.addr %s570, 8
      %s572 = scalar_lea.vmem %s0, %s571
      %p573 = pneg %p52
      %p574 = pneg %p49
      %p575 = pneg %p73
      %p576 = pneg %p70
      %p577 = pneg %p94
      %p578 = pneg %p91
      %p579 = pneg %p115
      %p580 = pneg %p112
      %p581 = pneg %p136
      %p582 = pneg %p133
      %p583 = pneg %p157
      %p584 = pneg %p154
      %p585 = pneg %p178
      %p586 = pneg %p175
      %p587 = pneg %p199
      %p588 = pneg %p196
      %p589 = pneg %p220
      %p590 = pneg %p217
      %p591 = pneg %p241
      %p592 = pneg %p238
      %p593 = pneg %p262
      %p594 = pneg %p259
      %p595 = pneg %p283
      %p596 = pneg %p280
      %p597 = pneg %p304
      %p598 = pneg %p301
      %p599 = pneg %p325
      %p600 = pneg %p322
      %p601 = pneg %p346
      %p602 = pneg %p343
      %p603 = pneg %p367
      %p604 = pneg %p364
      %p605 = pneg %p388
      %p606 = pneg %p385
      %p607 = pneg %p409
      %p608 = pneg %p406
      %p609 = pneg %p430
      %p610 = pneg %p427
      %p611 = pneg %p451
      %p612 = pneg %p448
      %p613 = pneg %p477
      %p614 = pneg %p474
      %p615 = scmp.lt.s32.totalorder %s31, 1
      %s616 = scalar_select %p615, %s31, 1
      %s617 = smul.addr %s616, 8
      %s618 = smul.addr %s617, 8
      %s619 = scalar_lea.vmem %s20, %s618
      %p620 = scmp.lt.s32.totalorder %s31, 1
      %s621 = scalar_select %p620, %s31, 1
      %s622 = smul.addr %s621, 8
      %s623 = smul.addr %s622, 8
      %s624 = scalar_lea.vmem %s0, %s623
      %p625 = scmp.lt.s32.totalorder %s31, 1
      %s626 = scalar_select %p625, %s31, 1
      %s627 = smul.addr %s626, 8
      %s628 = smul.addr %s627, 8
      %s629 = scalar_lea.vmem %s20, %s628
      %v630 = vld [vmem:[%s624] sm:$0xff]
      %v631 = vld [vmem:[%s624 + $0x8] sm:$0xff]
      %v632 = vld [vmem:[%s624 + $0x10] sm:$0xff]
      %v633 = vld [vmem:[%s624 + $0x18] sm:$0xff]
      %v634 = vld [vmem:[%s624 + $0x20] sm:$0xff]
      %v635 = vld [vmem:[%s624 + $0x28] sm:$0xff]
      %v636 = vld [vmem:[%s624 + $0x30] sm:$0xff]
      %v637 = vld [vmem:[%s624 + $0x38] sm:$0xff]
      %v638 = vld [vmem:[%s2] sm:$0x1]
      %v639 = vld [vmem:[%s3] sm:$0x1]
      %vm640 = vcmask 261120
      %v641 = vsel %vm640, %v630, 0.0
      %642 = vadd.xlane.f32.xlu0 %v641
      %v643 = vpop.xlane.xlu0 %642
      %v644 = vsel %vm640, %v631, 0.0
      %645 = vadd.xlane.f32.xlu0 %v644
      %v646 = vpop.xlane.xlu0 %645
      %v647 = vsel %vm640, %v632, 0.0
      %648 = vadd.xlane.f32.xlu0 %v647
      %v649 = vpop.xlane.xlu0 %648
      %v650 = vsel %vm640, %v633, 0.0
      %651 = vadd.xlane.f32.xlu0 %v650
      %v652 = vpop.xlane.xlu0 %651
      %v653 = vsel %vm640, %v634, 0.0
      %654 = vadd.xlane.f32.xlu0 %v653
      %v655 = vpop.xlane.xlu0 %654
      %v656 = vsel %vm640, %v635, 0.0
      %657 = vadd.xlane.f32.xlu0 %v656
      %v658 = vpop.xlane.xlu0 %657
      %v659 = vsel %vm640, %v636, 0.0
      %660 = vadd.xlane.f32.xlu0 %v659
      %v661 = vpop.xlane.xlu0 %660
      %v662 = vsel %vm640, %v637, 0.0
      %663 = vadd.xlane.f32.xlu0 %v662
      %v664 = vpop.xlane.xlu0 %663
      %v665 = vrcp.pop 32.0
      %v666 = vmul.f32 %v643, %v665
      %v667 = vmul.f32 %v646, %v665
      %v668 = vmul.f32 %v649, %v665
      %v669 = vmul.f32 %v652, %v665
      %v670 = vmul.f32 %v655, %v665
      %v671 = vmul.f32 %v658, %v665
      %v672 = vmul.f32 %v661, %v665
      %v673 = vmul.f32 %v664, %v665
      %v674 = vsub.f32 %v630, %v666
      %v675 = vsub.f32 %v631, %v667
      %v676 = vsub.f32 %v632, %v668
      %v677 = vsub.f32 %v633, %v669
      %v678 = vsub.f32 %v634, %v670
      %v679 = vsub.f32 %v635, %v671
      %v680 = vsub.f32 %v636, %v672
      %v681 = vsub.f32 %v637, %v673
      %v682 = vmul.f32 %v674, %v674
      %v683 = vmul.f32 %v675, %v675
      %v684 = vmul.f32 %v676, %v676
      %v685 = vmul.f32 %v677, %v677
      %v686 = vmul.f32 %v678, %v678
      %v687 = vmul.f32 %v679, %v679
      %v688 = vmul.f32 %v680, %v680
      %v689 = vmul.f32 %v681, %v681
      %v690 = vsel %vm640, %v682, 0.0
      %691 = vadd.xlane.f32.xlu0 %v690
      %v692 = vpop.xlane.xlu0 %691
      %v693 = vsel %vm640, %v683, 0.0
      %694 = vadd.xlane.f32.xlu0 %v693
      %v695 = vpop.xlane.xlu0 %694
      %v696 = vsel %vm640, %v684, 0.0
      %697 = vadd.xlane.f32.xlu0 %v696
      %v698 = vpop.xlane.xlu0 %697
      %v699 = vsel %vm640, %v685, 0.0
      %700 = vadd.xlane.f32.xlu0 %v699
      %v701 = vpop.xlane.xlu0 %700
      %v702 = vsel %vm640, %v686, 0.0
      %703 = vadd.xlane.f32.xlu0 %v702
      %v704 = vpop.xlane.xlu0 %703
      %v705 = vsel %vm640, %v687, 0.0
      %706 = vadd.xlane.f32.xlu0 %v705
      %v707 = vpop.xlane.xlu0 %706
      %v708 = vsel %vm640, %v688, 0.0
      %709 = vadd.xlane.f32.xlu0 %v708
      %v710 = vpop.xlane.xlu0 %709
      %v711 = vsel %vm640, %v689, 0.0
      %712 = vadd.xlane.f32.xlu0 %v711
      %v713 = vpop.xlane.xlu0 %712
      %v714 = vmul.f32 %v692, %v665
      %v715 = vmul.f32 %v695, %v665
      %v716 = vmul.f32 %v698, %v665
      %v717 = vmul.f32 %v701, %v665
      %v718 = vmul.f32 %v704, %v665
      %v719 = vmul.f32 %v707, %v665
      %v720 = vmul.f32 %v710, %v665
      %v721 = vmul.f32 %v713, %v665
      %v722 = vadd.f32 %v714, 1e-05
      %v723 = vadd.f32 %v715, 1e-05
      %v724 = vadd.f32 %v716, 1e-05
      %v725 = vadd.f32 %v717, 1e-05
      %v726 = vadd.f32 %v718, 1e-05
      %v727 = vadd.f32 %v719, 1e-05
      %v728 = vadd.f32 %v720, 1e-05
      %v729 = vadd.f32 %v721, 1e-05
      %v730 = vrsqrt.pop %v722
      %v731 = vrsqrt.pop %v723
      %v732 = vrsqrt.pop %v724
      %v733 = vrsqrt.pop %v725
      %v734 = vrsqrt.pop %v726
      %v735 = vrsqrt.pop %v727
      %v736 = vrsqrt.pop %v728
      %v737 = vrsqrt.pop %v729
      %v738 = vmul.f32 %v674, %v730
      %v739 = vmul.f32 %v675, %v731
      %v740 = vmul.f32 %v676, %v732
      %v741 = vmul.f32 %v677, %v733
      %v742 = vmul.f32 %v678, %v734
      %v743 = vmul.f32 %v679, %v735
      %v744 = vmul.f32 %v680, %v736
      %v745 = vmul.f32 %v681, %v737
      %v747 = vlaneseq
      %v748 = vshrl.u32 %v747, 7
      %v749 = vsub.s32 0, %v748
      %v750 = vrot.slane %v638, %v749
      %v752 = vmul.f32 %v738, %v750
      %v753 = vmul.f32 %v739, %v750
      %v754 = vmul.f32 %v740, %v750
      %v755 = vmul.f32 %v741, %v750
      %v756 = vmul.f32 %v742, %v750
      %v757 = vmul.f32 %v743, %v750
      %v758 = vmul.f32 %v744, %v750
      %v759 = vmul.f32 %v745, %v750
      %v761 = vlaneseq
      %v762 = vshrl.u32 %v761, 7
      %v763 = vsub.s32 0, %v762
      %v764 = vrot.slane %v639, %v763
      %v766 = vadd.f32 %v752, %v764
      %v767 = vadd.f32 %v753, %v764
      %v768 = vadd.f32 %v754, %v764
      %v769 = vadd.f32 %v755, %v764
      %v770 = vadd.f32 %v756, %v764
      %v771 = vadd.f32 %v757, %v764
      %v772 = vadd.f32 %v758, %v764
      %v773 = vadd.f32 %v759, %v764
      %v774 = vld [vmem:[%s4] sm:$0xff]
      %v775 = vld [vmem:[%s4 + $0x8] sm:$0xff]
      %v776 = vld [vmem:[%s4 + $0x10] sm:$0xff]
      %v777 = vld [vmem:[%s4 + $0x18] sm:$0xff]
      %v778 = vld [vmem:[%s5] sm:$0x1]
      %v780 = vlaneseq
      %v781 = vshrl.u32 %v780, 7
      %v782 = vsub.s32 0, %v781
      %v783 = vrot.slane %v778, %v782
      %v786 = vsel %vm640, %v766, 0
      %v789 = vsel %vm640, %v767, 0
      %v792 = vsel %vm640, %v768, 0
      %v795 = vsel %vm640, %v769, 0
      %v798 = vsel %vm640, %v770, 0
      %v801 = vsel %vm640, %v771, 0
      %v804 = vsel %vm640, %v772, 0
      %v807 = vsel %vm640, %v773, 0
      %809 = vmatprep.subr.mxu0 0.0
      %810 = vmatpush1.msra.mxu0 %v774
      %811 = vmatprep.subr.mxu0 0.0
      %812 = vmatpush1.msra.mxu0 %v775
      %813 = vmatprep.subr.mxu0 0.0
      %814 = vmatpush1.msra.mxu0 %v776
      %815 = vmatprep.subr.mxu0 0.0
      %816 = vmatpush1.msra.mxu0 %v777
      %817 = vmatprep.subr.mxu0 0.0
      %818 = vmatpush1.msra.mxu0 0.0
      %819 = vmatprep.subr.mxu0 0.0
      %820 = vmatpush1.msra.mxu0 0.0
      %821 = vmatprep.subr.mxu0 0.0
      %822 = vmatpush1.msra.mxu0 0.0
      %823 = vmatprep.subr.mxu0 0.0
      %824 = vmatpush1.msra.mxu0 0.0
      %825 = vmatprep.subr.mxu0 0.0
      %826 = vmatpush1.msra.mxu0 0.0
      %827 = vmatprep.subr.mxu0 0.0
      %828 = vmatpush1.msra.mxu0 0.0
      %829 = vmatprep.subr.mxu0 0.0
      %830 = vmatpush1.msra.mxu0 0.0
      %831 = vmatprep.subr.mxu0 0.0
      %832 = vmatpush1.msra.mxu0 0.0
      %833 = vmatprep.subr.mxu0 0.0
      %834 = vmatpush1.msra.mxu0 0.0
      %835 = vmatprep.subr.mxu0 0.0
      %836 = vmatpush1.msra.mxu0 0.0
      %837 = vmatprep.subr.mxu0 0.0
      %838 = vmatpush1.msra.mxu0 0.0
      %839 = vmatprep.subr.mxu0 0.0
      %840 = vmatpush1.msra.mxu0 0.0
      %841 = vmatprep.subr.mxu0 0.0
      %842 = vmatpush1.msra.mxu0 0.0
      %843 = vmatprep.subr.mxu0 0.0
      %844 = vmatpush1.msra.mxu0 0.0
      %845 = vmatprep.subr.mxu0 0.0
      %846 = vmatpush1.msra.mxu0 0.0
      %847 = vmatprep.subr.mxu0 0.0
      %848 = vmatpush1.msra.mxu0 0.0
      %849 = vmatprep.subr.mxu0 0.0
      %850 = vmatpush1.msra.mxu0 0.0
      %851 = vmatprep.subr.mxu0 0.0
      %852 = vmatpush1.msra.mxu0 0.0
      %853 = vmatprep.subr.mxu0 0.0
      %854 = vmatpush1.msra.mxu0 0.0
      %855 = vmatprep.subr.mxu0 0.0
      %856 = vmatpush1.msra.mxu0 0.0
      %857 = vmatprep.subr.mxu0 0.0
      %858 = vmatpush1.msra.mxu0 0.0
      %859 = vmatprep.subr.mxu0 0.0
      %860 = vmatpush1.msra.mxu0 0.0
      %861 = vmatprep.subr.mxu0 0.0
      %862 = vmatpush1.msra.mxu0 0.0
      %863 = vmatprep.subr.mxu0 0.0
      %864 = vmatpush1.msra.mxu0 0.0
      %865 = vmatprep.subr.mxu0 0.0
      %866 = vmatpush1.msra.mxu0 0.0
      %867 = vmatprep.subr.mxu0 0.0
      %868 = vmatpush1.msra.mxu0 0.0
      %869 = vmatprep.subr.mxu0 0.0
      %870 = vmatpush1.msra.mxu0 0.0
      %871 = vmatprep.subr.mxu0 0.0
      %872 = vmatpush1.msra.mxu0 0.0
      %873 = vmatprep.mubr.f32.mxu0 0.0
      %874 = vmatmul.mubr.f32.gmra.mrb[0].mxu0 %v786
      %v875 = vpop.f32.mrb[0].mxu0
      %v876 = vadd.f32 %v783, %v875
      %v877 = vpop.f32.mrb[0].mxu0
      %878 = vmatprep.mubr.f32.mxu0 0.0
      %879 = vmatmul.mubr.f32.gmra.mrb[0].mxu0 %v789
      %v880 = vpop.f32.mrb[0].mxu0
      %v881 = vadd.f32 %v783, %v880
      %v882 = vpop.f32.mrb[0].mxu0
      %883 = vmatprep.mubr.f32.mxu0 0.0
      %884 = vmatmul.mubr.f32.gmra.mrb[0].mxu0 %v792
      %v885 = vpop.f32.mrb[0].mxu0
      %v886 = vadd.f32 %v783, %v885
      %v887 = vpop.f32.mrb[0].mxu0
      %888 = vmatprep.mubr.f32.mxu0 0.0
      %889 = vmatmul.mubr.f32.gmra.mrb[0].mxu0 %v795
      %v890 = vpop.f32.mrb[0].mxu0
      %v891 = vadd.f32 %v783, %v890
      %v892 = vpop.f32.mrb[0].mxu0
      %893 = vmatprep.mubr.f32.mxu0 0.0
      %894 = vmatmul.mubr.f32.gmra.mrb[0].mxu0 %v798
      %v895 = vpop.f32.mrb[0].mxu0
      %v896 = vadd.f32 %v783, %v895
      %v897 = vpop.f32.mrb[0].mxu0
      %898 = vmatprep.mubr.f32.mxu0 0.0
      %899 = vmatmul.mubr.f32.gmra.mrb[0].mxu0 %v801
      %v900 = vpop.f32.mrb[0].mxu0
      %v901 = vadd.f32 %v783, %v900
      %v902 = vpop.f32.mrb[0].mxu0
      %903 = vmatprep.mubr.f32.mxu0 0.0
      %904 = vmatmul.mubr.f32.gmra.mrb[0].mxu0 %v804
      %v905 = vpop.f32.mrb[0].mxu0
      %v906 = vadd.f32 %v783, %v905
      %v907 = vpop.f32.mrb[0].mxu0
      %908 = vmatprep.mubr.f32.mxu0 0.0
      %909 = vmatmul.mubr.f32.gmra.mrb[0].mxu0 %v807
      %v910 = vpop.f32.mrb[0].mxu0
      %v911 = vadd.f32 %v783, %v910
      %v912 = vpop.f32.mrb[0].mxu0
      %913 = vdwg.mxu0
      %v914 = vld [vmem:[%s1] sm:$0xff]
      %v915 = vld [vmem:[%s1 + $0x8] sm:$0xff]
      %vm916 = vcmask 523264
      %v918 = vsel %vm916, %v914, 0
      %v921 = vsel %vm916, %v915, 0
      %923 = vmatprep.subr.mxu0 0.0
      %924 = vmatpush1.msra.mxu0 %v766
      %925 = vmatprep.subr.mxu0 0.0
      %926 = vmatpush1.msra.mxu0 %v767
      %927 = vmatprep.subr.mxu0 0.0
      %928 = vmatpush1.msra.mxu0 %v768
      %929 = vmatprep.subr.mxu0 0.0
      %930 = vmatpush1.msra.mxu0 %v769
      %931 = vmatprep.subr.mxu0 0.0
      %932 = vmatpush1.msra.mxu0 %v770
      %933 = vmatprep.subr.mxu0 0.0
      %934 = vmatpush1.msra.mxu0 %v771
      %935 = vmatprep.subr.mxu0 0.0
      %936 = vmatpush1.msra.mxu0 %v772
      %937 = vmatprep.subr.mxu0 0.0
      %938 = vmatpush1.msra.mxu0 %v773
      %939 = vmatprep.subr.mxu0 0.0
      %940 = vmatpush1.msra.mxu0 0.0
      %941 = vmatprep.subr.mxu0 0.0
      %942 = vmatpush1.msra.mxu0 0.0
      %943 = vmatprep.subr.mxu0 0.0
      %944 = vmatpush1.msra.mxu0 0.0
      %945 = vmatprep.subr.mxu0 0.0
      %946 = vmatpush1.msra.mxu0 0.0
      %947 = vmatprep.subr.mxu0 0.0
      %948 = vmatpush1.msra.mxu0 0.0
      %949 = vmatprep.subr.mxu0 0.0
      %950 = vmatpush1.msra.mxu0 0.0
      %951 = vmatprep.subr.mxu0 0.0
      %952 = vmatpush1.msra.mxu0 0.0
      %953 = vmatprep.subr.mxu0 0.0
      %954 = vmatpush1.msra.mxu0 0.0
      %955 = vmatprep.subr.mxu0 0.0
      %956 = vmatpush1.msra.mxu0 0.0
      %957 = vmatprep.subr.mxu0 0.0
      %958 = vmatpush1.msra.mxu0 0.0
      %959 = vmatprep.subr.mxu0 0.0
      %960 = vmatpush1.msra.mxu0 0.0
      %961 = vmatprep.subr.mxu0 0.0
      %962 = vmatpush1.msra.mxu0 0.0
      %963 = vmatprep.subr.mxu0 0.0
      %964 = vmatpush1.msra.mxu0 0.0
      %965 = vmatprep.subr.mxu0 0.0
      %966 = vmatpush1.msra.mxu0 0.0
      %967 = vmatprep.subr.mxu0 0.0
      %968 = vmatpush1.msra.mxu0 0.0
      %969 = vmatprep.subr.mxu0 0.0
      %970 = vmatpush1.msra.mxu0 0.0
      %971 = vmatprep.subr.mxu0 0.0
      %972 = vmatpush1.msra.mxu0 0.0
      %973 = vmatprep.subr.mxu0 0.0
      %974 = vmatpush1.msra.mxu0 0.0
      %975 = vmatprep.subr.mxu0 0.0
      %976 = vmatpush1.msra.mxu0 0.0
      %977 = vmatprep.subr.mxu0 0.0
      %978 = vmatpush1.msra.mxu0 0.0
      %979 = vmatprep.subr.mxu0 0.0
      %980 = vmatpush1.msra.mxu0 0.0
      %981 = vmatprep.subr.mxu0 0.0
      %982 = vmatpush1.msra.mxu0 0.0
      %983 = vmatprep.subr.mxu0 0.0
      %984 = vmatpush1.msra.mxu0 0.0
      %985 = vmatprep.subr.mxu0 0.0
      %986 = vmatpush1.msra.mxu0 0.0
      %987 = vmatprep.mubr.f32.mxu0 0.0
      %988 = vmatmul.mubr.f32.gmra.mrb[0].mxu0 %v918
      %v989 = vpop.f32.mrb[0].mxu0
      %v990 = vadd.f32 0.0, %v989
      %v991 = vpop.f32.mrb[0].mxu0
      %992 = vmatprep.mubr.f32.mxu0 0.0
      %993 = vmatmul.mubr.f32.gmra.mrb[0].mxu0 %v921
      %v994 = vpop.f32.mrb[0].mxu0
      %v995 = vadd.f32 0.0, %v994
      %v996 = vpop.f32.mrb[0].mxu0
      %997 = vdwg.mxu0
      %v998 = vld [vmem:[%s6] sm:$0xff]
      %v999 = vld [vmem:[%s6 + $0x8] sm:$0xff]
      %v1000 = vld [vmem:[%s6 + $0x10] sm:$0xff]
      %v1001 = vld [vmem:[%s6 + $0x18] sm:$0xff]
      %v1002 = vld [vmem:[%s7] sm:$0x1]
      %v1004 = vlaneseq
      %v1005 = vshrl.u32 %v1004, 7
      %v1006 = vsub.s32 0, %v1005
      %v1007 = vrot.slane %v1002, %v1006
      %v1010 = vsel %vm640, %v990, 0
      %v1013 = vsel %vm640, %v995, 0
      %1015 = vmatprep.subr.mxu0 0.0
      %1016 = vmatpush1.msra.mxu0 %v998
      %1017 = vmatprep.subr.mxu0 0.0
      %1018 = vmatpush1.msra.mxu0 %v999
      %1019 = vmatprep.subr.mxu0 0.0
      %1020 = vmatpush1.msra.mxu0 %v1000
      %1021 = vmatprep.subr.mxu0 0.0
      %1022 = vmatpush1.msra.mxu0 %v1001
      %1023 = vmatprep.subr.mxu0 0.0
      %1024 = vmatpush1.msra.mxu0 0.0
      %1025 = vmatprep.subr.mxu0 0.0
      %1026 = vmatpush1.msra.mxu0 0.0
      %1027 = vmatprep.subr.mxu0 0.0
      %1028 = vmatpush1.msra.mxu0 0.0
      %1029 = vmatprep.subr.mxu0 0.0
      %1030 = vmatpush1.msra.mxu0 0.0
      %1031 = vmatprep.subr.mxu0 0.0
      %1032 = vmatpush1.msra.mxu0 0.0
      %1033 = vmatprep.subr.mxu0 0.0
      %1034 = vmatpush1.msra.mxu0 0.0
      %1035 = vmatprep.subr.mxu0 0.0
      %1036 = vmatpush1.msra.mxu0 0.0
      %1037 = vmatprep.subr.mxu0 0.0
      %1038 = vmatpush1.msra.mxu0 0.0
      %1039 = vmatprep.subr.mxu0 0.0
      %1040 = vmatpush1.msra.mxu0 0.0
      %1041 = vmatprep.subr.mxu0 0.0
      %1042 = vmatpush1.msra.mxu0 0.0
      %1043 = vmatprep.subr.mxu0 0.0
      %1044 = vmatpush1.msra.mxu0 0.0
      %1045 = vmatprep.subr.mxu0 0.0
      %1046 = vmatpush1.msra.mxu0 0.0
      %1047 = vmatprep.subr.mxu0 0.0
      %1048 = vmatpush1.msra.mxu0 0.0
      %1049 = vmatprep.subr.mxu0 0.0
      %1050 = vmatpush1.msra.mxu0 0.0
      %1051 = vmatprep.subr.mxu0 0.0
      %1052 = vmatpush1.msra.mxu0 0.0
      %1053 = vmatprep.subr.mxu0 0.0
      %1054 = vmatpush1.msra.mxu0 0.0
      %1055 = vmatprep.subr.mxu0 0.0
      %1056 = vmatpush1.msra.mxu0 0.0
      %1057 = vmatprep.subr.mxu0 0.0
      %1058 = vmatpush1.msra.mxu0 0.0
      %1059 = vmatprep.subr.mxu0 0.0
      %1060 = vmatpush1.msra.mxu0 0.0
      %1061 = vmatprep.subr.mxu0 0.0
      %1062 = vmatpush1.msra.mxu0 0.0
      %1063 = vmatprep.subr.mxu0 0.0
      %1064 = vmatpush1.msra.mxu0 0.0
      %1065 = vmatprep.subr.mxu0 0.0
      %1066 = vmatpush1.msra.mxu0 0.0
      %1067 = vmatprep.subr.mxu0 0.0
      %1068 = vmatpush1.msra.mxu0 0.0
      %1069 = vmatprep.subr.mxu0 0.0
      %1070 = vmatpush1.msra.mxu0 0.0
      %1071 = vmatprep.subr.mxu0 0.0
      %1072 = vmatpush1.msra.mxu0 0.0
      %1073 = vmatprep.subr.mxu0 0.0
      %1074 = vmatpush1.msra.mxu0 0.0
      %1075 = vmatprep.subr.mxu0 0.0
      %1076 = vmatpush1.msra.mxu0 0.0
      %1077 = vmatprep.subr.mxu0 0.0
      %1078 = vmatpush1.msra.mxu0 0.0
      %1079 = vmatprep.mubr.f32.mxu0 0.0
      %1080 = vmatmul.mubr.f32.gmra.mrb[0].mxu0 %v1010
      %v1081 = vpop.f32.mrb[0].mxu0
      %v1082 = vadd.f32 %v1007, %v1081
      %v1083 = vpop.f32.mrb[0].mxu0
      %1084 = vmatprep.mubr.f32.mxu0 0.0
      %1085 = vmatmul.mubr.f32.gmra.mrb[0].mxu0 %v1013
      %v1086 = vpop.f32.mrb[0].mxu0
      %v1087 = vadd.f32 %v1007, %v1086
      %v1088 = vpop.f32.mrb[0].mxu0
      %1089 = vdwg.mxu0
      %v1090 = vld [vmem:[%s8] sm:$0x1]
      %v1091 = vld [vmem:[%s9] sm:$0x1]
      %v1092 = vsel %vm640, %v1082, 0.0
      %1093 = vadd.xlane.f32.xlu0 %v1092
      %v1094 = vpop.xlane.xlu0 %1093
      %v1095 = vsel %vm640, %v1087, 0.0
      %1096 = vadd.xlane.f32.xlu0 %v1095
      %v1097 = vpop.xlane.xlu0 %1096
      %v1098 = vmul.f32 %v1094, %v665
      %v1099 = vmul.f32 %v1097, %v665
      %v1100 = vsub.f32 %v1082, %v1098
      %v1101 = vsub.f32 %v1087, %v1099
      %v1102 = vmul.f32 %v1100, %v1100
      %v1103 = vmul.f32 %v1101, %v1101
      %v1104 = vsel %vm640, %v1102, 0.0
      %1105 = vadd.xlane.f32.xlu0 %v1104
      %v1106 = vpop.xlane.xlu0 %1105
      %v1107 = vsel %vm640, %v1103, 0.0
      %1108 = vadd.xlane.f32.xlu0 %v1107
      %v1109 = vpop.xlane.xlu0 %1108
      %v1110 = vmul.f32 %v1106, %v665
      %v1111 = vmul.f32 %v1109, %v665
      %v1112 = vadd.f32 %v1110, 1e-05
      %v1113 = vadd.f32 %v1111, 1e-05
      %v1114 = vrsqrt.pop %v1112
      %v1115 = vrsqrt.pop %v1113
      %v1116 = vmul.f32 %v1100, %v1114
      %v1117 = vmul.f32 %v1101, %v1115
      %v1119 = vlaneseq
      %v1120 = vshrl.u32 %v1119, 7
      %v1121 = vsub.s32 0, %v1120
      %v1122 = vrot.slane %v1090, %v1121
      %v1124 = vmul.f32 %v1116, %v1122
      %v1125 = vmul.f32 %v1117, %v1122
      %v1127 = vlaneseq
      %v1128 = vshrl.u32 %v1127, 7
      %v1129 = vsub.s32 0, %v1128
      %v1130 = vrot.slane %v1091, %v1129
      %v1132 = vadd.f32 %v1124, %v1130
      %v1133 = vadd.f32 %v1125, %v1130
      %v1134 = vld [vmem:[%s10] sm:$0xff]
      %v1135 = vld [vmem:[%s10 + $0x8] sm:$0xff]
      %v1136 = vld [vmem:[%s10 + $0x10] sm:$0xff]
      %v1137 = vld [vmem:[%s10 + $0x18] sm:$0xff]
      %v1138 = vld [vmem:[%s11] sm:$0x1]
      %v1140 = vlaneseq
      %v1141 = vshrl.u32 %v1140, 7
      %v1142 = vsub.s32 0, %v1141
      %v1143 = vrot.slane %v1138, %v1142
      %v1146 = vsel %vm640, %v1132, 0
      %v1149 = vsel %vm640, %v1133, 0
      %1151 = vmatprep.subr.mxu0 0.0
      %1152 = vmatpush1.msra.mxu0 %v1134
      %1153 = vmatprep.subr.mxu0 0.0
      %1154 = vmatpush1.msra.mxu0 %v1135
      %1155 = vmatprep.subr.mxu0 0.0
      %1156 = vmatpush1.msra.mxu0 %v1136
      %1157 = vmatprep.subr.mxu0 0.0
      %1158 = vmatpush1.msra.mxu0 %v1137
      %1159 = vmatprep.subr.mxu0 0.0
      %1160 = vmatpush1.msra.mxu0 0.0
      %1161 = vmatprep.subr.mxu0 0.0
      %1162 = vmatpush1.msra.mxu0 0.0
      %1163 = vmatprep.subr.mxu0 0.0
      %1164 = vmatpush1.msra.mxu0 0.0
      %1165 = vmatprep.subr.mxu0 0.0
      %1166 = vmatpush1.msra.mxu0 0.0
      %1167 = vmatprep.subr.mxu0 0.0
      %1168 = vmatpush1.msra.mxu0 0.0
      %1169 = vmatprep.subr.mxu0 0.0
      %1170 = vmatpush1.msra.mxu0 0.0
      %1171 = vmatprep.subr.mxu0 0.0
      %1172 = vmatpush1.msra.mxu0 0.0
      %1173 = vmatprep.subr.mxu0 0.0
      %1174 = vmatpush1.msra.mxu0 0.0
      %1175 = vmatprep.subr.mxu0 0.0
      %1176 = vmatpush1.msra.mxu0 0.0
      %1177 = vmatprep.subr.mxu0 0.0
      %1178 = vmatpush1.msra.mxu0 0.0
      %1179 = vmatprep.subr.mxu0 0.0
      %1180 = vmatpush1.msra.mxu0 0.0
      %1181 = vmatprep.subr.mxu0 0.0
      %1182 = vmatpush1.msra.mxu0 0.0
      %1183 = vmatprep.subr.mxu0 0.0
      %1184 = vmatpush1.msra.mxu0 0.0
      %1185 = vmatprep.subr.mxu0 0.0
      %1186 = vmatpush1.msra.mxu0 0.0
      %1187 = vmatprep.subr.mxu0 0.0
      %1188 = vmatpush1.msra.mxu0 0.0
      %1189 = vmatprep.subr.mxu0 0.0
      %1190 = vmatpush1.msra.mxu0 0.0
      %1191 = vmatprep.subr.mxu0 0.0
      %1192 = vmatpush1.msra.mxu0 0.0
      %1193 = vmatprep.subr.mxu0 0.0
      %1194 = vmatpush1.msra.mxu0 0.0
      %1195 = vmatprep.subr.mxu0 0.0
      %1196 = vmatpush1.msra.mxu0 0.0
      %1197 = vmatprep.subr.mxu0 0.0
      %1198 = vmatpush1.msra.mxu0 0.0
      %1199 = vmatprep.subr.mxu0 0.0
      %1200 = vmatpush1.msra.mxu0 0.0
      %1201 = vmatprep.subr.mxu0 0.0
      %1202 = vmatpush1.msra.mxu0 0.0
      %1203 = vmatprep.subr.mxu0 0.0
      %1204 = vmatpush1.msra.mxu0 0.0
      %1205 = vmatprep.subr.mxu0 0.0
      %1206 = vmatpush1.msra.mxu0 0.0
      %1207 = vmatprep.subr.mxu0 0.0
      %1208 = vmatpush1.msra.mxu0 0.0
      %1209 = vmatprep.subr.mxu0 0.0
      %1210 = vmatpush1.msra.mxu0 0.0
      %1211 = vmatprep.subr.mxu0 0.0
      %1212 = vmatpush1.msra.mxu0 0.0
      %1213 = vmatprep.subr.mxu0 0.0
      %1214 = vmatpush1.msra.mxu0 0.0
      %1215 = vmatprep.mubr.f32.mxu0 0.0
      %1216 = vmatmul.mubr.f32.gmra.mrb[0].mxu0 %v1146
      %v1217 = vpop.f32.mrb[0].mxu0
      %v1218 = vadd.f32 %v1143, %v1217
      %v1219 = vpop.f32.mrb[0].mxu0
      %1220 = vmatprep.mubr.f32.mxu0 0.0
      %1221 = vmatmul.mubr.f32.gmra.mrb[0].mxu0 %v1149
      %v1222 = vpop.f32.mrb[0].mxu0
      %v1223 = vadd.f32 %v1143, %v1222
      %v1224 = vpop.f32.mrb[0].mxu0
      %1225 = vdwg.mxu0
      %vm1226 = vcmask 64512
      %v1228 = vsel %vm1226, %v876, 0
      %v1231 = vsel %vm1226, %v881, 0
      %v1234 = vsel %vm1226, %v886, 0
      %v1237 = vsel %vm1226, %v891, 0
      %v1240 = vsel %vm1226, %v896, 0
      %v1243 = vsel %vm1226, %v901, 0
      %v1246 = vsel %vm1226, %v906, 0
      %v1249 = vsel %vm1226, %v911, 0
      %v1252 = vsel %vm1226, %v1218, 0
      %v1255 = vsel %vm1226, %v1223, 0
      %1257 = vmatprep.subr.mxu0 0.0
      %1258 = vmatpush1.xpose.msra.mxu0 %v1252
      %1259 = vmatprep.subr.mxu0 0.0
      %1260 = vmatpush1.xpose.msra.mxu0 %v1255
      %1261 = vmatprep.subr.mxu0 0.0
      %1262 = vmatpush1.xpose.msra.mxu0 0.0
      %1263 = vmatprep.subr.mxu0 0.0
      %1264 = vmatpush1.xpose.msra.mxu0 0.0
      %1265 = vmatprep.subr.mxu0 0.0
      %1266 = vmatpush1.xpose.msra.mxu0 0.0
      %1267 = vmatprep.subr.mxu0 0.0
      %1268 = vmatpush1.xpose.msra.mxu0 0.0
      %1269 = vmatprep.subr.mxu0 0.0
      %1270 = vmatpush1.xpose.msra.mxu0 0.0
      %1271 = vmatprep.subr.mxu0 0.0
      %1272 = vmatpush1.xpose.msra.mxu0 0.0
      %1273 = vmatprep.subr.mxu0 0.0
      %1274 = vmatpush1.xpose.msra.mxu0 0.0
      %1275 = vmatprep.subr.mxu0 0.0
      %1276 = vmatpush1.xpose.msra.mxu0 0.0
      %1277 = vmatprep.subr.mxu0 0.0
      %1278 = vmatpush1.xpose.msra.mxu0 0.0
      %1279 = vmatprep.subr.mxu0 0.0
      %1280 = vmatpush1.xpose.msra.mxu0 0.0
      %1281 = vmatprep.subr.mxu0 0.0
      %1282 = vmatpush1.xpose.msra.mxu0 0.0
      %1283 = vmatprep.subr.mxu0 0.0
      %1284 = vmatpush1.xpose.msra.mxu0 0.0
      %1285 = vmatprep.subr.mxu0 0.0
      %1286 = vmatpush1.xpose.msra.mxu0 0.0
      %1287 = vmatprep.subr.mxu0 0.0
      %1288 = vmatpush1.xpose.msra.mxu0 0.0
      %1289 = vmatprep.subr.mxu0 0.0
      %1290 = vmatpush1.xpose.msra.mxu0 0.0
      %1291 = vmatprep.subr.mxu0 0.0
      %1292 = vmatpush1.xpose.msra.mxu0 0.0
      %1293 = vmatprep.subr.mxu0 0.0
      %1294 = vmatpush1.xpose.msra.mxu0 0.0
      %1295 = vmatprep.subr.mxu0 0.0
      %1296 = vmatpush1.xpose.msra.mxu0 0.0
      %1297 = vmatprep.subr.mxu0 0.0
      %1298 = vmatpush1.xpose.msra.mxu0 0.0
      %1299 = vmatprep.subr.mxu0 0.0
      %1300 = vmatpush1.xpose.msra.mxu0 0.0
      %1301 = vmatprep.subr.mxu0 0.0
      %1302 = vmatpush1.xpose.msra.mxu0 0.0
      %1303 = vmatprep.subr.mxu0 0.0
      %1304 = vmatpush1.xpose.msra.mxu0 0.0
      %1305 = vmatprep.subr.mxu0 0.0
      %1306 = vmatpush1.xpose.msra.mxu0 0.0
      %1307 = vmatprep.subr.mxu0 0.0
      %1308 = vmatpush1.xpose.msra.mxu0 0.0
      %1309 = vmatprep.subr.mxu0 0.0
      %1310 = vmatpush1.xpose.msra.mxu0 0.0
      %1311 = vmatprep.subr.mxu0 0.0
      %1312 = vmatpush1.xpose.msra.mxu0 0.0
      %1313 = vmatprep.subr.mxu0 0.0
      %1314 = vmatpush1.xpose.msra.mxu0 0.0
      %1315 = vmatprep.subr.mxu0 0.0
      %1316 = vmatpush1.xpose.msra.mxu0 0.0
      %1317 = vmatprep.subr.mxu0 0.0
      %1318 = vmatpush1.xpose.msra.mxu0 0.0
      %1319 = vmatprep.subr.mxu0 0.0
      %1320 = vmatpush1.xpose.msra.mxu0 0.0
      %1321 = vmatprep.mubr.f32.mxu0 0.0
      %1322 = vmatmul.mubr.f32.gmra.mrb[0].mxu0 %v1228
      %v1323 = vpop.f32.mrb[0].mxu0
      %v1324 = vadd.f32 0.0, %v1323
      %v1325 = vpop.f32.mrb[0].mxu0
      %1326 = vmatprep.mubr.f32.mxu0 0.0
      %1327 = vmatmul.mubr.f32.gmra.mrb[0].mxu0 %v1231
      %v1328 = vpop.f32.mrb[0].mxu0
      %v1329 = vadd.f32 0.0, %v1328
      %v1330 = vpop.f32.mrb[0].mxu0
      %1331 = vmatprep.mubr.f32.mxu0 0.0
      %1332 = vmatmul.mubr.f32.gmra.mrb[0].mxu0 %v1234
      %v1333 = vpop.f32.mrb[0].mxu0
      %v1334 = vadd.f32 0.0, %v1333
      %v1335 = vpop.f32.mrb[0].mxu0
      %1336 = vmatprep.mubr.f32.mxu0 0.0
      %1337 = vmatmul.mubr.f32.gmra.mrb[0].mxu0 %v1237
      %v1338 = vpop.f32.mrb[0].mxu0
      %v1339 = vadd.f32 0.0, %v1338
      %v1340 = vpop.f32.mrb[0].mxu0
      %1341 = vmatprep.mubr.f32.mxu0 0.0
      %1342 = vmatmul.mubr.f32.gmra.mrb[0].mxu0 %v1240
      %v1343 = vpop.f32.mrb[0].mxu0
      %v1344 = vadd.f32 0.0, %v1343
      %v1345 = vpop.f32.mrb[0].mxu0
      %1346 = vmatprep.mubr.f32.mxu0 0.0
      %1347 = vmatmul.mubr.f32.gmra.mrb[0].mxu0 %v1243
      %v1348 = vpop.f32.mrb[0].mxu0
      %v1349 = vadd.f32 0.0, %v1348
      %v1350 = vpop.f32.mrb[0].mxu0
      %1351 = vmatprep.mubr.f32.mxu0 0.0
      %1352 = vmatmul.mubr.f32.gmra.mrb[0].mxu0 %v1246
      %v1353 = vpop.f32.mrb[0].mxu0
      %v1354 = vadd.f32 0.0, %v1353
      %v1355 = vpop.f32.mrb[0].mxu0
      %1356 = vmatprep.mubr.f32.mxu0 0.0
      %1357 = vmatmul.mubr.f32.gmra.mrb[0].mxu0 %v1249
      %v1358 = vpop.f32.mrb[0].mxu0
      %v1359 = vadd.f32 0.0, %v1358
      %v1360 = vpop.f32.mrb[0].mxu0
      %1361 = vdwg.mxu0
      %v1362 = vmul.f32 %v1324, 0.35355338
      %v1363 = vmul.f32 %v1329, 0.35355338
      %v1364 = vmul.f32 %v1334, 0.35355338
      %v1365 = vmul.f32 %v1339, 0.35355338
      %v1366 = vmul.f32 %v1344, 0.35355338
      %v1367 = vmul.f32 %v1349, 0.35355338
      %v1368 = vmul.f32 %v1354, 0.35355338
      %v1369 = vmul.f32 %v1359, 0.35355338
      %vm1370 = vcmask 130048
      %v1371 = vsel %vm1370, %v1362, -inf
      %1372 = vmax.xlane.f32.xlu0 %v1371
      %v1373 = vpop.xlane.xlu0 %1372
      %v1374 = vsel %vm1370, %v1363, -inf
      %1375 = vmax.xlane.f32.xlu0 %v1374
      %v1376 = vpop.xlane.xlu0 %1375
      %v1377 = vsel %vm1370, %v1364, -inf
      %1378 = vmax.xlane.f32.xlu0 %v1377
      %v1379 = vpop.xlane.xlu0 %1378
      %v1380 = vsel %vm1370, %v1365, -inf
      %1381 = vmax.xlane.f32.xlu0 %v1380
      %v1382 = vpop.xlane.xlu0 %1381
      %v1383 = vsel %vm1370, %v1366, -inf
      %1384 = vmax.xlane.f32.xlu0 %v1383
      %v1385 = vpop.xlane.xlu0 %1384
      %v1386 = vsel %vm1370, %v1367, -inf
      %1387 = vmax.xlane.f32.xlu0 %v1386
      %v1388 = vpop.xlane.xlu0 %1387
      %v1389 = vsel %vm1370, %v1368, -inf
      %1390 = vmax.xlane.f32.xlu0 %v1389
      %v1391 = vpop.xlane.xlu0 %1390
      %v1392 = vsel %vm1370, %v1369, -inf
      %1393 = vmax.xlane.f32.xlu0 %v1392
      %v1394 = vpop.xlane.xlu0 %1393
      %v1395 = vsub.f32 %v1362, %v1373
      %v1396 = vsub.f32 %v1363, %v1376
      %v1397 = vsub.f32 %v1364, %v1379
      %v1398 = vsub.f32 %v1365, %v1382
      %v1399 = vsub.f32 %v1366, %v1385
      %v1400 = vsub.f32 %v1367, %v1388
      %v1401 = vsub.f32 %v1368, %v1391
      %v1402 = vsub.f32 %v1369, %v1394
      %v1403 = vmul.f32 %v1395, 1.442695
      %v1404 = vpow.pop %v1403
      %v1405 = vmul.f32 %v1396, 1.442695
      %v1406 = vpow.pop %v1405
      %v1407 = vmul.f32 %v1397, 1.442695
      %v1408 = vpow.pop %v1407
      %v1409 = vmul.f32 %v1398, 1.442695
      %v1410 = vpow.pop %v1409
      %v1411 = vmul.f32 %v1399, 1.442695
      %v1412 = vpow.pop %v1411
      %v1413 = vmul.f32 %v1400, 1.442695
      %v1414 = vpow.pop %v1413
      %v1415 = vmul.f32 %v1401, 1.442695
      %v1416 = vpow.pop %v1415
      %v1417 = vmul.f32 %v1402, 1.442695
      %v1418 = vpow.pop %v1417
      %v1419 = vsel %vm1370, %v1404, 0.0
      %1420 = vadd.xlane.f32.xlu0 %v1419
      %v1421 = vpop.xlane.xlu0 %1420
      %v1422 = vsel %vm1370, %v1406, 0.0
      %1423 = vadd.xlane.f32.xlu0 %v1422
      %v1424 = vpop.xlane.xlu0 %1423
      %v1425 = vsel %vm1370, %v1408, 0.0
      %1426 = vadd.xlane.f32.xlu0 %v1425
      %v1427 = vpop.xlane.xlu0 %1426
      %v1428 = vsel %vm1370, %v1410, 0.0
      %1429 = vadd.xlane.f32.xlu0 %v1428
      %v1430 = vpop.xlane.xlu0 %1429
      %v1431 = vsel %vm1370, %v1412, 0.0
      %1432 = vadd.xlane.f32.xlu0 %v1431
      %v1433 = vpop.xlane.xlu0 %1432
      %v1434 = vsel %vm1370, %v1414, 0.0
      %1435 = vadd.xlane.f32.xlu0 %v1434
      %v1436 = vpop.xlane.xlu0 %1435
      %v1437 = vsel %vm1370, %v1416, 0.0
      %1438 = vadd.xlane.f32.xlu0 %v1437
      %v1439 = vpop.xlane.xlu0 %1438
      %v1440 = vsel %vm1370, %v1418, 0.0
      %1441 = vadd.xlane.f32.xlu0 %v1440
      %v1442 = vpop.xlane.xlu0 %1441
      %1443 = vrot.lane.b32.xlu0 %v1218, 96
      %v1444 = vpop.permute.xlu0 %1443
      %1445 = vrot.lane.b32.xlu0 %v1223, 96
      %v1446 = vpop.permute.xlu0 %1445
      %v1450 = vsel %vm1370, %v1404, 0
      %v1453 = vsel %vm1370, %v1406, 0
      %v1456 = vsel %vm1370, %v1408, 0
      %v1459 = vsel %vm1370, %v1410, 0
      %v1462 = vsel %vm1370, %v1412, 0
      %v1465 = vsel %vm1370, %v1414, 0
      %v1468 = vsel %vm1370, %v1416, 0
      %v1471 = vsel %vm1370, %v1418, 0
      %1473 = vmatprep.subr.mxu0 0.0
      %1474 = vmatpush1.msra.mxu0 %v1444
      %1475 = vmatprep.subr.mxu0 0.0
      %1476 = vmatpush1.msra.mxu0 %v1446
      %1477 = vmatprep.subr.mxu0 0.0
      %1478 = vmatpush1.msra.mxu0 0.0
      %1479 = vmatprep.subr.mxu0 0.0
      %1480 = vmatpush1.msra.mxu0 0.0
      %1481 = vmatprep.subr.mxu0 0.0
      %1482 = vmatpush1.msra.mxu0 0.0
      %1483 = vmatprep.subr.mxu0 0.0
      %1484 = vmatpush1.msra.mxu0 0.0
      %1485 = vmatprep.subr.mxu0 0.0
      %1486 = vmatpush1.msra.mxu0 0.0
      %1487 = vmatprep.subr.mxu0 0.0
      %1488 = vmatpush1.msra.mxu0 0.0
      %1489 = vmatprep.subr.mxu0 0.0
      %1490 = vmatpush1.msra.mxu0 0.0
      %1491 = vmatprep.subr.mxu0 0.0
      %1492 = vmatpush1.msra.mxu0 0.0
      %1493 = vmatprep.subr.mxu0 0.0
      %1494 = vmatpush1.msra.mxu0 0.0
      %1495 = vmatprep.subr.mxu0 0.0
      %1496 = vmatpush1.msra.mxu0 0.0
      %1497 = vmatprep.subr.mxu0 0.0
      %1498 = vmatpush1.msra.mxu0 0.0
      %1499 = vmatprep.subr.mxu0 0.0
      %1500 = vmatpush1.msra.mxu0 0.0
      %1501 = vmatprep.subr.mxu0 0.0
      %1502 = vmatpush1.msra.mxu0 0.0
      %1503 = vmatprep.subr.mxu0 0.0
      %1504 = vmatpush1.msra.mxu0 0.0
      %1505 = vmatprep.subr.mxu0 0.0
      %1506 = vmatpush1.msra.mxu0 0.0
      %1507 = vmatprep.subr.mxu0 0.0
      %1508 = vmatpush1.msra.mxu0 0.0
      %1509 = vmatprep.subr.mxu0 0.0
      %1510 = vmatpush1.msra.mxu0 0.0
      %1511 = vmatprep.subr.mxu0 0.0
      %1512 = vmatpush1.msra.mxu0 0.0
      %1513 = vmatprep.subr.mxu0 0.0
      %1514 = vmatpush1.msra.mxu0 0.0
      %1515 = vmatprep.subr.mxu0 0.0
      %1516 = vmatpush1.msra.mxu0 0.0
      %1517 = vmatprep.subr.mxu0 0.0
      %1518 = vmatpush1.msra.mxu0 0.0
      %1519 = vmatprep.subr.mxu0 0.0
      %1520 = vmatpush1.msra.mxu0 0.0
      %1521 = vmatprep.subr.mxu0 0.0
      %1522 = vmatpush1.msra.mxu0 0.0
      %1523 = vmatprep.subr.mxu0 0.0
      %1524 = vmatpush1.msra.mxu0 0.0
      %1525 = vmatprep.subr.mxu0 0.0
      %1526 = vmatpush1.msra.mxu0 0.0
      %1527 = vmatprep.subr.mxu0 0.0
      %1528 = vmatpush1.msra.mxu0 0.0
      %1529 = vmatprep.subr.mxu0 0.0
      %1530 = vmatpush1.msra.mxu0 0.0
      %1531 = vmatprep.subr.mxu0 0.0
      %1532 = vmatpush1.msra.mxu0 0.0
      %1533 = vmatprep.subr.mxu0 0.0
      %1534 = vmatpush1.msra.mxu0 0.0
      %1535 = vmatprep.subr.mxu0 0.0
      %1536 = vmatpush1.msra.mxu0 0.0
      %1537 = vmatprep.mubr.f32.mxu0 0.0
      %1538 = vmatmul.mubr.f32.gmra.mrb[0].mxu0 %v1450
      %v1539 = vpop.f32.mrb[0].mxu0
      %v1540 = vadd.f32 0.0, %v1539
      %v1541 = vpop.f32.mrb[0].mxu0
      %1542 = vmatprep.mubr.f32.mxu0 0.0
      %1543 = vmatmul.mubr.f32.gmra.mrb[0].mxu0 %v1453
      %v1544 = vpop.f32.mrb[0].mxu0
      %v1545 = vadd.f32 0.0, %v1544
      %v1546 = vpop.f32.mrb[0].mxu0
      %1547 = vmatprep.mubr.f32.mxu0 0.0
      %1548 = vmatmul.mubr.f32.gmra.mrb[0].mxu0 %v1456
      %v1549 = vpop.f32.mrb[0].mxu0
      %v1550 = vadd.f32 0.0, %v1549
      %v1551 = vpop.f32.mrb[0].mxu0
      %1552 = vmatprep.mubr.f32.mxu0 0.0
      %1553 = vmatmul.mubr.f32.gmra.mrb[0].mxu0 %v1459
      %v1554 = vpop.f32.mrb[0].mxu0
      %v1555 = vadd.f32 0.0, %v1554
      %v1556 = vpop.f32.mrb[0].mxu0
      %1557 = vmatprep.mubr.f32.mxu0 0.0
      %1558 = vmatmul.mubr.f32.gmra.mrb[0].mxu0 %v1462
      %v1559 = vpop.f32.mrb[0].mxu0
      %v1560 = vadd.f32 0.0, %v1559
      %v1561 = vpop.f32.mrb[0].mxu0
      %1562 = vmatprep.mubr.f32.mxu0 0.0
      %1563 = vmatmul.mubr.f32.gmra.mrb[0].mxu0 %v1465
      %v1564 = vpop.f32.mrb[0].mxu0
      %v1565 = vadd.f32 0.0, %v1564
      %v1566 = vpop.f32.mrb[0].mxu0
      %1567 = vmatprep.mubr.f32.mxu0 0.0
      %1568 = vmatmul.mubr.f32.gmra.mrb[0].mxu0 %v1468
      %v1569 = vpop.f32.mrb[0].mxu0
      %v1570 = vadd.f32 0.0, %v1569
      %v1571 = vpop.f32.mrb[0].mxu0
      %1572 = vmatprep.mubr.f32.mxu0 0.0
      %1573 = vmatmul.mubr.f32.gmra.mrb[0].mxu0 %v1471
      %v1574 = vpop.f32.mrb[0].mxu0
      %v1575 = vadd.f32 0.0, %v1574
      %v1576 = vpop.f32.mrb[0].mxu0
      %1577 = vdwg.mxu0
      %v1578 = vrcp.pop %v1421
      %v1579 = vrcp.pop %v1424
      %v1580 = vrcp.pop %v1427
      %v1581 = vrcp.pop %v1430
      %v1582 = vrcp.pop %v1433
      %v1583 = vrcp.pop %v1436
      %v1584 = vrcp.pop %v1439
      %v1585 = vrcp.pop %v1442
      %v1586 = vmul.f32 %v1540, %v1578
      %v1587 = vmul.f32 %v1545, %v1579
      %v1588 = vmul.f32 %v1550, %v1580
      %v1589 = vmul.f32 %v1555, %v1581
      %v1590 = vmul.f32 %v1560, %v1582
      %v1591 = vmul.f32 %v1565, %v1583
      %v1592 = vmul.f32 %v1570, %v1584
      %v1593 = vmul.f32 %v1575, %v1585
      %1594 = vrot.lane.b32.xlu0 %v876, 120
      %v1595 = vpop.permute.xlu0 %1594
      %1596 = vrot.lane.b32.xlu0 %v881, 120
      %v1597 = vpop.permute.xlu0 %1596
      %1598 = vrot.lane.b32.xlu0 %v886, 120
      %v1599 = vpop.permute.xlu0 %1598
      %1600 = vrot.lane.b32.xlu0 %v891, 120
      %v1601 = vpop.permute.xlu0 %1600
      %1602 = vrot.lane.b32.xlu0 %v896, 120
      %v1603 = vpop.permute.xlu0 %1602
      %1604 = vrot.lane.b32.xlu0 %v901, 120
      %v1605 = vpop.permute.xlu0 %1604
      %1606 = vrot.lane.b32.xlu0 %v906, 120
      %v1607 = vpop.permute.xlu0 %1606
      %1608 = vrot.lane.b32.xlu0 %v911, 120
      %v1609 = vpop.permute.xlu0 %1608
      %1610 = vrot.lane.b32.xlu0 %v1218, 120
      %v1611 = vpop.permute.xlu0 %1610
      %1612 = vrot.lane.b32.xlu0 %v1223, 120
      %v1613 = vpop.permute.xlu0 %1612
      %v1614 = vsel %vm1226, %v1595, 0
      %v1616 = vsel %vm1226, %v1597, 0
      %v1618 = vsel %vm1226, %v1599, 0
      %v1620 = vsel %vm1226, %v1601, 0
      %v1622 = vsel %vm1226, %v1603, 0
      %v1624 = vsel %vm1226, %v1605, 0
      %v1626 = vsel %vm1226, %v1607, 0
      %v1628 = vsel %vm1226, %v1609, 0
      %v1630 = vsel %vm1226, %v1611, 0
      %v1632 = vsel %vm1226, %v1613, 0
      %1634 = vmatprep.subr.mxu0 0.0
      %1635 = vmatpush1.xpose.msra.mxu0 %v1630
      %1636 = vmatprep.subr.mxu0 0.0
      %1637 = vmatpush1.xpose.msra.mxu0 %v1632
      %1638 = vmatprep.subr.mxu0 0.0
      %1639 = vmatpush1.xpose.msra.mxu0 0.0
      %1640 = vmatprep.subr.mxu0 0.0
      %1641 = vmatpush1.xpose.msra.mxu0 0.0
      %1642 = vmatprep.subr.mxu0 0.0
      %1643 = vmatpush1.xpose.msra.mxu0 0.0
      %1644 = vmatprep.subr.mxu0 0.0
      %1645 = vmatpush1.xpose.msra.mxu0 0.0
      %1646 = vmatprep.subr.mxu0 0.0
      %1647 = vmatpush1.xpose.msra.mxu0 0.0
      %1648 = vmatprep.subr.mxu0 0.0
      %1649 = vmatpush1.xpose.msra.mxu0 0.0
      %1650 = vmatprep.subr.mxu0 0.0
      %1651 = vmatpush1.xpose.msra.mxu0 0.0
      %1652 = vmatprep.subr.mxu0 0.0
      %1653 = vmatpush1.xpose.msra.mxu0 0.0
      %1654 = vmatprep.subr.mxu0 0.0
      %1655 = vmatpush1.xpose.msra.mxu0 0.0
      %1656 = vmatprep.subr.mxu0 0.0
      %1657 = vmatpush1.xpose.msra.mxu0 0.0
      %1658 = vmatprep.subr.mxu0 0.0
      %1659 = vmatpush1.xpose.msra.mxu0 0.0
      %1660 = vmatprep.subr.mxu0 0.0
      %1661 = vmatpush1.xpose.msra.mxu0 0.0
      %1662 = vmatprep.subr.mxu0 0.0
      %1663 = vmatpush1.xpose.msra.mxu0 0.0
      %1664 = vmatprep.subr.mxu0 0.0
      %1665 = vmatpush1.xpose.msra.mxu0 0.0
      %1666 = vmatprep.subr.mxu0 0.0
      %1667 = vmatpush1.xpose.msra.mxu0 0.0
      %1668 = vmatprep.subr.mxu0 0.0
      %1669 = vmatpush1.xpose.msra.mxu0 0.0
      %1670 = vmatprep.subr.mxu0 0.0
      %1671 = vmatpush1.xpose.msra.mxu0 0.0
      %1672 = vmatprep.subr.mxu0 0.0
      %1673 = vmatpush1.xpose.msra.mxu0 0.0
      %1674 = vmatprep.subr.mxu0 0.0
      %1675 = vmatpush1.xpose.msra.mxu0 0.0
      %1676 = vmatprep.subr.mxu0 0.0
      %1677 = vmatpush1.xpose.msra.mxu0 0.0
      %1678 = vmatprep.subr.mxu0 0.0
      %1679 = vmatpush1.xpose.msra.mxu0 0.0
      %1680 = vmatprep.subr.mxu0 0.0
      %1681 = vmatpush1.xpose.msra.mxu0 0.0
      %1682 = vmatprep.subr.mxu0 0.0
      %1683 = vmatpush1.xpose.msra.mxu0 0.0
      %1684 = vmatprep.subr.mxu0 0.0
      %1685 = vmatpush1.xpose.msra.mxu0 0.0
      %1686 = vmatprep.subr.mxu0 0.0
      %1687 = vmatpush1.xpose.msra.mxu0 0.0
      %1688 = vmatprep.subr.mxu0 0.0
      %1689 = vmatpush1.xpose.msra.mxu0 0.0
      %1690 = vmatprep.subr.mxu0 0.0
      %1691 = vmatpush1.xpose.msra.mxu0 0.0
      %1692 = vmatprep.subr.mxu0 0.0
      %1693 = vmatpush1.xpose.msra.mxu0 0.0
      %1694 = vmatprep.subr.mxu0 0.0
      %1695 = vmatpush1.xpose.msra.mxu0 0.0
      %1696 = vmatprep.subr.mxu0 0.0
      %1697 = vmatpush1.xpose.msra.mxu0 0.0
      %1698 = vmatprep.mubr.f32.mxu0 0.0
      %1699 = vmatmul.mubr.f32.gmra.mrb[0].mxu0 %v1614
      %v1700 = vpop.f32.mrb[0].mxu0
      %v1701 = vadd.f32 0.0, %v1700
      %v1702 = vpop.f32.mrb[0].mxu0
      %1703 = vmatprep.mubr.f32.mxu0 0.0
      %1704 = vmatmul.mubr.f32.gmra.mrb[0].mxu0 %v1616
      %v1705 = vpop.f32.mrb[0].mxu0
      %v1706 = vadd.f32 0.0, %v1705
      %v1707 = vpop.f32.mrb[0].mxu0
      %1708 = vmatprep.mubr.f32.mxu0 0.0
      %1709 = vmatmul.mubr.f32.gmra.mrb[0].mxu0 %v1618
      %v1710 = vpop.f32.mrb[0].mxu0
      %v1711 = vadd.f32 0.0, %v1710
      %v1712 = vpop.f32.mrb[0].mxu0
      %1713 = vmatprep.mubr.f32.mxu0 0.0
      %1714 = vmatmul.mubr.f32.gmra.mrb[0].mxu0 %v1620
      %v1715 = vpop.f32.mrb[0].mxu0
      %v1716 = vadd.f32 0.0, %v1715
      %v1717 = vpop.f32.mrb[0].mxu0
      %1718 = vmatprep.mubr.f32.mxu0 0.0
      %1719 = vmatmul.mubr.f32.gmra.mrb[0].mxu0 %v1622
      %v1720 = vpop.f32.mrb[0].mxu0
      %v1721 = vadd.f32 0.0, %v1720
      %v1722 = vpop.f32.mrb[0].mxu0
      %1723 = vmatprep.mubr.f32.mxu0 0.0
      %1724 = vmatmul.mubr.f32.gmra.mrb[0].mxu0 %v1624
      %v1725 = vpop.f32.mrb[0].mxu0
      %v1726 = vadd.f32 0.0, %v1725
      %v1727 = vpop.f32.mrb[0].mxu0
      %1728 = vmatprep.mubr.f32.mxu0 0.0
      %1729 = vmatmul.mubr.f32.gmra.mrb[0].mxu0 %v1626
      %v1730 = vpop.f32.mrb[0].mxu0
      %v1731 = vadd.f32 0.0, %v1730
      %v1732 = vpop.f32.mrb[0].mxu0
      %1733 = vmatprep.mubr.f32.mxu0 0.0
      %1734 = vmatmul.mubr.f32.gmra.mrb[0].mxu0 %v1628
      %v1735 = vpop.f32.mrb[0].mxu0
      %v1736 = vadd.f32 0.0, %v1735
      %v1737 = vpop.f32.mrb[0].mxu0
      %1738 = vdwg.mxu0
      %v1739 = vmul.f32 %v1701, 0.35355338
      %v1740 = vmul.f32 %v1706, 0.35355338
      %v1741 = vmul.f32 %v1711, 0.35355338
      %v1742 = vmul.f32 %v1716, 0.35355338
      %v1743 = vmul.f32 %v1721, 0.35355338
      %v1744 = vmul.f32 %v1726, 0.35355338
      %v1745 = vmul.f32 %v1731, 0.35355338
      %v1746 = vmul.f32 %v1736, 0.35355338
      %v1747 = vsel %vm1370, %v1739, -inf
      %1748 = vmax.xlane.f32.xlu0 %v1747
      %v1749 = vpop.xlane.xlu0 %1748
      %v1750 = vsel %vm1370, %v1740, -inf
      %1751 = vmax.xlane.f32.xlu0 %v1750
      %v1752 = vpop.xlane.xlu0 %1751
      %v1753 = vsel %vm1370, %v1741, -inf
      %1754 = vmax.xlane.f32.xlu0 %v1753
      %v1755 = vpop.xlane.xlu0 %1754
      %v1756 = vsel %vm1370, %v1742, -inf
      %1757 = vmax.xlane.f32.xlu0 %v1756
      %v1758 = vpop.xlane.xlu0 %1757
      %v1759 = vsel %vm1370, %v1743, -inf
      %1760 = vmax.xlane.f32.xlu0 %v1759
      %v1761 = vpop.xlane.xlu0 %1760
      %v1762 = vsel %vm1370, %v1744, -inf
      %1763 = vmax.xlane.f32.xlu0 %v1762
      %v1764 = vpop.xlane.xlu0 %1763
      %v1765 = vsel %vm1370, %v1745, -inf
      %1766 = vmax.xlane.f32.xlu0 %v1765
      %v1767 = vpop.xlane.xlu0 %1766
      %v1768 = vsel %vm1370, %v1746, -inf
      %1769 = vmax.xlane.f32.xlu0 %v1768
      %v1770 = vpop.xlane.xlu0 %1769
      %v1771 = vsub.f32 %v1739, %v1749
      %v1772 = vsub.f32 %v1740, %v1752
      %v1773 = vsub.f32 %v1741, %v1755
      %v1774 = vsub.f32 %v1742, %v1758
      %v1775 = vsub.f32 %v1743, %v1761
      %v1776 = vsub.f32 %v1744, %v1764
      %v1777 = vsub.f32 %v1745, %v1767
      %v1778 = vsub.f32 %v1746, %v1770
      %v1779 = vmul.f32 %v1771, 1.442695
      %v1780 = vpow.pop %v1779
      %v1781 = vmul.f32 %v1772, 1.442695
      %v1782 = vpow.pop %v1781
      %v1783 = vmul.f32 %v1773, 1.442695
      %v1784 = vpow.pop %v1783
      %v1785 = vmul.f32 %v1774, 1.442695
      %v1786 = vpow.pop %v1785
      %v1787 = vmul.f32 %v1775, 1.442695
      %v1788 = vpow.pop %v1787
      %v1789 = vmul.f32 %v1776, 1.442695
      %v1790 = vpow.pop %v1789
      %v1791 = vmul.f32 %v1777, 1.442695
      %v1792 = vpow.pop %v1791
      %v1793 = vmul.f32 %v1778, 1.442695
      %v1794 = vpow.pop %v1793
      %v1795 = vsel %vm1370, %v1780, 0.0
      %1796 = vadd.xlane.f32.xlu0 %v1795
      %v1797 = vpop.xlane.xlu0 %1796
      %v1798 = vsel %vm1370, %v1782, 0.0
      %1799 = vadd.xlane.f32.xlu0 %v1798
      %v1800 = vpop.xlane.xlu0 %1799
      %v1801 = vsel %vm1370, %v1784, 0.0
      %1802 = vadd.xlane.f32.xlu0 %v1801
      %v1803 = vpop.xlane.xlu0 %1802
      %v1804 = vsel %vm1370, %v1786, 0.0
      %1805 = vadd.xlane.f32.xlu0 %v1804
      %v1806 = vpop.xlane.xlu0 %1805
      %v1807 = vsel %vm1370, %v1788, 0.0
      %1808 = vadd.xlane.f32.xlu0 %v1807
      %v1809 = vpop.xlane.xlu0 %1808
      %v1810 = vsel %vm1370, %v1790, 0.0
      %1811 = vadd.xlane.f32.xlu0 %v1810
      %v1812 = vpop.xlane.xlu0 %1811
      %v1813 = vsel %vm1370, %v1792, 0.0
      %1814 = vadd.xlane.f32.xlu0 %v1813
      %v1815 = vpop.xlane.xlu0 %1814
      %v1816 = vsel %vm1370, %v1794, 0.0
      %1817 = vadd.xlane.f32.xlu0 %v1816
      %v1818 = vpop.xlane.xlu0 %1817
      %1819 = vrot.lane.b32.xlu0 %v1218, 88
      %v1820 = vpop.permute.xlu0 %1819
      %1821 = vrot.lane.b32.xlu0 %v1223, 88
      %v1822 = vpop.permute.xlu0 %1821
      %v1826 = vsel %vm1370, %v1780, 0
      %v1829 = vsel %vm1370, %v1782, 0
      %v1832 = vsel %vm1370, %v1784, 0
      %v1835 = vsel %vm1370, %v1786, 0
      %v1838 = vsel %vm1370, %v1788, 0
      %v1841 = vsel %vm1370, %v1790, 0
      %v1844 = vsel %vm1370, %v1792, 0
      %v1847 = vsel %vm1370, %v1794, 0
      %1849 = vmatprep.subr.mxu0 0.0
      %1850 = vmatpush1.msra.mxu0 %v1820
      %1851 = vmatprep.subr.mxu0 0.0
      %1852 = vmatpush1.msra.mxu0 %v1822
      %1853 = vmatprep.subr.mxu0 0.0
      %1854 = vmatpush1.msra.mxu0 0.0
      %1855 = vmatprep.subr.mxu0 0.0
      %1856 = vmatpush1.msra.mxu0 0.0
      %1857 = vmatprep.subr.mxu0 0.0
      %1858 = vmatpush1.msra.mxu0 0.0
      %1859 = vmatprep.subr.mxu0 0.0
      %1860 = vmatpush1.msra.mxu0 0.0
      %1861 = vmatprep.subr.mxu0 0.0
      %1862 = vmatpush1.msra.mxu0 0.0
      %1863 = vmatprep.subr.mxu0 0.0
      %1864 = vmatpush1.msra.mxu0 0.0
      %1865 = vmatprep.subr.mxu0 0.0
      %1866 = vmatpush1.msra.mxu0 0.0
      %1867 = vmatprep.subr.mxu0 0.0
      %1868 = vmatpush1.msra.mxu0 0.0
      %1869 = vmatprep.subr.mxu0 0.0
      %1870 = vmatpush1.msra.mxu0 0.0
      %1871 = vmatprep.subr.mxu0 0.0
      %1872 = vmatpush1.msra.mxu0 0.0
      %1873 = vmatprep.subr.mxu0 0.0
      %1874 = vmatpush1.msra.mxu0 0.0
      %1875 = vmatprep.subr.mxu0 0.0
      %1876 = vmatpush1.msra.mxu0 0.0
      %1877 = vmatprep.subr.mxu0 0.0
      %1878 = vmatpush1.msra.mxu0 0.0
      %1879 = vmatprep.subr.mxu0 0.0
      %1880 = vmatpush1.msra.mxu0 0.0
      %1881 = vmatprep.subr.mxu0 0.0
      %1882 = vmatpush1.msra.mxu0 0.0
      %1883 = vmatprep.subr.mxu0 0.0
      %1884 = vmatpush1.msra.mxu0 0.0
      %1885 = vmatprep.subr.mxu0 0.0
      %1886 = vmatpush1.msra.mxu0 0.0
      %1887 = vmatprep.subr.mxu0 0.0
      %1888 = vmatpush1.msra.mxu0 0.0
      %1889 = vmatprep.subr.mxu0 0.0
      %1890 = vmatpush1.msra.mxu0 0.0
      %1891 = vmatprep.subr.mxu0 0.0
      %1892 = vmatpush1.msra.mxu0 0.0
      %1893 = vmatprep.subr.mxu0 0.0
      %1894 = vmatpush1.msra.mxu0 0.0
      %1895 = vmatprep.subr.mxu0 0.0
      %1896 = vmatpush1.msra.mxu0 0.0
      %1897 = vmatprep.subr.mxu0 0.0
      %1898 = vmatpush1.msra.mxu0 0.0
      %1899 = vmatprep.subr.mxu0 0.0
      %1900 = vmatpush1.msra.mxu0 0.0
      %1901 = vmatprep.subr.mxu0 0.0
      %1902 = vmatpush1.msra.mxu0 0.0
      %1903 = vmatprep.subr.mxu0 0.0
      %1904 = vmatpush1.msra.mxu0 0.0
      %1905 = vmatprep.subr.mxu0 0.0
      %1906 = vmatpush1.msra.mxu0 0.0
      %1907 = vmatprep.subr.mxu0 0.0
      %1908 = vmatpush1.msra.mxu0 0.0
      %1909 = vmatprep.subr.mxu0 0.0
      %1910 = vmatpush1.msra.mxu0 0.0
      %1911 = vmatprep.subr.mxu0 0.0
      %1912 = vmatpush1.msra.mxu0 0.0
      %1913 = vmatprep.mubr.f32.mxu0 0.0
      %1914 = vmatmul.mubr.f32.gmra.mrb[0].mxu0 %v1826
      %v1915 = vpop.f32.mrb[0].mxu0
      %v1916 = vadd.f32 0.0, %v1915
      %v1917 = vpop.f32.mrb[0].mxu0
      %1918 = vmatprep.mubr.f32.mxu0 0.0
      %1919 = vmatmul.mubr.f32.gmra.mrb[0].mxu0 %v1829
      %v1920 = vpop.f32.mrb[0].mxu0
      %v1921 = vadd.f32 0.0, %v1920
      %v1922 = vpop.f32.mrb[0].mxu0
      %1923 = vmatprep.mubr.f32.mxu0 0.0
      %1924 = vmatmul.mubr.f32.gmra.mrb[0].mxu0 %v1832
      %v1925 = vpop.f32.mrb[0].mxu0
      %v1926 = vadd.f32 0.0, %v1925
      %v1927 = vpop.f32.mrb[0].mxu0
      %1928 = vmatprep.mubr.f32.mxu0 0.0
      %1929 = vmatmul.mubr.f32.gmra.mrb[0].mxu0 %v1835
      %v1930 = vpop.f32.mrb[0].mxu0
      %v1931 = vadd.f32 0.0, %v1930
      %v1932 = vpop.f32.mrb[0].mxu0
      %1933 = vmatprep.mubr.f32.mxu0 0.0
      %1934 = vmatmul.mubr.f32.gmra.mrb[0].mxu0 %v1838
      %v1935 = vpop.f32.mrb[0].mxu0
      %v1936 = vadd.f32 0.0, %v1935
      %v1937 = vpop.f32.mrb[0].mxu0
      %1938 = vmatprep.mubr.f32.mxu0 0.0
      %1939 = vmatmul.mubr.f32.gmra.mrb[0].mxu0 %v1841
      %v1940 = vpop.f32.mrb[0].mxu0
      %v1941 = vadd.f32 0.0, %v1940
      %v1942 = vpop.f32.mrb[0].mxu0
      %1943 = vmatprep.mubr.f32.mxu0 0.0
      %1944 = vmatmul.mubr.f32.gmra.mrb[0].mxu0 %v1844
      %v1945 = vpop.f32.mrb[0].mxu0
      %v1946 = vadd.f32 0.0, %v1945
      %v1947 = vpop.f32.mrb[0].mxu0
      %1948 = vmatprep.mubr.f32.mxu0 0.0
      %1949 = vmatmul.mubr.f32.gmra.mrb[0].mxu0 %v1847
      %v1950 = vpop.f32.mrb[0].mxu0
      %v1951 = vadd.f32 0.0, %v1950
      %v1952 = vpop.f32.mrb[0].mxu0
      %1953 = vdwg.mxu0
      %v1954 = vrcp.pop %v1797
      %v1955 = vrcp.pop %v1800
      %v1956 = vrcp.pop %v1803
      %v1957 = vrcp.pop %v1806
      %v1958 = vrcp.pop %v1809
      %v1959 = vrcp.pop %v1812
      %v1960 = vrcp.pop %v1815
      %v1961 = vrcp.pop %v1818
      %v1962 = vmul.f32 %v1916, %v1954
      %v1963 = vmul.f32 %v1921, %v1955
      %v1964 = vmul.f32 %v1926, %v1956
      %v1965 = vmul.f32 %v1931, %v1957
      %v1966 = vmul.f32 %v1936, %v1958
      %v1967 = vmul.f32 %v1941, %v1959
      %v1968 = vmul.f32 %v1946, %v1960
      %v1969 = vmul.f32 %v1951, %v1961
      %1970 = vrot.lane.b32.xlu0 %v876, 112
      %v1971 = vpop.permute.xlu0 %1970
      %1972 = vrot.lane.b32.xlu0 %v881, 112
      %v1973 = vpop.permute.xlu0 %1972
      %1974 = vrot.lane.b32.xlu0 %v886, 112
      %v1975 = vpop.permute.xlu0 %1974
      %1976 = vrot.lane.b32.xlu0 %v891, 112
      %v1977 = vpop.permute.xlu0 %1976
      %1978 = vrot.lane.b32.xlu0 %v896, 112
      %v1979 = vpop.permute.xlu0 %1978
      %1980 = vrot.lane.b32.xlu0 %v901, 112
      %v1981 = vpop.permute.xlu0 %1980
      %1982 = vrot.lane.b32.xlu0 %v906, 112
      %v1983 = vpop.permute.xlu0 %1982
      %1984 = vrot.lane.b32.xlu0 %v911, 112
      %v1985 = vpop.permute.xlu0 %1984
      %1986 = vrot.lane.b32.xlu0 %v1218, 112
      %v1987 = vpop.permute.xlu0 %1986
      %1988 = vrot.lane.b32.xlu0 %v1223, 112
      %v1989 = vpop.permute.xlu0 %1988
      %v1990 = vsel %vm1226, %v1971, 0
      %v1992 = vsel %vm1226, %v1973, 0
      %v1994 = vsel %vm1226, %v1975, 0
      %v1996 = vsel %vm1226, %v1977, 0
      %v1998 = vsel %vm1226, %v1979, 0
      %v2000 = vsel %vm1226, %v1981, 0
      %v2002 = vsel %vm1226, %v1983, 0
      %v2004 = vsel %vm1226, %v1985, 0
      %v2006 = vsel %vm1226, %v1987, 0
      %v2008 = vsel %vm1226, %v1989, 0
      %2010 = vmatprep.subr.mxu0 0.0
      %2011 = vmatpush1.xpose.msra.mxu0 %v2006
      %2012 = vmatprep.subr.mxu0 0.0
      %2013 = vmatpush1.xpose.msra.mxu0 %v2008
      %2014 = vmatprep.subr.mxu0 0.0
      %2015 = vmatpush1.xpose.msra.mxu0 0.0
      %2016 = vmatprep.subr.mxu0 0.0
      %2017 = vmatpush1.xpose.msra.mxu0 0.0
      %2018 = vmatprep.subr.mxu0 0.0
      %2019 = vmatpush1.xpose.msra.mxu0 0.0
      %2020 = vmatprep.subr.mxu0 0.0
      %2021 = vmatpush1.xpose.msra.mxu0 0.0
      %2022 = vmatprep.subr.mxu0 0.0
      %2023 = vmatpush1.xpose.msra.mxu0 0.0
      %2024 = vmatprep.subr.mxu0 0.0
      %2025 = vmatpush1.xpose.msra.mxu0 0.0
      %2026 = vmatprep.subr.mxu0 0.0
      %2027 = vmatpush1.xpose.msra.mxu0 0.0
      %2028 = vmatprep.subr.mxu0 0.0
      %2029 = vmatpush1.xpose.msra.mxu0 0.0
      %2030 = vmatprep.subr.mxu0 0.0
      %2031 = vmatpush1.xpose.msra.mxu0 0.0
      %2032 = vmatprep.subr.mxu0 0.0
      %2033 = vmatpush1.xpose.msra.mxu0 0.0
      %2034 = vmatprep.subr.mxu0 0.0
      %2035 = vmatpush1.xpose.msra.mxu0 0.0
      %2036 = vmatprep.subr.mxu0 0.0
      %2037 = vmatpush1.xpose.msra.mxu0 0.0
      %2038 = vmatprep.subr.mxu0 0.0
      %2039 = vmatpush1.xpose.msra.mxu0 0.0
      %2040 = vmatprep.subr.mxu0 0.0
      %2041 = vmatpush1.xpose.msra.mxu0 0.0
      %2042 = vmatprep.subr.mxu0 0.0
      %2043 = vmatpush1.xpose.msra.mxu0 0.0
      %2044 = vmatprep.subr.mxu0 0.0
      %2045 = vmatpush1.xpose.msra.mxu0 0.0
      %2046 = vmatprep.subr.mxu0 0.0
      %2047 = vmatpush1.xpose.msra.mxu0 0.0
      %2048 = vmatprep.subr.mxu0 0.0
      %2049 = vmatpush1.xpose.msra.mxu0 0.0
      %2050 = vmatprep.subr.mxu0 0.0
      %2051 = vmatpush1.xpose.msra.mxu0 0.0
      %2052 = vmatprep.subr.mxu0 0.0
      %2053 = vmatpush1.xpose.msra.mxu0 0.0
      %2054 = vmatprep.subr.mxu0 0.0
      %2055 = vmatpush1.xpose.msra.mxu0 0.0
      %2056 = vmatprep.subr.mxu0 0.0
      %2057 = vmatpush1.xpose.msra.mxu0 0.0
      %2058 = vmatprep.subr.mxu0 0.0
      %2059 = vmatpush1.xpose.msra.mxu0 0.0
      %2060 = vmatprep.subr.mxu0 0.0
      %2061 = vmatpush1.xpose.msra.mxu0 0.0
      %2062 = vmatprep.subr.mxu0 0.0
      %2063 = vmatpush1.xpose.msra.mxu0 0.0
      %2064 = vmatprep.subr.mxu0 0.0
      %2065 = vmatpush1.xpose.msra.mxu0 0.0
      %2066 = vmatprep.subr.mxu0 0.0
      %2067 = vmatpush1.xpose.msra.mxu0 0.0
      %2068 = vmatprep.subr.mxu0 0.0
      %2069 = vmatpush1.xpose.msra.mxu0 0.0
      %2070 = vmatprep.subr.mxu0 0.0
      %2071 = vmatpush1.xpose.msra.mxu0 0.0
      %2072 = vmatprep.subr.mxu0 0.0
      %2073 = vmatpush1.xpose.msra.mxu0 0.0
      %2074 = vmatprep.mubr.f32.mxu0 0.0
      %2075 = vmatmul.mubr.f32.gmra.mrb[0].mxu0 %v1990
      %v2076 = vpop.f32.mrb[0].mxu0
      %v2077 = vadd.f32 0.0, %v2076
      %v2078 = vpop.f32.mrb[0].mxu0
      %2079 = vmatprep.mubr.f32.mxu0 0.0
      %2080 = vmatmul.mubr.f32.gmra.mrb[0].mxu0 %v1992
      %v2081 = vpop.f32.mrb[0].mxu0
      %v2082 = vadd.f32 0.0, %v2081
      %v2083 = vpop.f32.mrb[0].mxu0
      %2084 = vmatprep.mubr.f32.mxu0 0.0
      %2085 = vmatmul.mubr.f32.gmra.mrb[0].mxu0 %v1994
      %v2086 = vpop.f32.mrb[0].mxu0
      %v2087 = vadd.f32 0.0, %v2086
      %v2088 = vpop.f32.mrb[0].mxu0
      %2089 = vmatprep.mubr.f32.mxu0 0.0
      %2090 = vmatmul.mubr.f32.gmra.mrb[0].mxu0 %v1996
      %v2091 = vpop.f32.mrb[0].mxu0
      %v2092 = vadd.f32 0.0, %v2091
      %v2093 = vpop.f32.mrb[0].mxu0
      %2094 = vmatprep.mubr.f32.mxu0 0.0
      %2095 = vmatmul.mubr.f32.gmra.mrb[0].mxu0 %v1998
      %v2096 = vpop.f32.mrb[0].mxu0
      %v2097 = vadd.f32 0.0, %v2096
      %v2098 = vpop.f32.mrb[0].mxu0
      %2099 = vmatprep.mubr.f32.mxu0 0.0
      %2100 = vmatmul.mubr.f32.gmra.mrb[0].mxu0 %v2000
      %v2101 = vpop.f32.mrb[0].mxu0
      %v2102 = vadd.f32 0.0, %v2101
      %v2103 = vpop.f32.mrb[0].mxu0
      %2104 = vmatprep.mubr.f32.mxu0 0.0
      %2105 = vmatmul.mubr.f32.gmra.mrb[0].mxu0 %v2002
      %v2106 = vpop.f32.mrb[0].mxu0
      %v2107 = vadd.f32 0.0, %v2106
      %v2108 = vpop.f32.mrb[0].mxu0
      %2109 = vmatprep.mubr.f32.mxu0 0.0
      %2110 = vmatmul.mubr.f32.gmra.mrb[0].mxu0 %v2004
      %v2111 = vpop.f32.mrb[0].mxu0
      %v2112 = vadd.f32 0.0, %v2111
      %v2113 = vpop.f32.mrb[0].mxu0
      %2114 = vdwg.mxu0
      %v2115 = vmul.f32 %v2077, 0.35355338
      %v2116 = vmul.f32 %v2082, 0.35355338
      %v2117 = vmul.f32 %v2087, 0.35355338
      %v2118 = vmul.f32 %v2092, 0.35355338
      %v2119 = vmul.f32 %v2097, 0.35355338
      %v2120 = vmul.f32 %v2102, 0.35355338
      %v2121 = vmul.f32 %v2107, 0.35355338
      %v2122 = vmul.f32 %v2112, 0.35355338
      %v2123 = vsel %vm1370, %v2115, -inf
      %2124 = vmax.xlane.f32.xlu0 %v2123
      %v2125 = vpop.xlane.xlu0 %2124
      %v2126 = vsel %vm1370, %v2116, -inf
      %2127 = vmax.xlane.f32.xlu0 %v2126
      %v2128 = vpop.xlane.xlu0 %2127
      %v2129 = vsel %vm1370, %v2117, -inf
      %2130 = vmax.xlane.f32.xlu0 %v2129
      %v2131 = vpop.xlane.xlu0 %2130
      %v2132 = vsel %vm1370, %v2118, -inf
      %2133 = vmax.xlane.f32.xlu0 %v2132
      %v2134 = vpop.xlane.xlu0 %2133
      %v2135 = vsel %vm1370, %v2119, -inf
      %2136 = vmax.xlane.f32.xlu0 %v2135
      %v2137 = vpop.xlane.xlu0 %2136
      %v2138 = vsel %vm1370, %v2120, -inf
      %2139 = vmax.xlane.f32.xlu0 %v2138
      %v2140 = vpop.xlane.xlu0 %2139
      %v2141 = vsel %vm1370, %v2121, -inf
      %2142 = vmax.xlane.f32.xlu0 %v2141
      %v2143 = vpop.xlane.xlu0 %2142
      %v2144 = vsel %vm1370, %v2122, -inf
      %2145 = vmax.xlane.f32.xlu0 %v2144
      %v2146 = vpop.xlane.xlu0 %2145
      %v2147 = vsub.f32 %v2115, %v2125
      %v2148 = vsub.f32 %v2116, %v2128
      %v2149 = vsub.f32 %v2117, %v2131
      %v2150 = vsub.f32 %v2118, %v2134
      %v2151 = vsub.f32 %v2119, %v2137
      %v2152 = vsub.f32 %v2120, %v2140
      %v2153 = vsub.f32 %v2121, %v2143
      %v2154 = vsub.f32 %v2122, %v2146
      %v2155 = vmul.f32 %v2147, 1.442695
      %v2156 = vpow.pop %v2155
      %v2157 = vmul.f32 %v2148, 1.442695
      %v2158 = vpow.pop %v2157
      %v2159 = vmul.f32 %v2149, 1.442695
      %v2160 = vpow.pop %v2159
      %v2161 = vmul.f32 %v2150, 1.442695
      %v2162 = vpow.pop %v2161
      %v2163 = vmul.f32 %v2151, 1.442695
      %v2164 = vpow.pop %v2163
      %v2165 = vmul.f32 %v2152, 1.442695
      %v2166 = vpow.pop %v2165
      %v2167 = vmul.f32 %v2153, 1.442695
      %v2168 = vpow.pop %v2167
      %v2169 = vmul.f32 %v2154, 1.442695
      %v2170 = vpow.pop %v2169
      %v2171 = vsel %vm1370, %v2156, 0.0
      %2172 = vadd.xlane.f32.xlu0 %v2171
      %v2173 = vpop.xlane.xlu0 %2172
      %v2174 = vsel %vm1370, %v2158, 0.0
      %2175 = vadd.xlane.f32.xlu0 %v2174
      %v2176 = vpop.xlane.xlu0 %2175
      %v2177 = vsel %vm1370, %v2160, 0.0
      %2178 = vadd.xlane.f32.xlu0 %v2177
      %v2179 = vpop.xlane.xlu0 %2178
      %v2180 = vsel %vm1370, %v2162, 0.0
      %2181 = vadd.xlane.f32.xlu0 %v2180
      %v2182 = vpop.xlane.xlu0 %2181
      %v2183 = vsel %vm1370, %v2164, 0.0
      %2184 = vadd.xlane.f32.xlu0 %v2183
      %v2185 = vpop.xlane.xlu0 %2184
      %v2186 = vsel %vm1370, %v2166, 0.0
      %2187 = vadd.xlane.f32.xlu0 %v2186
      %v2188 = vpop.xlane.xlu0 %2187
      %v2189 = vsel %vm1370, %v2168, 0.0
      %2190 = vadd.xlane.f32.xlu0 %v2189
      %v2191 = vpop.xlane.xlu0 %2190
      %v2192 = vsel %vm1370, %v2170, 0.0
      %2193 = vadd.xlane.f32.xlu0 %v2192
      %v2194 = vpop.xlane.xlu0 %2193
      %2195 = vrot.lane.b32.xlu0 %v1218, 80
      %v2196 = vpop.permute.xlu0 %2195
      %2197 = vrot.lane.b32.xlu0 %v1223, 80
      %v2198 = vpop.permute.xlu0 %2197
      %v2202 = vsel %vm1370, %v2156, 0
      %v2205 = vsel %vm1370, %v2158, 0
      %v2208 = vsel %vm1370, %v2160, 0
      %v2211 = vsel %vm1370, %v2162, 0
      %v2214 = vsel %vm1370, %v2164, 0
      %v2217 = vsel %vm1370, %v2166, 0
      %v2220 = vsel %vm1370, %v2168, 0
      %v2223 = vsel %vm1370, %v2170, 0
      %2225 = vmatprep.subr.mxu0 0.0
      %2226 = vmatpush1.msra.mxu0 %v2196
      %2227 = vmatprep.subr.mxu0 0.0
      %2228 = vmatpush1.msra.mxu0 %v2198
      %2229 = vmatprep.subr.mxu0 0.0
      %2230 = vmatpush1.msra.mxu0 0.0
      %2231 = vmatprep.subr.mxu0 0.0
      %2232 = vmatpush1.msra.mxu0 0.0
      %2233 = vmatprep.subr.mxu0 0.0
      %2234 = vmatpush1.msra.mxu0 0.0
      %2235 = vmatprep.subr.mxu0 0.0
      %2236 = vmatpush1.msra.mxu0 0.0
      %2237 = vmatprep.subr.mxu0 0.0
      %2238 = vmatpush1.msra.mxu0 0.0
      %2239 = vmatprep.subr.mxu0 0.0
      %2240 = vmatpush1.msra.mxu0 0.0
      %2241 = vmatprep.subr.mxu0 0.0
      %2242 = vmatpush1.msra.mxu0 0.0
      %2243 = vmatprep.subr.mxu0 0.0
      %2244 = vmatpush1.msra.mxu0 0.0
      %2245 = vmatprep.subr.mxu0 0.0
      %2246 = vmatpush1.msra.mxu0 0.0
      %2247 = vmatprep.subr.mxu0 0.0
      %2248 = vmatpush1.msra.mxu0 0.0
      %2249 = vmatprep.subr.mxu0 0.0
      %2250 = vmatpush1.msra.mxu0 0.0
      %2251 = vmatprep.subr.mxu0 0.0
      %2252 = vmatpush1.msra.mxu0 0.0
      %2253 = vmatprep.subr.mxu0 0.0
      %2254 = vmatpush1.msra.mxu0 0.0
      %2255 = vmatprep.subr.mxu0 0.0
      %2256 = vmatpush1.msra.mxu0 0.0
      %2257 = vmatprep.subr.mxu0 0.0
      %2258 = vmatpush1.msra.mxu0 0.0
      %2259 = vmatprep.subr.mxu0 0.0
      %2260 = vmatpush1.msra.mxu0 0.0
      %2261 = vmatprep.subr.mxu0 0.0
      %2262 = vmatpush1.msra.mxu0 0.0
      %2263 = vmatprep.subr.mxu0 0.0
      %2264 = vmatpush1.msra.mxu0 0.0
      %2265 = vmatprep.subr.mxu0 0.0
      %2266 = vmatpush1.msra.mxu0 0.0
      %2267 = vmatprep.subr.mxu0 0.0
      %2268 = vmatpush1.msra.mxu0 0.0
      %2269 = vmatprep.subr.mxu0 0.0
      %2270 = vmatpush1.msra.mxu0 0.0
      %2271 = vmatprep.subr.mxu0 0.0
      %2272 = vmatpush1.msra.mxu0 0.0
      %2273 = vmatprep.subr.mxu0 0.0
      %2274 = vmatpush1.msra.mxu0 0.0
      %2275 = vmatprep.subr.mxu0 0.0
      %2276 = vmatpush1.msra.mxu0 0.0
      %2277 = vmatprep.subr.mxu0 0.0
      %2278 = vmatpush1.msra.mxu0 0.0
      %2279 = vmatprep.subr.mxu0 0.0
      %2280 = vmatpush1.msra.mxu0 0.0
      %2281 = vmatprep.subr.mxu0 0.0
      %2282 = vmatpush1.msra.mxu0 0.0
      %2283 = vmatprep.subr.mxu0 0.0
      %2284 = vmatpush1.msra.mxu0 0.0
      %2285 = vmatprep.subr.mxu0 0.0
      %2286 = vmatpush1.msra.mxu0 0.0
      %2287 = vmatprep.subr.mxu0 0.0
      %2288 = vmatpush1.msra.mxu0 0.0
      %2289 = vmatprep.mubr.f32.mxu0 0.0
      %2290 = vmatmul.mubr.f32.gmra.mrb[0].mxu0 %v2202
      %v2291 = vpop.f32.mrb[0].mxu0
      %v2292 = vadd.f32 0.0, %v2291
      %v2293 = vpop.f32.mrb[0].mxu0
      %2294 = vmatprep.mubr.f32.mxu0 0.0
      %2295 = vmatmul.mubr.f32.gmra.mrb[0].mxu0 %v2205
      %v2296 = vpop.f32.mrb[0].mxu0
      %v2297 = vadd.f32 0.0, %v2296
      %v2298 = vpop.f32.mrb[0].mxu0
      %2299 = vmatprep.mubr.f32.mxu0 0.0
      %2300 = vmatmul.mubr.f32.gmra.mrb[0].mxu0 %v2208
      %v2301 = vpop.f32.mrb[0].mxu0
      %v2302 = vadd.f32 0.0, %v2301
      %v2303 = vpop.f32.mrb[0].mxu0
      %2304 = vmatprep.mubr.f32.mxu0 0.0
      %2305 = vmatmul.mubr.f32.gmra.mrb[0].mxu0 %v2211
      %v2306 = vpop.f32.mrb[0].mxu0
      %v2307 = vadd.f32 0.0, %v2306
      %v2308 = vpop.f32.mrb[0].mxu0
      %2309 = vmatprep.mubr.f32.mxu0 0.0
      %2310 = vmatmul.mubr.f32.gmra.mrb[0].mxu0 %v2214
      %v2311 = vpop.f32.mrb[0].mxu0
      %v2312 = vadd.f32 0.0, %v2311
      %v2313 = vpop.f32.mrb[0].mxu0
      %2314 = vmatprep.mubr.f32.mxu0 0.0
      %2315 = vmatmul.mubr.f32.gmra.mrb[0].mxu0 %v2217
      %v2316 = vpop.f32.mrb[0].mxu0
      %v2317 = vadd.f32 0.0, %v2316
      %v2318 = vpop.f32.mrb[0].mxu0
      %2319 = vmatprep.mubr.f32.mxu0 0.0
      %2320 = vmatmul.mubr.f32.gmra.mrb[0].mxu0 %v2220
      %v2321 = vpop.f32.mrb[0].mxu0
      %v2322 = vadd.f32 0.0, %v2321
      %v2323 = vpop.f32.mrb[0].mxu0
      %2324 = vmatprep.mubr.f32.mxu0 0.0
      %2325 = vmatmul.mubr.f32.gmra.mrb[0].mxu0 %v2223
      %v2326 = vpop.f32.mrb[0].mxu0
      %v2327 = vadd.f32 0.0, %v2326
      %v2328 = vpop.f32.mrb[0].mxu0
      %2329 = vdwg.mxu0
      %v2330 = vrcp.pop %v2173
      %v2331 = vrcp.pop %v2176
      %v2332 = vrcp.pop %v2179
      %v2333 = vrcp.pop %v2182
      %v2334 = vrcp.pop %v2185
      %v2335 = vrcp.pop %v2188
      %v2336 = vrcp.pop %v2191
      %v2337 = vrcp.pop %v2194
      %v2338 = vmul.f32 %v2292, %v2330
      %v2339 = vmul.f32 %v2297, %v2331
      %v2340 = vmul.f32 %v2302, %v2332
      %v2341 = vmul.f32 %v2307, %v2333
      %v2342 = vmul.f32 %v2312, %v2334
      %v2343 = vmul.f32 %v2317, %v2335
      %v2344 = vmul.f32 %v2322, %v2336
      %v2345 = vmul.f32 %v2327, %v2337
      %2346 = vrot.lane.b32.xlu0 %v876, 104
      %v2347 = vpop.permute.xlu0 %2346
      %2348 = vrot.lane.b32.xlu0 %v881, 104
      %v2349 = vpop.permute.xlu0 %2348
      %2350 = vrot.lane.b32.xlu0 %v886, 104
      %v2351 = vpop.permute.xlu0 %2350
      %2352 = vrot.lane.b32.xlu0 %v891, 104
      %v2353 = vpop.permute.xlu0 %2352
      %2354 = vrot.lane.b32.xlu0 %v896, 104
      %v2355 = vpop.permute.xlu0 %2354
      %2356 = vrot.lane.b32.xlu0 %v901, 104
      %v2357 = vpop.permute.xlu0 %2356
      %2358 = vrot.lane.b32.xlu0 %v906, 104
      %v2359 = vpop.permute.xlu0 %2358
      %2360 = vrot.lane.b32.xlu0 %v911, 104
      %v2361 = vpop.permute.xlu0 %2360
      %2362 = vrot.lane.b32.xlu0 %v1218, 104
      %v2363 = vpop.permute.xlu0 %2362
      %2364 = vrot.lane.b32.xlu0 %v1223, 104
      %v2365 = vpop.permute.xlu0 %2364
      %v2366 = vsel %vm1226, %v2347, 0
      %v2368 = vsel %vm1226, %v2349, 0
      %v2370 = vsel %vm1226, %v2351, 0
      %v2372 = vsel %vm1226, %v2353, 0
      %v2374 = vsel %vm1226, %v2355, 0
      %v2376 = vsel %vm1226, %v2357, 0
      %v2378 = vsel %vm1226, %v2359, 0
      %v2380 = vsel %vm1226, %v2361, 0
      %v2382 = vsel %vm1226, %v2363, 0
      %v2384 = vsel %vm1226, %v2365, 0
      %2386 = vmatprep.subr.mxu0 0.0
      %2387 = vmatpush1.xpose.msra.mxu0 %v2382
      %2388 = vmatprep.subr.mxu0 0.0
      %2389 = vmatpush1.xpose.msra.mxu0 %v2384
      %2390 = vmatprep.subr.mxu0 0.0
      %2391 = vmatpush1.xpose.msra.mxu0 0.0
      %2392 = vmatprep.subr.mxu0 0.0
      %2393 = vmatpush1.xpose.msra.mxu0 0.0
      %2394 = vmatprep.subr.mxu0 0.0
      %2395 = vmatpush1.xpose.msra.mxu0 0.0
      %2396 = vmatprep.subr.mxu0 0.0
      %2397 = vmatpush1.xpose.msra.mxu0 0.0
      %2398 = vmatprep.subr.mxu0 0.0
      %2399 = vmatpush1.xpose.msra.mxu0 0.0
      %2400 = vmatprep.subr.mxu0 0.0
      %2401 = vmatpush1.xpose.msra.mxu0 0.0
      %2402 = vmatprep.subr.mxu0 0.0
      %2403 = vmatpush1.xpose.msra.mxu0 0.0
      %2404 = vmatprep.subr.mxu0 0.0
      %2405 = vmatpush1.xpose.msra.mxu0 0.0
      %2406 = vmatprep.subr.mxu0 0.0
      %2407 = vmatpush1.xpose.msra.mxu0 0.0
      %2408 = vmatprep.subr.mxu0 0.0
      %2409 = vmatpush1.xpose.msra.mxu0 0.0
      %2410 = vmatprep.subr.mxu0 0.0
      %2411 = vmatpush1.xpose.msra.mxu0 0.0
      %2412 = vmatprep.subr.mxu0 0.0
      %2413 = vmatpush1.xpose.msra.mxu0 0.0
      %2414 = vmatprep.subr.mxu0 0.0
      %2415 = vmatpush1.xpose.msra.mxu0 0.0
      %2416 = vmatprep.subr.mxu0 0.0
      %2417 = vmatpush1.xpose.msra.mxu0 0.0
      %2418 = vmatprep.subr.mxu0 0.0
      %2419 = vmatpush1.xpose.msra.mxu0 0.0
      %2420 = vmatprep.subr.mxu0 0.0
      %2421 = vmatpush1.xpose.msra.mxu0 0.0
      %2422 = vmatprep.subr.mxu0 0.0
      %2423 = vmatpush1.xpose.msra.mxu0 0.0
      %2424 = vmatprep.subr.mxu0 0.0
      %2425 = vmatpush1.xpose.msra.mxu0 0.0
      %2426 = vmatprep.subr.mxu0 0.0
      %2427 = vmatpush1.xpose.msra.mxu0 0.0
      %2428 = vmatprep.subr.mxu0 0.0
      %2429 = vmatpush1.xpose.msra.mxu0 0.0
      %2430 = vmatprep.subr.mxu0 0.0
      %2431 = vmatpush1.xpose.msra.mxu0 0.0
      %2432 = vmatprep.subr.mxu0 0.0
      %2433 = vmatpush1.xpose.msra.mxu0 0.0
      %2434 = vmatprep.subr.mxu0 0.0
      %2435 = vmatpush1.xpose.msra.mxu0 0.0
      %2436 = vmatprep.subr.mxu0 0.0
      %2437 = vmatpush1.xpose.msra.mxu0 0.0
      %2438 = vmatprep.subr.mxu0 0.0
      %2439 = vmatpush1.xpose.msra.mxu0 0.0
      %2440 = vmatprep.subr.mxu0 0.0
      %2441 = vmatpush1.xpose.msra.mxu0 0.0
      %2442 = vmatprep.subr.mxu0 0.0
      %2443 = vmatpush1.xpose.msra.mxu0 0.0
      %2444 = vmatprep.subr.mxu0 0.0
      %2445 = vmatpush1.xpose.msra.mxu0 0.0
      %2446 = vmatprep.subr.mxu0 0.0
      %2447 = vmatpush1.xpose.msra.mxu0 0.0
      %2448 = vmatprep.subr.mxu0 0.0
      %2449 = vmatpush1.xpose.msra.mxu0 0.0
      %2450 = vmatprep.mubr.f32.mxu0 0.0
      %2451 = vmatmul.mubr.f32.gmra.mrb[0].mxu0 %v2366
      %v2452 = vpop.f32.mrb[0].mxu0
      %v2453 = vadd.f32 0.0, %v2452
      %v2454 = vpop.f32.mrb[0].mxu0
      %2455 = vmatprep.mubr.f32.mxu0 0.0
      %2456 = vmatmul.mubr.f32.gmra.mrb[0].mxu0 %v2368
      %v2457 = vpop.f32.mrb[0].mxu0
      %v2458 = vadd.f32 0.0, %v2457
      %v2459 = vpop.f32.mrb[0].mxu0
      %2460 = vmatprep.mubr.f32.mxu0 0.0
      %2461 = vmatmul.mubr.f32.gmra.mrb[0].mxu0 %v2370
      %v2462 = vpop.f32.mrb[0].mxu0
      %v2463 = vadd.f32 0.0, %v2462
      %v2464 = vpop.f32.mrb[0].mxu0
      %2465 = vmatprep.mubr.f32.mxu0 0.0
      %2466 = vmatmul.mubr.f32.gmra.mrb[0].mxu0 %v2372
      %v2467 = vpop.f32.mrb[0].mxu0
      %v2468 = vadd.f32 0.0, %v2467
      %v2469 = vpop.f32.mrb[0].mxu0
      %2470 = vmatprep.mubr.f32.mxu0 0.0
      %2471 = vmatmul.mubr.f32.gmra.mrb[0].mxu0 %v2374
      %v2472 = vpop.f32.mrb[0].mxu0
      %v2473 = vadd.f32 0.0, %v2472
      %v2474 = vpop.f32.mrb[0].mxu0
      %2475 = vmatprep.mubr.f32.mxu0 0.0
      %2476 = vmatmul.mubr.f32.gmra.mrb[0].mxu0 %v2376
      %v2477 = vpop.f32.mrb[0].mxu0
      %v2478 = vadd.f32 0.0, %v2477
      %v2479 = vpop.f32.mrb[0].mxu0
      %2480 = vmatprep.mubr.f32.mxu0 0.0
      %2481 = vmatmul.mubr.f32.gmra.mrb[0].mxu0 %v2378
      %v2482 = vpop.f32.mrb[0].mxu0
      %v2483 = vadd.f32 0.0, %v2482
      %v2484 = vpop.f32.mrb[0].mxu0
      %2485 = vmatprep.mubr.f32.mxu0 0.0
      %2486 = vmatmul.mubr.f32.gmra.mrb[0].mxu0 %v2380
      %v2487 = vpop.f32.mrb[0].mxu0
      %v2488 = vadd.f32 0.0, %v2487
      %v2489 = vpop.f32.mrb[0].mxu0
      %2490 = vdwg.mxu0
      %v2491 = vmul.f32 %v2453, 0.35355338
      %v2492 = vmul.f32 %v2458, 0.35355338
      %v2493 = vmul.f32 %v2463, 0.35355338
      %v2494 = vmul.f32 %v2468, 0.35355338
      %v2495 = vmul.f32 %v2473, 0.35355338
      %v2496 = vmul.f32 %v2478, 0.35355338
      %v2497 = vmul.f32 %v2483, 0.35355338
      %v2498 = vmul.f32 %v2488, 0.35355338
      %v2499 = vsel %vm1370, %v2491, -inf
      %2500 = vmax.xlane.f32.xlu0 %v2499
      %v2501 = vpop.xlane.xlu0 %2500
      %v2502 = vsel %vm1370, %v2492, -inf
      %2503 = vmax.xlane.f32.xlu0 %v2502
      %v2504 = vpop.xlane.xlu0 %2503
      %v2505 = vsel %vm1370, %v2493, -inf
      %2506 = vmax.xlane.f32.xlu0 %v2505
      %v2507 = vpop.xlane.xlu0 %2506
      %v2508 = vsel %vm1370, %v2494, -inf
      %2509 = vmax.xlane.f32.xlu0 %v2508
      %v2510 = vpop.xlane.xlu0 %2509
      %v2511 = vsel %vm1370, %v2495, -inf
      %2512 = vmax.xlane.f32.xlu0 %v2511
      %v2513 = vpop.xlane.xlu0 %2512
      %v2514 = vsel %vm1370, %v2496, -inf
      %2515 = vmax.xlane.f32.xlu0 %v2514
      %v2516 = vpop.xlane.xlu0 %2515
      %v2517 = vsel %vm1370, %v2497, -inf
      %2518 = vmax.xlane.f32.xlu0 %v2517
      %v2519 = vpop.xlane.xlu0 %2518
      %v2520 = vsel %vm1370, %v2498, -inf
      %2521 = vmax.xlane.f32.xlu0 %v2520
      %v2522 = vpop.xlane.xlu0 %2521
      %v2523 = vsub.f32 %v2491, %v2501
      %v2524 = vsub.f32 %v2492, %v2504
      %v2525 = vsub.f32 %v2493, %v2507
      %v2526 = vsub.f32 %v2494, %v2510
      %v2527 = vsub.f32 %v2495, %v2513
      %v2528 = vsub.f32 %v2496, %v2516
      %v2529 = vsub.f32 %v2497, %v2519
      %v2530 = vsub.f32 %v2498, %v2522
      %v2531 = vmul.f32 %v2523, 1.442695
      %v2532 = vpow.pop %v2531
      %v2533 = vmul.f32 %v2524, 1.442695
      %v2534 = vpow.pop %v2533
      %v2535 = vmul.f32 %v2525, 1.442695
      %v2536 = vpow.pop %v2535
      %v2537 = vmul.f32 %v2526, 1.442695
      %v2538 = vpow.pop %v2537
      %v2539 = vmul.f32 %v2527, 1.442695
      %v2540 = vpow.pop %v2539
      %v2541 = vmul.f32 %v2528, 1.442695
      %v2542 = vpow.pop %v2541
      %v2543 = vmul.f32 %v2529, 1.442695
      %v2544 = vpow.pop %v2543
      %v2545 = vmul.f32 %v2530, 1.442695
      %v2546 = vpow.pop %v2545
      %v2547 = vsel %vm1370, %v2532, 0.0
      %2548 = vadd.xlane.f32.xlu0 %v2547
      %v2549 = vpop.xlane.xlu0 %2548
      %v2550 = vsel %vm1370, %v2534, 0.0
      %2551 = vadd.xlane.f32.xlu0 %v2550
      %v2552 = vpop.xlane.xlu0 %2551
      %v2553 = vsel %vm1370, %v2536, 0.0
      %2554 = vadd.xlane.f32.xlu0 %v2553
      %v2555 = vpop.xlane.xlu0 %2554
      %v2556 = vsel %vm1370, %v2538, 0.0
      %2557 = vadd.xlane.f32.xlu0 %v2556
      %v2558 = vpop.xlane.xlu0 %2557
      %v2559 = vsel %vm1370, %v2540, 0.0
      %2560 = vadd.xlane.f32.xlu0 %v2559
      %v2561 = vpop.xlane.xlu0 %2560
      %v2562 = vsel %vm1370, %v2542, 0.0
      %2563 = vadd.xlane.f32.xlu0 %v2562
      %v2564 = vpop.xlane.xlu0 %2563
      %v2565 = vsel %vm1370, %v2544, 0.0
      %2566 = vadd.xlane.f32.xlu0 %v2565
      %v2567 = vpop.xlane.xlu0 %2566
      %v2568 = vsel %vm1370, %v2546, 0.0
      %2569 = vadd.xlane.f32.xlu0 %v2568
      %v2570 = vpop.xlane.xlu0 %2569
      %2571 = vrot.lane.b32.xlu0 %v1218, 72
      %v2572 = vpop.permute.xlu0 %2571
      %2573 = vrot.lane.b32.xlu0 %v1223, 72
      %v2574 = vpop.permute.xlu0 %2573
      %v2578 = vsel %vm1370, %v2532, 0
      %v2581 = vsel %vm1370, %v2534, 0
      %v2584 = vsel %vm1370, %v2536, 0
      %v2587 = vsel %vm1370, %v2538, 0
      %v2590 = vsel %vm1370, %v2540, 0
      %v2593 = vsel %vm1370, %v2542, 0
      %v2596 = vsel %vm1370, %v2544, 0
      %v2599 = vsel %vm1370, %v2546, 0
      %2601 = vmatprep.subr.mxu0 0.0
      %2602 = vmatpush1.msra.mxu0 %v2572
      %2603 = vmatprep.subr.mxu0 0.0
      %2604 = vmatpush1.msra.mxu0 %v2574
      %2605 = vmatprep.subr.mxu0 0.0
      %2606 = vmatpush1.msra.mxu0 0.0
      %2607 = vmatprep.subr.mxu0 0.0
      %2608 = vmatpush1.msra.mxu0 0.0
      %2609 = vmatprep.subr.mxu0 0.0
      %2610 = vmatpush1.msra.mxu0 0.0
      %2611 = vmatprep.subr.mxu0 0.0
      %2612 = vmatpush1.msra.mxu0 0.0
      %2613 = vmatprep.subr.mxu0 0.0
      %2614 = vmatpush1.msra.mxu0 0.0
      %2615 = vmatprep.subr.mxu0 0.0
      %2616 = vmatpush1.msra.mxu0 0.0
      %2617 = vmatprep.subr.mxu0 0.0
      %2618 = vmatpush1.msra.mxu0 0.0
      %2619 = vmatprep.subr.mxu0 0.0
      %2620 = vmatpush1.msra.mxu0 0.0
      %2621 = vmatprep.subr.mxu0 0.0
      %2622 = vmatpush1.msra.mxu0 0.0
      %2623 = vmatprep.subr.mxu0 0.0
      %2624 = vmatpush1.msra.mxu0 0.0
      %2625 = vmatprep.subr.mxu0 0.0
      %2626 = vmatpush1.msra.mxu0 0.0
      %2627 = vmatprep.subr.mxu0 0.0
      %2628 = vmatpush1.msra.mxu0 0.0
      %2629 = vmatprep.subr.mxu0 0.0
      %2630 = vmatpush1.msra.mxu0 0.0
      %2631 = vmatprep.subr.mxu0 0.0
      %2632 = vmatpush1.msra.mxu0 0.0
      %2633 = vmatprep.subr.mxu0 0.0
      %2634 = vmatpush1.msra.mxu0 0.0
      %2635 = vmatprep.subr.mxu0 0.0
      %2636 = vmatpush1.msra.mxu0 0.0
      %2637 = vmatprep.subr.mxu0 0.0
      %2638 = vmatpush1.msra.mxu0 0.0
      %2639 = vmatprep.subr.mxu0 0.0
      %2640 = vmatpush1.msra.mxu0 0.0
      %2641 = vmatprep.subr.mxu0 0.0
      %2642 = vmatpush1.msra.mxu0 0.0
      %2643 = vmatprep.subr.mxu0 0.0
      %2644 = vmatpush1.msra.mxu0 0.0
      %2645 = vmatprep.subr.mxu0 0.0
      %2646 = vmatpush1.msra.mxu0 0.0
      %2647 = vmatprep.subr.mxu0 0.0
      %2648 = vmatpush1.msra.mxu0 0.0
      %2649 = vmatprep.subr.mxu0 0.0
      %2650 = vmatpush1.msra.mxu0 0.0
      %2651 = vmatprep.subr.mxu0 0.0
      %2652 = vmatpush1.msra.mxu0 0.0
      %2653 = vmatprep.subr.mxu0 0.0
      %2654 = vmatpush1.msra.mxu0 0.0
      %2655 = vmatprep.subr.mxu0 0.0
      %2656 = vmatpush1.msra.mxu0 0.0
      %2657 = vmatprep.subr.mxu0 0.0
      %2658 = vmatpush1.msra.mxu0 0.0
      %2659 = vmatprep.subr.mxu0 0.0
      %2660 = vmatpush1.msra.mxu0 0.0
      %2661 = vmatprep.subr.mxu0 0.0
      %2662 = vmatpush1.msra.mxu0 0.0
      %2663 = vmatprep.subr.mxu0 0.0
      %2664 = vmatpush1.msra.mxu0 0.0
      %2665 = vmatprep.mubr.f32.mxu0 0.0
      %2666 = vmatmul.mubr.f32.gmra.mrb[0].mxu0 %v2578
      %v2667 = vpop.f32.mrb[0].mxu0
      %v2668 = vadd.f32 0.0, %v2667
      %v2669 = vpop.f32.mrb[0].mxu0
      %2670 = vmatprep.mubr.f32.mxu0 0.0
      %2671 = vmatmul.mubr.f32.gmra.mrb[0].mxu0 %v2581
      %v2672 = vpop.f32.mrb[0].mxu0
      %v2673 = vadd.f32 0.0, %v2672
      %v2674 = vpop.f32.mrb[0].mxu0
      %2675 = vmatprep.mubr.f32.mxu0 0.0
      %2676 = vmatmul.mubr.f32.gmra.mrb[0].mxu0 %v2584
      %v2677 = vpop.f32.mrb[0].mxu0
      %v2678 = vadd.f32 0.0, %v2677
      %v2679 = vpop.f32.mrb[0].mxu0
      %2680 = vmatprep.mubr.f32.mxu0 0.0
      %2681 = vmatmul.mubr.f32.gmra.mrb[0].mxu0 %v2587
      %v2682 = vpop.f32.mrb[0].mxu0
      %v2683 = vadd.f32 0.0, %v2682
      %v2684 = vpop.f32.mrb[0].mxu0
      %2685 = vmatprep.mubr.f32.mxu0 0.0
      %2686 = vmatmul.mubr.f32.gmra.mrb[0].mxu0 %v2590
      %v2687 = vpop.f32.mrb[0].mxu0
      %v2688 = vadd.f32 0.0, %v2687
      %v2689 = vpop.f32.mrb[0].mxu0
      %2690 = vmatprep.mubr.f32.mxu0 0.0
      %2691 = vmatmul.mubr.f32.gmra.mrb[0].mxu0 %v2593
      %v2692 = vpop.f32.mrb[0].mxu0
      %v2693 = vadd.f32 0.0, %v2692
      %v2694 = vpop.f32.mrb[0].mxu0
      %2695 = vmatprep.mubr.f32.mxu0 0.0
      %2696 = vmatmul.mubr.f32.gmra.mrb[0].mxu0 %v2596
      %v2697 = vpop.f32.mrb[0].mxu0
      %v2698 = vadd.f32 0.0, %v2697
      %v2699 = vpop.f32.mrb[0].mxu0
      %2700 = vmatprep.mubr.f32.mxu0 0.0
      %2701 = vmatmul.mubr.f32.gmra.mrb[0].mxu0 %v2599
      %v2702 = vpop.f32.mrb[0].mxu0
      %v2703 = vadd.f32 0.0, %v2702
      %v2704 = vpop.f32.mrb[0].mxu0
      %2705 = vdwg.mxu0
      %v2706 = vrcp.pop %v2549
      %v2707 = vrcp.pop %v2552
      %v2708 = vrcp.pop %v2555
      %v2709 = vrcp.pop %v2558
      %v2710 = vrcp.pop %v2561
      %v2711 = vrcp.pop %v2564
      %v2712 = vrcp.pop %v2567
      %v2713 = vrcp.pop %v2570
      %v2714 = vmul.f32 %v2668, %v2706
      %v2715 = vmul.f32 %v2673, %v2707
      %v2716 = vmul.f32 %v2678, %v2708
      %v2717 = vmul.f32 %v2683, %v2709
      %v2718 = vmul.f32 %v2688, %v2710
      %v2719 = vmul.f32 %v2693, %v2711
      %v2720 = vmul.f32 %v2698, %v2712
      %v2721 = vmul.f32 %v2703, %v2713
      %2730 = vrot.lane.b32.xlu0 %v1962, 8
      %v2731 = vpop.permute.xlu0 %2730
      %2732 = vrot.lane.b32.xlu0 %v1963, 8
      %v2733 = vpop.permute.xlu0 %2732
      %2734 = vrot.lane.b32.xlu0 %v1964, 8
      %v2735 = vpop.permute.xlu0 %2734
      %2736 = vrot.lane.b32.xlu0 %v1965, 8
      %v2737 = vpop.permute.xlu0 %2736
      %2738 = vrot.lane.b32.xlu0 %v1966, 8
      %v2739 = vpop.permute.xlu0 %2738
      %2740 = vrot.lane.b32.xlu0 %v1967, 8
      %v2741 = vpop.permute.xlu0 %2740
      %2742 = vrot.lane.b32.xlu0 %v1968, 8
      %v2743 = vpop.permute.xlu0 %2742
      %2744 = vrot.lane.b32.xlu0 %v1969, 8
      %v2745 = vpop.permute.xlu0 %2744
      %2762 = vrot.lane.b32.xlu0 %v2338, 16
      %v2763 = vpop.permute.xlu0 %2762
      %2764 = vrot.lane.b32.xlu0 %v2339, 16
      %v2765 = vpop.permute.xlu0 %2764
      %2766 = vrot.lane.b32.xlu0 %v2340, 16
      %v2767 = vpop.permute.xlu0 %2766
      %2768 = vrot.lane.b32.xlu0 %v2341, 16
      %v2769 = vpop.permute.xlu0 %2768
      %2770 = vrot.lane.b32.xlu0 %v2342, 16
      %v2771 = vpop.permute.xlu0 %2770
      %2772 = vrot.lane.b32.xlu0 %v2343, 16
      %v2773 = vpop.permute.xlu0 %2772
      %2774 = vrot.lane.b32.xlu0 %v2344, 16
      %v2775 = vpop.permute.xlu0 %2774
      %2776 = vrot.lane.b32.xlu0 %v2345, 16
      %v2777 = vpop.permute.xlu0 %2776
      %2794 = vrot.lane.b32.xlu0 %v2714, 24
      %v2795 = vpop.permute.xlu0 %2794
      %2796 = vrot.lane.b32.xlu0 %v2715, 24
      %v2797 = vpop.permute.xlu0 %2796
      %2798 = vrot.lane.b32.xlu0 %v2716, 24
      %v2799 = vpop.permute.xlu0 %2798
      %2800 = vrot.lane.b32.xlu0 %v2717, 24
      %v2801 = vpop.permute.xlu0 %2800
      %2802 = vrot.lane.b32.xlu0 %v2718, 24
      %v2803 = vpop.permute.xlu0 %2802
      %2804 = vrot.lane.b32.xlu0 %v2719, 24
      %v2805 = vpop.permute.xlu0 %2804
      %2806 = vrot.lane.b32.xlu0 %v2720, 24
      %v2807 = vpop.permute.xlu0 %2806
      %2808 = vrot.lane.b32.xlu0 %v2721, 24
      %v2809 = vpop.permute.xlu0 %2808
      %v2818 = vsel %vm1226, %v1586, %v2731
      %v2819 = vsel %vm1226, %v1587, %v2733
      %v2820 = vsel %vm1226, %v1588, %v2735
      %v2821 = vsel %vm1226, %v1589, %v2737
      %v2822 = vsel %vm1226, %v1590, %v2739
      %v2823 = vsel %vm1226, %v1591, %v2741
      %v2824 = vsel %vm1226, %v1592, %v2743
      %v2825 = vsel %vm1226, %v1593, %v2745
      %v2826 = vsel %vm1370, %v2818, %v2763
      %v2827 = vsel %vm1370, %v2819, %v2765
      %v2828 = vsel %vm1370, %v2820, %v2767
      %v2829 = vsel %vm1370, %v2821, %v2769
      %v2830 = vsel %vm1370, %v2822, %v2771
      %v2831 = vsel %vm1370, %v2823, %v2773
      %v2832 = vsel %vm1370, %v2824, %v2775
      %v2833 = vsel %vm1370, %v2825, %v2777
      %vm2834 = vcmask 195584
      %v2835 = vsel %vm2834, %v2826, %v2795
      %v2836 = vsel %vm2834, %v2827, %v2797
      %v2837 = vsel %vm2834, %v2828, %v2799
      %v2838 = vsel %vm2834, %v2829, %v2801
      %v2839 = vsel %vm2834, %v2830, %v2803
      %v2840 = vsel %vm2834, %v2831, %v2805
      %v2841 = vsel %vm2834, %v2832, %v2807
      %v2842 = vsel %vm2834, %v2833, %v2809
      %v2843 = vld [vmem:[%s12] sm:$0xff]
      %v2844 = vld [vmem:[%s12 + $0x8] sm:$0xff]
      %v2845 = vld [vmem:[%s12 + $0x10] sm:$0xff]
      %v2846 = vld [vmem:[%s12 + $0x18] sm:$0xff]
      %v2847 = vld [vmem:[%s13] sm:$0x1]
      %v2849 = vlaneseq
      %v2850 = vshrl.u32 %v2849, 7
      %v2851 = vsub.s32 0, %v2850
      %v2852 = vrot.slane %v2847, %v2851
      %v2855 = vsel %vm640, %v2835, 0
      %v2858 = vsel %vm640, %v2836, 0
      %v2861 = vsel %vm640, %v2837, 0
      %v2864 = vsel %vm640, %v2838, 0
      %v2867 = vsel %vm640, %v2839, 0
      %v2870 = vsel %vm640, %v2840, 0
      %v2873 = vsel %vm640, %v2841, 0
      %v2876 = vsel %vm640, %v2842, 0
      %2878 = vmatprep.subr.mxu0 0.0
      %2879 = vmatpush1.msra.mxu0 %v2843
      %2880 = vmatprep.subr.mxu0 0.0
      %2881 = vmatpush1.msra.mxu0 %v2844
      %2882 = vmatprep.subr.mxu0 0.0
      %2883 = vmatpush1.msra.mxu0 %v2845
      %2884 = vmatprep.subr.mxu0 0.0
      %2885 = vmatpush1.msra.mxu0 %v2846
      %2886 = vmatprep.subr.mxu0 0.0
      %2887 = vmatpush1.msra.mxu0 0.0
      %2888 = vmatprep.subr.mxu0 0.0
      %2889 = vmatpush1.msra.mxu0 0.0
      %2890 = vmatprep.subr.mxu0 0.0
      %2891 = vmatpush1.msra.mxu0 0.0
      %2892 = vmatprep.subr.mxu0 0.0
      %2893 = vmatpush1.msra.mxu0 0.0
      %2894 = vmatprep.subr.mxu0 0.0
      %2895 = vmatpush1.msra.mxu0 0.0
      %2896 = vmatprep.subr.mxu0 0.0
      %2897 = vmatpush1.msra.mxu0 0.0
      %2898 = vmatprep.subr.mxu0 0.0
      %2899 = vmatpush1.msra.mxu0 0.0
      %2900 = vmatprep.subr.mxu0 0.0
      %2901 = vmatpush1.msra.mxu0 0.0
      %2902 = vmatprep.subr.mxu0 0.0
      %2903 = vmatpush1.msra.mxu0 0.0
      %2904 = vmatprep.subr.mxu0 0.0
      %2905 = vmatpush1.msra.mxu0 0.0
      %2906 = vmatprep.subr.mxu0 0.0
      %2907 = vmatpush1.msra.mxu0 0.0
      %2908 = vmatprep.subr.mxu0 0.0
      %2909 = vmatpush1.msra.mxu0 0.0
      %2910 = vmatprep.subr.mxu0 0.0
      %2911 = vmatpush1.msra.mxu0 0.0
      %2912 = vmatprep.subr.mxu0 0.0
      %2913 = vmatpush1.msra.mxu0 0.0
      %2914 = vmatprep.subr.mxu0 0.0
      %2915 = vmatpush1.msra.mxu0 0.0
      %2916 = vmatprep.subr.mxu0 0.0
      %2917 = vmatpush1.msra.mxu0 0.0
      %2918 = vmatprep.subr.mxu0 0.0
      %2919 = vmatpush1.msra.mxu0 0.0
      %2920 = vmatprep.subr.mxu0 0.0
      %2921 = vmatpush1.msra.mxu0 0.0
      %2922 = vmatprep.subr.mxu0 0.0
      %2923 = vmatpush1.msra.mxu0 0.0
      %2924 = vmatprep.subr.mxu0 0.0
      %2925 = vmatpush1.msra.mxu0 0.0
      %2926 = vmatprep.subr.mxu0 0.0
      %2927 = vmatpush1.msra.mxu0 0.0
      %2928 = vmatprep.subr.mxu0 0.0
      %2929 = vmatpush1.msra.mxu0 0.0
      %2930 = vmatprep.subr.mxu0 0.0
      %2931 = vmatpush1.msra.mxu0 0.0
      %2932 = vmatprep.subr.mxu0 0.0
      %2933 = vmatpush1.msra.mxu0 0.0
      %2934 = vmatprep.subr.mxu0 0.0
      %2935 = vmatpush1.msra.mxu0 0.0
      %2936 = vmatprep.subr.mxu0 0.0
      %2937 = vmatpush1.msra.mxu0 0.0
      %2938 = vmatprep.subr.mxu0 0.0
      %2939 = vmatpush1.msra.mxu0 0.0
      %2940 = vmatprep.subr.mxu0 0.0
      %2941 = vmatpush1.msra.mxu0 0.0
      %2942 = vmatprep.mubr.f32.mxu0 0.0
      %2943 = vmatmul.mubr.f32.gmra.mrb[0].mxu0 %v2855
      %v2944 = vpop.f32.mrb[0].mxu0
      %v2945 = vadd.f32 %v2852, %v2944
      %v2946 = vpop.f32.mrb[0].mxu0
      %2947 = vmatprep.mubr.f32.mxu0 0.0
      %2948 = vmatmul.mubr.f32.gmra.mrb[0].mxu0 %v2858
      %v2949 = vpop.f32.mrb[0].mxu0
      %v2950 = vadd.f32 %v2852, %v2949
      %v2951 = vpop.f32.mrb[0].mxu0
      %2952 = vmatprep.mubr.f32.mxu0 0.0
      %2953 = vmatmul.mubr.f32.gmra.mrb[0].mxu0 %v2861
      %v2954 = vpop.f32.mrb[0].mxu0
      %v2955 = vadd.f32 %v2852, %v2954
      %v2956 = vpop.f32.mrb[0].mxu0
      %2957 = vmatprep.mubr.f32.mxu0 0.0
      %2958 = vmatmul.mubr.f32.gmra.mrb[0].mxu0 %v2864
      %v2959 = vpop.f32.mrb[0].mxu0
      %v2960 = vadd.f32 %v2852, %v2959
      %v2961 = vpop.f32.mrb[0].mxu0
      %2962 = vmatprep.mubr.f32.mxu0 0.0
      %2963 = vmatmul.mubr.f32.gmra.mrb[0].mxu0 %v2867
      %v2964 = vpop.f32.mrb[0].mxu0
      %v2965 = vadd.f32 %v2852, %v2964
      %v2966 = vpop.f32.mrb[0].mxu0
      %2967 = vmatprep.mubr.f32.mxu0 0.0
      %2968 = vmatmul.mubr.f32.gmra.mrb[0].mxu0 %v2870
      %v2969 = vpop.f32.mrb[0].mxu0
      %v2970 = vadd.f32 %v2852, %v2969
      %v2971 = vpop.f32.mrb[0].mxu0
      %2972 = vmatprep.mubr.f32.mxu0 0.0
      %2973 = vmatmul.mubr.f32.gmra.mrb[0].mxu0 %v2873
      %v2974 = vpop.f32.mrb[0].mxu0
      %v2975 = vadd.f32 %v2852, %v2974
      %v2976 = vpop.f32.mrb[0].mxu0
      %2977 = vmatprep.mubr.f32.mxu0 0.0
      %2978 = vmatmul.mubr.f32.gmra.mrb[0].mxu0 %v2876
      %v2979 = vpop.f32.mrb[0].mxu0
      %v2980 = vadd.f32 %v2852, %v2979
      %v2981 = vpop.f32.mrb[0].mxu0
      %2982 = vdwg.mxu0
      %v2983 = vadd.f32 %v630, %v2945
      %v2984 = vadd.f32 %v631, %v2950
      %v2985 = vadd.f32 %v632, %v2955
      %v2986 = vadd.f32 %v633, %v2960
      %v2987 = vadd.f32 %v634, %v2965
      %v2988 = vadd.f32 %v635, %v2970
      %v2989 = vadd.f32 %v636, %v2975
      %v2990 = vadd.f32 %v637, %v2980
      %v2991 = vld [vmem:[%s14] sm:$0x1]
      %v2992 = vld [vmem:[%s15] sm:$0x1]
      %v2993 = vsel %vm640, %v2983, 0.0
      %2994 = vadd.xlane.f32.xlu0 %v2993
      %v2995 = vpop.xlane.xlu0 %2994
      %v2996 = vsel %vm640, %v2984, 0.0
      %2997 = vadd.xlane.f32.xlu0 %v2996
      %v2998 = vpop.xlane.xlu0 %2997
      %v2999 = vsel %vm640, %v2985, 0.0
      %3000 = vadd.xlane.f32.xlu0 %v2999
      %v3001 = vpop.xlane.xlu0 %3000
      %v3002 = vsel %vm640, %v2986, 0.0
      %3003 = vadd.xlane.f32.xlu0 %v3002
      %v3004 = vpop.xlane.xlu0 %3003
      %v3005 = vsel %vm640, %v2987, 0.0
      %3006 = vadd.xlane.f32.xlu0 %v3005
      %v3007 = vpop.xlane.xlu0 %3006
      %v3008 = vsel %vm640, %v2988, 0.0
      %3009 = vadd.xlane.f32.xlu0 %v3008
      %v3010 = vpop.xlane.xlu0 %3009
      %v3011 = vsel %vm640, %v2989, 0.0
      %3012 = vadd.xlane.f32.xlu0 %v3011
      %v3013 = vpop.xlane.xlu0 %3012
      %v3014 = vsel %vm640, %v2990, 0.0
      %3015 = vadd.xlane.f32.xlu0 %v3014
      %v3016 = vpop.xlane.xlu0 %3015
      %v3017 = vmul.f32 %v2995, %v665
      %v3018 = vmul.f32 %v2998, %v665
      %v3019 = vmul.f32 %v3001, %v665
      %v3020 = vmul.f32 %v3004, %v665
      %v3021 = vmul.f32 %v3007, %v665
      %v3022 = vmul.f32 %v3010, %v665
      %v3023 = vmul.f32 %v3013, %v665
      %v3024 = vmul.f32 %v3016, %v665
      %v3025 = vsub.f32 %v2983, %v3017
      %v3026 = vsub.f32 %v2984, %v3018
      %v3027 = vsub.f32 %v2985, %v3019
      %v3028 = vsub.f32 %v2986, %v3020
      %v3029 = vsub.f32 %v2987, %v3021
      %v3030 = vsub.f32 %v2988, %v3022
      %v3031 = vsub.f32 %v2989, %v3023
      %v3032 = vsub.f32 %v2990, %v3024
      %v3033 = vmul.f32 %v3025, %v3025
      %v3034 = vmul.f32 %v3026, %v3026
      %v3035 = vmul.f32 %v3027, %v3027
      %v3036 = vmul.f32 %v3028, %v3028
      %v3037 = vmul.f32 %v3029, %v3029
      %v3038 = vmul.f32 %v3030, %v3030
      %v3039 = vmul.f32 %v3031, %v3031
      %v3040 = vmul.f32 %v3032, %v3032
      %v3041 = vsel %vm640, %v3033, 0.0
      %3042 = vadd.xlane.f32.xlu0 %v3041
      %v3043 = vpop.xlane.xlu0 %3042
      %v3044 = vsel %vm640, %v3034, 0.0
      %3045 = vadd.xlane.f32.xlu0 %v3044
      %v3046 = vpop.xlane.xlu0 %3045
      %v3047 = vsel %vm640, %v3035, 0.0
      %3048 = vadd.xlane.f32.xlu0 %v3047
      %v3049 = vpop.xlane.xlu0 %3048
      %v3050 = vsel %vm640, %v3036, 0.0
      %3051 = vadd.xlane.f32.xlu0 %v3050
      %v3052 = vpop.xlane.xlu0 %3051
      %v3053 = vsel %vm640, %v3037, 0.0
      %3054 = vadd.xlane.f32.xlu0 %v3053
      %v3055 = vpop.xlane.xlu0 %3054
      %v3056 = vsel %vm640, %v3038, 0.0
      %3057 = vadd.xlane.f32.xlu0 %v3056
      %v3058 = vpop.xlane.xlu0 %3057
      %v3059 = vsel %vm640, %v3039, 0.0
      %3060 = vadd.xlane.f32.xlu0 %v3059
      %v3061 = vpop.xlane.xlu0 %3060
      %v3062 = vsel %vm640, %v3040, 0.0
      %3063 = vadd.xlane.f32.xlu0 %v3062
      %v3064 = vpop.xlane.xlu0 %3063
      %v3065 = vmul.f32 %v3043, %v665
      %v3066 = vmul.f32 %v3046, %v665
      %v3067 = vmul.f32 %v3049, %v665
      %v3068 = vmul.f32 %v3052, %v665
      %v3069 = vmul.f32 %v3055, %v665
      %v3070 = vmul.f32 %v3058, %v665
      %v3071 = vmul.f32 %v3061, %v665
      %v3072 = vmul.f32 %v3064, %v665
      %v3073 = vadd.f32 %v3065, 1e-05
      %v3074 = vadd.f32 %v3066, 1e-05
      %v3075 = vadd.f32 %v3067, 1e-05
      %v3076 = vadd.f32 %v3068, 1e-05
      %v3077 = vadd.f32 %v3069, 1e-05
      %v3078 = vadd.f32 %v3070, 1e-05
      %v3079 = vadd.f32 %v3071, 1e-05
      %v3080 = vadd.f32 %v3072, 1e-05
      %v3081 = vrsqrt.pop %v3073
      %v3082 = vrsqrt.pop %v3074
      %v3083 = vrsqrt.pop %v3075
      %v3084 = vrsqrt.pop %v3076
      %v3085 = vrsqrt.pop %v3077
      %v3086 = vrsqrt.pop %v3078
      %v3087 = vrsqrt.pop %v3079
      %v3088 = vrsqrt.pop %v3080
      %v3089 = vmul.f32 %v3025, %v3081
      %v3090 = vmul.f32 %v3026, %v3082
      %v3091 = vmul.f32 %v3027, %v3083
      %v3092 = vmul.f32 %v3028, %v3084
      %v3093 = vmul.f32 %v3029, %v3085
      %v3094 = vmul.f32 %v3030, %v3086
      %v3095 = vmul.f32 %v3031, %v3087
      %v3096 = vmul.f32 %v3032, %v3088
      %v3098 = vlaneseq
      %v3099 = vshrl.u32 %v3098, 7
      %v3100 = vsub.s32 0, %v3099
      %v3101 = vrot.slane %v2991, %v3100
      %v3103 = vmul.f32 %v3089, %v3101
      %v3104 = vmul.f32 %v3090, %v3101
      %v3105 = vmul.f32 %v3091, %v3101
      %v3106 = vmul.f32 %v3092, %v3101
      %v3107 = vmul.f32 %v3093, %v3101
      %v3108 = vmul.f32 %v3094, %v3101
      %v3109 = vmul.f32 %v3095, %v3101
      %v3110 = vmul.f32 %v3096, %v3101
      %v3112 = vlaneseq
      %v3113 = vshrl.u32 %v3112, 7
      %v3114 = vsub.s32 0, %v3113
      %v3115 = vrot.slane %v2992, %v3114
      %v3117 = vadd.f32 %v3103, %v3115
      %v3118 = vadd.f32 %v3104, %v3115
      %v3119 = vadd.f32 %v3105, %v3115
      %v3120 = vadd.f32 %v3106, %v3115
      %v3121 = vadd.f32 %v3107, %v3115
      %v3122 = vadd.f32 %v3108, %v3115
      %v3123 = vadd.f32 %v3109, %v3115
      %v3124 = vadd.f32 %v3110, %v3115
      %v3125 = vld [vmem:[%s16] sm:$0xff]
      %v3126 = vld [vmem:[%s16 + $0x8] sm:$0xff]
      %v3127 = vld [vmem:[%s16 + $0x10] sm:$0xff]
      %v3128 = vld [vmem:[%s16 + $0x18] sm:$0xff]
      %v3129 = vld [vmem:[%s17] sm:$0x1]
      %v3131 = vlaneseq
      %v3132 = vshrl.u32 %v3131, 7
      %v3133 = vsub.s32 0, %v3132
      %v3134 = vrot.slane %v3129, %v3133
      %v3137 = vsel %vm640, %v3117, 0
      %v3140 = vsel %vm640, %v3118, 0
      %v3143 = vsel %vm640, %v3119, 0
      %v3146 = vsel %vm640, %v3120, 0
      %v3149 = vsel %vm640, %v3121, 0
      %v3152 = vsel %vm640, %v3122, 0
      %v3155 = vsel %vm640, %v3123, 0
      %v3158 = vsel %vm640, %v3124, 0
      %3160 = vmatprep.subr.mxu0 0.0
      %3161 = vmatpush1.msra.mxu0 %v3125
      %3162 = vmatprep.subr.mxu0 0.0
      %3163 = vmatpush1.msra.mxu0 %v3126
      %3164 = vmatprep.subr.mxu0 0.0
      %3165 = vmatpush1.msra.mxu0 %v3127
      %3166 = vmatprep.subr.mxu0 0.0
      %3167 = vmatpush1.msra.mxu0 %v3128
      %3168 = vmatprep.subr.mxu0 0.0
      %3169 = vmatpush1.msra.mxu0 0.0
      %3170 = vmatprep.subr.mxu0 0.0
      %3171 = vmatpush1.msra.mxu0 0.0
      %3172 = vmatprep.subr.mxu0 0.0
      %3173 = vmatpush1.msra.mxu0 0.0
      %3174 = vmatprep.subr.mxu0 0.0
      %3175 = vmatpush1.msra.mxu0 0.0
      %3176 = vmatprep.subr.mxu0 0.0
      %3177 = vmatpush1.msra.mxu0 0.0
      %3178 = vmatprep.subr.mxu0 0.0
      %3179 = vmatpush1.msra.mxu0 0.0
      %3180 = vmatprep.subr.mxu0 0.0
      %3181 = vmatpush1.msra.mxu0 0.0
      %3182 = vmatprep.subr.mxu0 0.0
      %3183 = vmatpush1.msra.mxu0 0.0
      %3184 = vmatprep.subr.mxu0 0.0
      %3185 = vmatpush1.msra.mxu0 0.0
      %3186 = vmatprep.subr.mxu0 0.0
      %3187 = vmatpush1.msra.mxu0 0.0
      %3188 = vmatprep.subr.mxu0 0.0
      %3189 = vmatpush1.msra.mxu0 0.0
      %3190 = vmatprep.subr.mxu0 0.0
      %3191 = vmatpush1.msra.mxu0 0.0
      %3192 = vmatprep.subr.mxu0 0.0
      %3193 = vmatpush1.msra.mxu0 0.0
      %3194 = vmatprep.subr.mxu0 0.0
      %3195 = vmatpush1.msra.mxu0 0.0
      %3196 = vmatprep.subr.mxu0 0.0
      %3197 = vmatpush1.msra.mxu0 0.0
      %3198 = vmatprep.subr.mxu0 0.0
      %3199 = vmatpush1.msra.mxu0 0.0
      %3200 = vmatprep.subr.mxu0 0.0
      %3201 = vmatpush1.msra.mxu0 0.0
      %3202 = vmatprep.subr.mxu0 0.0
      %3203 = vmatpush1.msra.mxu0 0.0
      %3204 = vmatprep.subr.mxu0 0.0
      %3205 = vmatpush1.msra.mxu0 0.0
      %3206 = vmatprep.subr.mxu0 0.0
      %3207 = vmatpush1.msra.mxu0 0.0
      %3208 = vmatprep.subr.mxu0 0.0
      %3209 = vmatpush1.msra.mxu0 0.0
      %3210 = vmatprep.subr.mxu0 0.0
      %3211 = vmatpush1.msra.mxu0 0.0
      %3212 = vmatprep.subr.mxu0 0.0
      %3213 = vmatpush1.msra.mxu0 0.0
      %3214 = vmatprep.subr.mxu0 0.0
      %3215 = vmatpush1.msra.mxu0 0.0
      %3216 = vmatprep.subr.mxu0 0.0
      %3217 = vmatpush1.msra.mxu0 0.0
      %3218 = vmatprep.subr.mxu0 0.0
      %3219 = vmatpush1.msra.mxu0 0.0
      %3220 = vmatprep.subr.mxu0 0.0
      %3221 = vmatpush1.msra.mxu0 0.0
      %3222 = vmatprep.subr.mxu0 0.0
      %3223 = vmatpush1.msra.mxu0 0.0
      %3224 = vmatprep.mubr.f32.mxu0 0.0
      %3225 = vmatmul.mubr.f32.gmra.mrb[0].mxu0 %v3137
      %v3226 = vpop.f32.mrb[0].mxu0
      %v3227 = vadd.f32 %v3134, %v3226
      %v3228 = vpop.f32.mrb[0].mxu0
      %3229 = vmatprep.mubr.f32.mxu0 0.0
      %3230 = vmatmul.mubr.f32.gmra.mrb[0].mxu0 %v3140
      %v3231 = vpop.f32.mrb[0].mxu0
      %v3232 = vadd.f32 %v3134, %v3231
      %v3233 = vpop.f32.mrb[0].mxu0
      %3234 = vmatprep.mubr.f32.mxu0 0.0
      %3235 = vmatmul.mubr.f32.gmra.mrb[0].mxu0 %v3143
      %v3236 = vpop.f32.mrb[0].mxu0
      %v3237 = vadd.f32 %v3134, %v3236
      %v3238 = vpop.f32.mrb[0].mxu0
      %3239 = vmatprep.mubr.f32.mxu0 0.0
      %3240 = vmatmul.mubr.f32.gmra.mrb[0].mxu0 %v3146
      %v3241 = vpop.f32.mrb[0].mxu0
      %v3242 = vadd.f32 %v3134, %v3241
      %v3243 = vpop.f32.mrb[0].mxu0
      %3244 = vmatprep.mubr.f32.mxu0 0.0
      %3245 = vmatmul.mubr.f32.gmra.mrb[0].mxu0 %v3149
      %v3246 = vpop.f32.mrb[0].mxu0
      %v3247 = vadd.f32 %v3134, %v3246
      %v3248 = vpop.f32.mrb[0].mxu0
      %3249 = vmatprep.mubr.f32.mxu0 0.0
      %3250 = vmatmul.mubr.f32.gmra.mrb[0].mxu0 %v3152
      %v3251 = vpop.f32.mrb[0].mxu0
      %v3252 = vadd.f32 %v3134, %v3251
      %v3253 = vpop.f32.mrb[0].mxu0
      %3254 = vmatprep.mubr.f32.mxu0 0.0
      %3255 = vmatmul.mubr.f32.gmra.mrb[0].mxu0 %v3155
      %v3256 = vpop.f32.mrb[0].mxu0
      %v3257 = vadd.f32 %v3134, %v3256
      %v3258 = vpop.f32.mrb[0].mxu0
      %3259 = vmatprep.mubr.f32.mxu0 0.0
      %3260 = vmatmul.mubr.f32.gmra.mrb[0].mxu0 %v3158
      %v3261 = vpop.f32.mrb[0].mxu0
      %v3262 = vadd.f32 %v3134, %v3261
      %v3263 = vpop.f32.mrb[0].mxu0
      %3264 = vdwg.mxu0
      %v3265 = vmul.f32 %v3227, 0.5
      %v3266 = vmul.f32 %v3232, 0.5
      %v3267 = vmul.f32 %v3237, 0.5
      %v3268 = vmul.f32 %v3242, 0.5
      %v3269 = vmul.f32 %v3247, 0.5
      %v3270 = vmul.f32 %v3252, 0.5
      %v3271 = vmul.f32 %v3257, 0.5
      %v3272 = vmul.f32 %v3262, 0.5
      %v3273 = vmul.f32 %v3227, 0.044715
      %v3274 = vmul.f32 %v3232, 0.044715
      %v3275 = vmul.f32 %v3237, 0.044715
      %v3276 = vmul.f32 %v3242, 0.044715
      %v3277 = vmul.f32 %v3247, 0.044715
      %v3278 = vmul.f32 %v3252, 0.044715
      %v3279 = vmul.f32 %v3257, 0.044715
      %v3280 = vmul.f32 %v3262, 0.044715
      %v3281 = vmul.f32 %v3273, %v3227
      %v3282 = vmul.f32 %v3274, %v3232
      %v3283 = vmul.f32 %v3275, %v3237
      %v3284 = vmul.f32 %v3276, %v3242
      %v3285 = vmul.f32 %v3277, %v3247
      %v3286 = vmul.f32 %v3278, %v3252
      %v3287 = vmul.f32 %v3279, %v3257
      %v3288 = vmul.f32 %v3280, %v3262
      %v3289 = vmul.f32 %v3281, %v3227
      %v3290 = vmul.f32 %v3282, %v3232
      %v3291 = vmul.f32 %v3283, %v3237
      %v3292 = vmul.f32 %v3284, %v3242
      %v3293 = vmul.f32 %v3285, %v3247
      %v3294 = vmul.f32 %v3286, %v3252
      %v3295 = vmul.f32 %v3287, %v3257
      %v3296 = vmul.f32 %v3288, %v3262
      %v3297 = vadd.f32 %v3227, %v3289
      %v3298 = vadd.f32 %v3232, %v3290
      %v3299 = vadd.f32 %v3237, %v3291
      %v3300 = vadd.f32 %v3242, %v3292
      %v3301 = vadd.f32 %v3247, %v3293
      %v3302 = vadd.f32 %v3252, %v3294
      %v3303 = vadd.f32 %v3257, %v3295
      %v3304 = vadd.f32 %v3262, %v3296
      %v3305 = vmul.f32 %v3297, 0.7978846
      %v3306 = vmul.f32 %v3298, 0.7978846
      %v3307 = vmul.f32 %v3299, 0.7978846
      %v3308 = vmul.f32 %v3300, 0.7978846
      %v3309 = vmul.f32 %v3301, 0.7978846
      %v3310 = vmul.f32 %v3302, 0.7978846
      %v3311 = vmul.f32 %v3303, 0.7978846
      %v3312 = vmul.f32 %v3304, 0.7978846
      %v3313 = vtanh.pop %v3305
      %v3314 = vtanh.pop %v3306
      %v3315 = vtanh.pop %v3307
      %v3316 = vtanh.pop %v3308
      %v3317 = vtanh.pop %v3309
      %v3318 = vtanh.pop %v3310
      %v3319 = vtanh.pop %v3311
      %v3320 = vtanh.pop %v3312
      %v3321 = vadd.f32 %v3313, 1.0
      %v3322 = vadd.f32 %v3314, 1.0
      %v3323 = vadd.f32 %v3315, 1.0
      %v3324 = vadd.f32 %v3316, 1.0
      %v3325 = vadd.f32 %v3317, 1.0
      %v3326 = vadd.f32 %v3318, 1.0
      %v3327 = vadd.f32 %v3319, 1.0
      %v3328 = vadd.f32 %v3320, 1.0
      %v3329 = vmul.f32 %v3265, %v3321
      %v3330 = vmul.f32 %v3266, %v3322
      %v3331 = vmul.f32 %v3267, %v3323
      %v3332 = vmul.f32 %v3268, %v3324
      %v3333 = vmul.f32 %v3269, %v3325
      %v3334 = vmul.f32 %v3270, %v3326
      %v3335 = vmul.f32 %v3271, %v3327
      %v3336 = vmul.f32 %v3272, %v3328
      %v3337 = vld [vmem:[%s18] sm:$0xff]
      %v3338 = vld [vmem:[%s18 + $0x8] sm:$0xff]
      %v3339 = vld [vmem:[%s18 + $0x10] sm:$0xff]
      %v3340 = vld [vmem:[%s18 + $0x18] sm:$0xff]
      %v3341 = vld [vmem:[%s18 + $0x20] sm:$0xff]
      %v3342 = vld [vmem:[%s18 + $0x28] sm:$0xff]
      %v3343 = vld [vmem:[%s18 + $0x30] sm:$0xff]
      %v3344 = vld [vmem:[%s18 + $0x38] sm:$0xff]
      %v3345 = vld [vmem:[%s18 + $0x40] sm:$0xff]
      %v3346 = vld [vmem:[%s18 + $0x48] sm:$0xff]
      %v3347 = vld [vmem:[%s18 + $0x50] sm:$0xff]
      %v3348 = vld [vmem:[%s18 + $0x58] sm:$0xff]
      %v3349 = vld [vmem:[%s18 + $0x60] sm:$0xff]
      %v3350 = vld [vmem:[%s18 + $0x68] sm:$0xff]
      %v3351 = vld [vmem:[%s18 + $0x70] sm:$0xff]
      %v3352 = vld [vmem:[%s18 + $0x78] sm:$0xff]
      %v3353 = vld [vmem:[%s19] sm:$0x1]
      %v3355 = vlaneseq
      %v3356 = vshrl.u32 %v3355, 7
      %v3357 = vsub.s32 0, %v3356
      %v3358 = vrot.slane %v3353, %v3357
      %3360 = vmatprep.subr.mxu0 0.0
      %3361 = vmatpush1.msra.mxu0 %v3337
      %3362 = vmatprep.subr.mxu0 0.0
      %3363 = vmatpush1.msra.mxu0 %v3338
      %3364 = vmatprep.subr.mxu0 0.0
      %3365 = vmatpush1.msra.mxu0 %v3339
      %3366 = vmatprep.subr.mxu0 0.0
      %3367 = vmatpush1.msra.mxu0 %v3340
      %3368 = vmatprep.subr.mxu0 0.0
      %3369 = vmatpush1.msra.mxu0 %v3341
      %3370 = vmatprep.subr.mxu0 0.0
      %3371 = vmatpush1.msra.mxu0 %v3342
      %3372 = vmatprep.subr.mxu0 0.0
      %3373 = vmatpush1.msra.mxu0 %v3343
      %3374 = vmatprep.subr.mxu0 0.0
      %3375 = vmatpush1.msra.mxu0 %v3344
      %3376 = vmatprep.subr.mxu0 0.0
      %3377 = vmatpush1.msra.mxu0 %v3345
      %3378 = vmatprep.subr.mxu0 0.0
      %3379 = vmatpush1.msra.mxu0 %v3346
      %3380 = vmatprep.subr.mxu0 0.0
      %3381 = vmatpush1.msra.mxu0 %v3347
      %3382 = vmatprep.subr.mxu0 0.0
      %3383 = vmatpush1.msra.mxu0 %v3348
      %3384 = vmatprep.subr.mxu0 0.0
      %3385 = vmatpush1.msra.mxu0 %v3349
      %3386 = vmatprep.subr.mxu0 0.0
      %3387 = vmatpush1.msra.mxu0 %v3350
      %3388 = vmatprep.subr.mxu0 0.0
      %3389 = vmatpush1.msra.mxu0 %v3351
      %3390 = vmatprep.subr.mxu0 0.0
      %3391 = vmatpush1.msra.mxu0 %v3352
      %3392 = vmatprep.subr.mxu0 0.0
      %3393 = vmatpush1.msra.mxu0 0.0
      %3394 = vmatprep.subr.mxu0 0.0
      %3395 = vmatpush1.msra.mxu0 0.0
      %3396 = vmatprep.subr.mxu0 0.0
      %3397 = vmatpush1.msra.mxu0 0.0
      %3398 = vmatprep.subr.mxu0 0.0
      %3399 = vmatpush1.msra.mxu0 0.0
      %3400 = vmatprep.subr.mxu0 0.0
      %3401 = vmatpush1.msra.mxu0 0.0
      %3402 = vmatprep.subr.mxu0 0.0
      %3403 = vmatpush1.msra.mxu0 0.0
      %3404 = vmatprep.subr.mxu0 0.0
      %3405 = vmatpush1.msra.mxu0 0.0
      %3406 = vmatprep.subr.mxu0 0.0
      %3407 = vmatpush1.msra.mxu0 0.0
      %3408 = vmatprep.subr.mxu0 0.0
      %3409 = vmatpush1.msra.mxu0 0.0
      %3410 = vmatprep.subr.mxu0 0.0
      %3411 = vmatpush1.msra.mxu0 0.0
      %3412 = vmatprep.subr.mxu0 0.0
      %3413 = vmatpush1.msra.mxu0 0.0
      %3414 = vmatprep.subr.mxu0 0.0
      %3415 = vmatpush1.msra.mxu0 0.0
      %3416 = vmatprep.subr.mxu0 0.0
      %3417 = vmatpush1.msra.mxu0 0.0
      %3418 = vmatprep.subr.mxu0 0.0
      %3419 = vmatpush1.msra.mxu0 0.0
      %3420 = vmatprep.subr.mxu0 0.0
      %3421 = vmatpush1.msra.mxu0 0.0
      %3422 = vmatprep.subr.mxu0 0.0
      %3423 = vmatpush1.msra.mxu0 0.0
      %3424 = vmatprep.mubr.f32.mxu0 0.0
      %3425 = vmatmul.mubr.f32.gmra.mrb[0].mxu0 %v3329
      %v3426 = vpop.f32.mrb[0].mxu0
      %v3427 = vadd.f32 %v3358, %v3426
      %v3428 = vpop.f32.mrb[0].mxu0
      %3429 = vmatprep.mubr.f32.mxu0 0.0
      %3430 = vmatmul.mubr.f32.gmra.mrb[0].mxu0 %v3330
      %v3431 = vpop.f32.mrb[0].mxu0
      %v3432 = vadd.f32 %v3358, %v3431
      %v3433 = vpop.f32.mrb[0].mxu0
      %3434 = vmatprep.mubr.f32.mxu0 0.0
      %3435 = vmatmul.mubr.f32.gmra.mrb[0].mxu0 %v3331
      %v3436 = vpop.f32.mrb[0].mxu0
      %v3437 = vadd.f32 %v3358, %v3436
      %v3438 = vpop.f32.mrb[0].mxu0
      %3439 = vmatprep.mubr.f32.mxu0 0.0
      %3440 = vmatmul.mubr.f32.gmra.mrb[0].mxu0 %v3332
      %v3441 = vpop.f32.mrb[0].mxu0
      %v3442 = vadd.f32 %v3358, %v3441
      %v3443 = vpop.f32.mrb[0].mxu0
      %3444 = vmatprep.mubr.f32.mxu0 0.0
      %3445 = vmatmul.mubr.f32.gmra.mrb[0].mxu0 %v3333
      %v3446 = vpop.f32.mrb[0].mxu0
      %v3447 = vadd.f32 %v3358, %v3446
      %v3448 = vpop.f32.mrb[0].mxu0
      %3449 = vmatprep.mubr.f32.mxu0 0.0
      %3450 = vmatmul.mubr.f32.gmra.mrb[0].mxu0 %v3334
      %v3451 = vpop.f32.mrb[0].mxu0
      %v3452 = vadd.f32 %v3358, %v3451
      %v3453 = vpop.f32.mrb[0].mxu0
      %3454 = vmatprep.mubr.f32.mxu0 0.0
      %3455 = vmatmul.mubr.f32.gmra.mrb[0].mxu0 %v3335
      %v3456 = vpop.f32.mrb[0].mxu0
      %v3457 = vadd.f32 %v3358, %v3456
      %v3458 = vpop.f32.mrb[0].mxu0
      %3459 = vmatprep.mubr.f32.mxu0 0.0
      %3460 = vmatmul.mubr.f32.gmra.mrb[0].mxu0 %v3336
      %v3461 = vpop.f32.mrb[0].mxu0
      %v3462 = vadd.f32 %v3358, %v3461
      %v3463 = vpop.f32.mrb[0].mxu0
      %3464 = vdwg.mxu0
      %v3465 = vadd.f32 %v2983, %v3427
      %v3466 = vadd.f32 %v2984, %v3432
      %v3467 = vadd.f32 %v2985, %v3437
      %v3468 = vadd.f32 %v2986, %v3442
      %v3469 = vadd.f32 %v2987, %v3447
      %v3470 = vadd.f32 %v2988, %v3452
      %v3471 = vadd.f32 %v2989, %v3457
      %v3472 = vadd.f32 %v2990, %v3462
      %3473 = vst.msk [vmem:[%s629] sm:$0xff] %vm640, %v3465
      %3474 = vst.msk [vmem:[%s629 + $0x8] sm:$0xff] %vm640, %v3466
      %3475 = vst.msk [vmem:[%s629 + $0x10] sm:$0xff] %vm640, %v3467
      %3476 = vst.msk [vmem:[%s629 + $0x18] sm:$0xff] %vm640, %v3468
      %3477 = vst.msk [vmem:[%s629 + $0x20] sm:$0xff] %vm640, %v3469
      %3478 = vst.msk [vmem:[%s629 + $0x28] sm:$0xff] %vm640, %v3470
      %3479 = vst.msk [vmem:[%s629 + $0x30] sm:$0xff] %vm640, %v3471
      %3480 = vst.msk [vmem:[%s629 + $0x38] sm:$0xff] %vm640, %v3472
      %p3481 = scmp.lt.s32.totalorder %s31, 1
      %s3482 = scalar_select %p3481, %s31, 1
      %s3483 = smul.addr %s3482, 8
      %s3484 = smul.addr %s3483, 8
      %s3485 = scalar_lea.vmem %s20, %s3484
      // Predicated region
      $region101: #{tpu_custom_call.1} parent=99 // pred_check
        %p3486 = pneg %p474
      $region102: #{tpu_custom_call.1} parent=99 // pred_check_branch
        %3488 = sbr.rel (%p3486) target = $region104
      $region103: #{tpu_custom_call.1} parent=99 // pred_region
        _
      $region104: #{tpu_custom_call.1} parent=99 // pred_fallthru
        _
    $region100: #{tpu_custom_call.1} parent=5 // pred_fallthru
      _
    %p3489 = scmp.le.s32.totalorder 2, %s26
    // Predicated region
    $region105: #{tpu_custom_call.1} parent=5 // pred_check
      %p3490 = pneg %p3489
    $region106: #{tpu_custom_call.1} parent=5 // pred_check_branch
      %3492 = sbr.rel (%p3490) target = $region108
    $region107: #{tpu_custom_call.1} parent=5 // pred_region
      %s3493 = ssub.s32 %s26, 2
      // Predicated region
      $region109: #{tpu_custom_call.1} parent=107 // pred_check
        %p3494 = pneg %p480
      $region110: #{tpu_custom_call.1} parent=107 // pred_check_branch
        %3496 = sbr.rel (%p3494) target = $region112
      $region111: #{tpu_custom_call.1} parent=107 // pred_region
        %p3497 = scmp.lt.s32.totalorder %s32, 1
        %s3498 = scalar_select %p3497, %s32, 1
        %s3499 = smul.addr %s3498, 8
        %s3500 = smul.addr %s3499, 8
        %s3501 = scalar_lea.vmem %s20, %s3500
      $region112: #{tpu_custom_call.1} parent=107 // pred_fallthru
        _
    $region108: #{tpu_custom_call.1} parent=5 // pred_fallthru
      _
  $region6: #{tpu_custom_call.1} parent=0 // loop_footer
    %s30 = sadd.s32 1, %s26
  $region7: #{tpu_custom_call.1} parent=0 // loop_footer_branch
    %25 = sbr.rel target = $region3
  $region8: #{tpu_custom_call.1} parent=0 // loop_exit
    _

</llo_original>
